<compile_context>
chip_gen: v7x
topology: tpu7x:2x2x1
jax: 0.10.0
libtpu: 0.0.40
codegen_flags: <defaults>
</compile_context>

<pallas_src>
import functools
import math

import jax
import jax.numpy as jnp
from jax.experimental import pallas as pl
from jax.experimental.pallas import tpu as pltpu

LEAKY_SLOPE = 0.01          # nn.LeakyReLU() default
BN_EPS = 1e-5               # nn.BatchNorm2d default
LANE = 128                  # TPU lane width
TM_MAX = 128                # output rows (pixels) per grid step
VMEM_LIMIT = 32 * 1024 * 1024


def _round_up(x, m):
    return ((x + m - 1) // m) * m


def _choose_tm(m):
    """Row tile: whole (sublane-rounded) image when tiny, else 128-row tiles."""
    m8 = _round_up(m, 8)
    return m8 if m8 <= TM_MAX else TM_MAX


# ----------------------------------------------------------------------------
# Pallas kernels
# ----------------------------------------------------------------------------
def conv_kernel(p_ref, w_ref, b_ref, o_ref, *, act, n_valid_lanes):
    """One row tile of a conv as a single packed-K MXU matmul + f32 epilogue.

    p_ref: (1, TM, Kp)    bf16 im2col patches, Kp = round_up(k*k*Cin_real, 128).
    w_ref: (Kp, Coutp)    bf16 packed weights (tap-major rows; zero rows pad K).
    b_ref: (1, Coutp)     f32 bias.
    o_ref: (1, TM, Coutp) lane-dense output tile (bf16 trunk / f32 heads).
    """
    y = jnp.dot(p_ref[0], w_ref[...], preferred_element_type=jnp.float32)
    y = y + b_ref[...]                                     # f32 epilogue (v5e-safe)
    if act == "leaky":
        y = jnp.where(y >= 0, y, LEAKY_SLOPE * y)
    elif act == "sigmoid":
        e = jnp.exp(-jnp.abs(y))                           # stable sigmoid
        y = jnp.where(y >= 0, 1.0, e) * pl.reciprocal(1.0 + e, approx=True)
        y = jnp.clip(y, 0.0, 1.0)
    elif act == "softmax":                                 # over the real class lanes
        lane = jax.lax.broadcasted_iota(jnp.int32, y.shape, 1)
        valid = lane < n_valid_lanes
        y = jnp.where(valid, y, -1e30)
        y = y - jnp.max(y, axis=-1, keepdims=True)
        e = jnp.where(valid, jnp.exp(y), 0.0)
        y = e / jnp.sum(e, axis=-1, keepdims=True)         # exact divide (review)
    o_ref[0] = y.astype(o_ref.dtype)


def conv_bn_kernel(p_ref, w_ref, b_ref, o_ref, s_ref, sq_ref, *, m_valid, tm):
    """Conv + LeakyReLU tile with fused BatchNorm batch-statistics accumulation.

    s_ref / sq_ref are (1, Coutp) accumulators resident across the whole grid
    (their BlockSpec index is constant); both grid axes are marked "arbitrary".
    """
    @pl.when(jnp.logical_and(pl.program_id(0) == 0, pl.program_id(1) == 0))
    def _():
        s_ref[...] = jnp.zeros_like(s_ref)
        sq_ref[...] = jnp.zeros_like(sq_ref)

    y = jnp.dot(p_ref[0], w_ref[...], preferred_element_type=jnp.float32)
    y = y + b_ref[...]
    y = jnp.where(y >= 0, y, LEAKY_SLOPE * y)

    # Exclude row-padding (rows >= Ho*Wo) from the statistics.
    row = jax.lax.broadcasted_iota(jnp.int32, y.shape, 0) + pl.program_id(1) * tm
    ym = jnp.where(row < m_valid, y, 0.0)
    s_ref[...] += jnp.sum(ym, axis=0, keepdims=True)
    sq_ref[...] += jnp.sum(ym * ym, axis=0, keepdims=True)

    o_ref[0] = y.astype(o_ref.dtype)


# ----------------------------------------------------------------------------
# Wrappers (thin XLA glue: one fused patch-producer per conv)
# ----------------------------------------------------------------------------
def _im2col(x, ksize, padding):
    """(N,H,W,C) -> (N, Ho*Wo, k*k*C) patches on the REAL (un-padded) channels."""
    N, H, W, C = x.shape
    Ho = H + 2 * padding - ksize + 1
    Wo = W + 2 * padding - ksize + 1
    if padding:
        x = jnp.pad(x, ((0, 0), (padding, padding), (padding, padding), (0, 0)))
    taps = [x[:, dy:dy + Ho, dx:dx + Wo, :]
            for dy in range(ksize) for dx in range(ksize)]
    p = taps[0] if len(taps) == 1 else jnp.concatenate(taps, axis=-1)
    return p.reshape(N, Ho * Wo, ksize * ksize * C), Ho, Wo


def conv2d(x, w, b, *, ksize, padding, cout, act=None, n_valid=None,
           out_dtype=jnp.bfloat16, with_bn_stats=False):
    """Conv2d (NHWC, real channels) via one packed-K MXU dot per row tile."""
    x = x.astype(jnp.bfloat16)
    N, H, W, C = x.shape
    p, Ho, Wo = _im2col(x, ksize, padding)
    M = Ho * Wo
    K = ksize * ksize * C
    Kp, Coutp = w.shape
    assert Kp == _round_up(K, LANE), (Kp, K)
    tm = _choose_tm(M)
    Mp = _round_up(M, tm)
    p = jnp.pad(p, ((0, 0), (0, Mp - M), (0, Kp - K)))     # zero K pad + zero row pad

    grid = (N, Mp // tm)
    in_specs = [
        pl.BlockSpec((1, tm, Kp), lambda n, t: (n, t, 0)),
        pl.BlockSpec((Kp, Coutp), lambda n, t: (0, 0)),    # weights stay resident
        pl.BlockSpec((1, Coutp), lambda n, t: (0, 0)),
    ]
    out_spec = pl.BlockSpec((1, tm, Coutp), lambda n, t: (n, t, 0))

    if with_bn_stats:
        out, s, sq = pl.pallas_call(
            functools.partial(conv_bn_kernel, m_valid=M, tm=tm),
            out_shape=(jax.ShapeDtypeStruct((N, Mp, Coutp), out_dtype),
                       jax.ShapeDtypeStruct((1, Coutp), jnp.float32),
                       jax.ShapeDtypeStruct((1, Coutp), jnp.float32)),
            grid=grid,
            in_specs=in_specs,
            out_specs=(out_spec,
                       pl.BlockSpec((1, Coutp), lambda n, t: (0, 0)),
                       pl.BlockSpec((1, Coutp), lambda n, t: (0, 0))),
            compiler_params=pltpu.CompilerParams(
                # stats accumulate across BOTH axes -> fully sequential grid
                dimension_semantics=("arbitrary", "arbitrary"),
                vmem_limit_bytes=VMEM_LIMIT),
        )(p, w, b)
        h = out[:, :M, :cout].reshape(N, Ho, Wo, cout)
        return h, s[:, :cout], sq[:, :cout]

    out = pl.pallas_call(
        functools.partial(conv_kernel, act=act,
                          n_valid_lanes=n_valid if n_valid is not None else Coutp),
        out_shape=jax.ShapeDtypeStruct((N, Mp, Coutp), out_dtype),
        grid=grid,
        in_specs=in_specs,
        out_specs=out_spec,
        compiler_params=pltpu.CompilerParams(
            dimension_semantics=("parallel", "arbitrary"),   # v7x: images across TCs
            vmem_limit_bytes=VMEM_LIMIT),
    )(p, w, b)
    # Lane-dense store in the kernel; channel narrowing happens in the next layer's
    # fused patch producer.
    return out[:, :M, :cout].reshape(N, Ho, Wo, cout)


def bn_fold_1x1(s, sq, count, w1x1, gamma, eps=BN_EPS):
    """Fold training-mode BatchNorm2d (gamma random, beta=0) into the 1x1 conv."""
    mean = s / count                                       # (1, C), real channels only
    var = jnp.maximum(sq / count - mean * mean, 0.0)       # biased (training) variance
    scale = gamma[None, :] / jnp.sqrt(var + eps)           # (1, C); beta = 0
    w_fold = w1x1 * scale.reshape(-1, 1)                   # (C, ncls)
    b_fold = -(mean * scale) @ w1x1                        # conv bias is zero-init
    kp = _round_up(w1x1.shape[0], LANE)
    cp = _round_up(w1x1.shape[1], LANE)
    w_pad = jnp.pad(w_fold, ((0, kp - w1x1.shape[0]),
                             (0, cp - w1x1.shape[1]))).astype(jnp.bfloat16)
    b_pad = jnp.pad(b_fold, ((0, 0), (0, cp - w1x1.shape[1])))
    return w_pad, b_pad


# ----------------------------------------------------------------------------
# Parameter construction (deterministic, mirrors the PyTorch Initializer)
# ----------------------------------------------------------------------------
def _init_conv(key, k, cin, cout, slope=0.2):
    # torch weight (cout, cin, k, k); Initializer std = 1/sqrt((1+slope^2)*cout*cin*k)
    std = 1.0 / math.sqrt((1.0 + slope ** 2) * cout * cin * k)
    w = std * jax.random.normal(key, (k * k * cin, cout), dtype=jnp.float32)
    kp, cp = _round_up(k * k * cin, LANE), _round_up(cout, LANE)
    w = jnp.pad(w, ((0, kp - k * k * cin), (0, cp - cout)))  # packed-K, lane-padded out
    b = jnp.zeros((1, cp), jnp.float32)                      # Initializer zeros biases
    return w.astype(jnp.bfloat16), b


def build_params(args, key):
    scales = int(round(math.log2(args["width"] // args["latent_width"])))
    depth, latent = args["depth"], args["latent"]
    colors, ncls = args["colors"], args["nclasses"]
    keys = iter(jax.random.split(key, 64))

    def conv(cin, cout, k, pad, act):
        w, b = _init_conv(next(keys), k, cin, cout)
        return ("conv", w, b, k, pad, act, cout)

    # Encoder: Conv(colors->depth//2,1x1,pad=1) [no act]; per scale two 3x3+LReLU +
    # AvgPool2; then 3x3+LReLU to depth<<scales, then 3x3 to latent [no act].
    enc = [conv(colors, depth // 2, 1, 1, None)]
    kp = depth // 2
    for s in range(scales):
        k = depth << s
        enc += [conv(kp, k, 3, 1, "leaky"), conv(k, k, 3, 1, "leaky"), ("pool",)]
        kp = k
    k = depth << scales
    enc += [conv(kp, k, 3, 1, "leaky"), conv(k, latent, 3, 1, None)]

    # Decoder: Conv(latent->depth<<scales,1x1)+LReLU; per scale two 3x3+LReLU +
    # Upsample(2); then 3x3->depth + LReLU.
    dec = [conv(latent, depth << scales, 1, 0, "leaky")]
    kp = depth << scales
    for s in range(scales - 1, -1, -1):
        k = depth << s
        dec += [conv(kp, k, 3, 1, "leaky"), conv(k, k, 3, 1, "leaky"), ("up",)]
        kp = k
    dec += [conv(kp, depth, 3, 1, "leaky")]

    head1 = conv(depth, 1, 3, 1, "sigmoid")                # Conv 3x3 -> 1 + Sigmoid
    head2a = conv(depth, depth, 3, 1, "leaky")             # Conv 3x3 -> depth + LReLU
    # head2b: 1x1 conv (real f32 weights; BN folded into it at runtime) + BN gamma.
    std = 1.0 / math.sqrt((1.0 + 0.2 ** 2) * ncls * depth * 1)
    w2b = std * jax.random.normal(next(keys), (depth, ncls), dtype=jnp.float32)
    # Initializer also hits BatchNorm2d.weight: std = 1/sqrt(1+slope^2); bias -> 0.
    gamma = (1.0 / math.sqrt(1.0 + 0.2 ** 2)) * jax.random.normal(
        next(keys), (depth,), dtype=jnp.float32)
    return dict(enc=enc, dec=dec, head1=head1, head2a=head2a,
                head2b_w=w2b, head2b_gamma=gamma)


# ----------------------------------------------------------------------------
# Forward pass
# ----------------------------------------------------------------------------
def _run_seq(x, layers):
    for layer in layers:
        tag = layer[0]
        if tag == "conv":
            _, w, b, k, pad, act, cout = layer
            x = conv2d(x, w, b, ksize=k, padding=pad, act=act, cout=cout)
        elif tag == "pool":
            # TODO(synk): fuse AvgPool2d(2) into the preceding conv kernel's epilogue;
            # for now it is a tiny bf16 reduce that XLA fuses with the next layer's
            # patch producer (no standalone HBM round trip of consequence).
            N, H, W, C = x.shape
            x = x.reshape(N, H // 2, 2, W // 2, 2, C).mean(axis=(2, 4)).astype(jnp.bfloat16)
        elif tag == "up":
            # TODO(synk): fold Upsample(nearest,2) into the next conv's tap addressing;
            # the repeat below fuses into that conv's patch-producer XLA fusion.
            x = jnp.repeat(jnp.repeat(x, 2, axis=1), 2, axis=2)
    return x


def forward(img_nchw, params, nclasses):
    x = jnp.transpose(img_nchw, (0, 2, 3, 1)).astype(jnp.bfloat16)   # NCHW -> NHWC bf16

    z = _run_seq(x, params["enc"])                                   # encode
    out = _run_seq(z, params["dec"])                                 # decode trunk

    _, w1, b1, k1, p1, a1, c1 = params["head1"]
    img = conv2d(out, w1, b1, ksize=k1, padding=p1, act=a1, cout=c1,
                 out_dtype=jnp.float32)

    _, w2, b2, k2, p2, a2, c2 = params["head2a"]
    h, s, sq = conv2d(out, w2, b2, ksize=k2, padding=p2, act=a2, cout=c2,
                      with_bn_stats=True)                            # fused BN stats
    count = h.shape[0] * h.shape[1] * h.shape[2]
    wf, bf = bn_fold_1x1(s, sq, count, params["head2b_w"], params["head2b_gamma"])
    probs = conv2d(h, wf, bf, ksize=1, padding=0, act="softmax",
                   cout=nclasses, n_valid=nclasses, out_dtype=jnp.float32)

    return {"image": jnp.transpose(img, (0, 3, 1, 2)),
            "soft_probs": jnp.transpose(probs, (0, 3, 1, 2))}


# ----------------------------------------------------------------------------
if __name__ == "__main__":
    args = {"width": 16, "latent_width": 8, "depth": 8, "latent": 4,
            "colors": 4, "nclasses": 4}
    key = jax.random.PRNGKey(0)
    pkey, xkey = jax.random.split(key)
    params = build_params(args, pkey)

    img = jax.random.normal(xkey, (2, args["colors"], args["width"], args["width"]),
                            dtype=jnp.float32)

    fwd = jax.jit(lambda im: forward(im, params, args["nclasses"]))
    out = fwd(img)
    jax.block_until_ready(out["image"])
    jax.block_until_ready(out["soft_probs"])

    # The PyTorch encoder's first layer is Conv2d(colors, depth//2, 1, padding=1),
    # which grows spatial dims by 2 (16 -> 18); outputs reproduce that exactly.
    assert out["image"].shape == (2, 1, 18, 18), out["image"].shape
    assert out["soft_probs"].shape == (2, args["nclasses"], 18, 18), out["soft_probs"].shape
    assert bool(jnp.all(jnp.isfinite(out["image"])))
    assert bool(jnp.all(jnp.isfinite(out["soft_probs"])))
    # exact softmax divide -> tight sum-to-one
    assert bool(jnp.allclose(jnp.sum(out["soft_probs"], axis=1), 1.0, atol=1e-3))
    assert bool(jnp.all((out["image"] >= 0.0) & (out["image"] <= 1.0)))

    print("KERNEL_OK")
</pallas_src>

<mosaic_0001>
module attributes {stable_mosaic.version = 11 : i64} {
  func.func @conv_kernel(%arg0: i32, %arg1: i32, %arg2: memref<1x128x128xbf16, #tpu.memory_space<vmem>>, %arg3: memref<128x128xbf16, #tpu.memory_space<vmem>>, %arg4: memref<1x128xf32, #tpu.memory_space<vmem>>, %arg5: memref<1x128x128xbf16, #tpu.memory_space<vmem>>) attributes {dimension_semantics = [#tpu.dimension_semantics<parallel>, #tpu.dimension_semantics<arbitrary>], iteration_bounds = array<i64: 2, 3>, scalar_prefetch = 0 : i64, scratch_operands = 0 : i64, tpu.core_type = #tpu.core_type<tc>, window_params = [{transform_indices = @transform_0, window_bounds = array<i64: 1, 128, 128>}, {pipeline_mode = #tpu.pipeline_mode<synchronous>, transform_indices = @transform_1, window_bounds = array<i64: 128, 128>}, {pipeline_mode = #tpu.pipeline_mode<synchronous>, transform_indices = @transform_2, window_bounds = array<i64: 1, 128>}, {transform_indices = @transform_3, window_bounds = array<i64: 1, 128, 128>}]} {
    %c0 = arith.constant 0 : index
    %c0_0 = arith.constant 0 : index
    %c0_1 = arith.constant 0 : index
    %0 = vector.load %arg2[%c0, %c0_0, %c0_1] : memref<1x128x128xbf16, #tpu.memory_space<vmem>>, vector<1x128x128xbf16>
    %1 = vector.shape_cast %0 : vector<1x128x128xbf16> to vector<128x128xbf16>
    %c0_2 = arith.constant 0 : index
    %c0_3 = arith.constant 0 : index
    %2 = vector.load %arg3[%c0_2, %c0_3] : memref<128x128xbf16, #tpu.memory_space<vmem>>, vector<128x128xbf16>
    %cst = arith.constant dense<0.000000e+00> : vector<128x128xf32>
    %3 = tpu.matmul %1, %2, %cst {dimension_numbers = #tpu.dot_dimension_numbers<[1], [0], [0], [1], [0, 0, 1, 1], [], []>} : vector<128x128xbf16>, vector<128x128xbf16>, vector<128x128xf32> -> vector<128x128xf32>
    %c0_4 = arith.constant 0 : index
    %c0_5 = arith.constant 0 : index
    %4 = vector.load %arg4[%c0_4, %c0_5] : memref<1x128xf32, #tpu.memory_space<vmem>>, vector<1x128xf32>
    %5 = vector.broadcast %4 : vector<1x128xf32> to vector<128x128xf32>
    %6 = arith.addf %3, %5 : vector<128x128xf32>
    %7 = arith.truncf %6 : vector<128x128xf32> to vector<128x128xbf16>
    %c0_6 = arith.constant 0 : index
    %c0_7 = arith.constant 0 : index
    %c0_8 = arith.constant 0 : index
    %8 = vector.load %arg5[%c0_6, %c0_7, %c0_8] : memref<1x128x128xbf16, #tpu.memory_space<vmem>>, vector<1x128x128xbf16>
    %9 = vector.shape_cast %8 : vector<1x128x128xbf16> to vector<128x128xbf16>
    %10 = vector.shape_cast %7 : vector<128x128xbf16> to vector<1x128x128xbf16>
    tpu.vector_store %arg5[%c0_6, %c0_7, %c0_8], %10 {strides = array<i32>} : memref<1x128x128xbf16, #tpu.memory_space<vmem>>, vector<1x128x128xbf16>,
    return
  }
  func.func @transform_0(%arg0: i32, %arg1: i32) -> (i32, i32, i32) {
    %c0_i32 = arith.constant 0 : i32
    %c0_i32_0 = arith.constant 0 : i32
    return %arg0, %arg1, %c0_i32 : i32, i32, i32
  }
  func.func @transform_1(%arg0: i32, %arg1: i32) -> (i32, i32) {
    %c0_i32 = arith.constant 0 : i32
    %c0_i32_0 = arith.constant 0 : i32
    %c0_i32_1 = arith.constant 0 : i32
    return %c0_i32, %c0_i32_0 : i32, i32
  }
  func.func @transform_2(%arg0: i32, %arg1: i32) -> (i32, i32) {
    %c0_i32 = arith.constant 0 : i32
    %c0_i32_0 = arith.constant 0 : i32
    %c0_i32_1 = arith.constant 0 : i32
    return %c0_i32, %c0_i32_0 : i32, i32
  }
  func.func @transform_3(%arg0: i32, %arg1: i32) -> (i32, i32, i32) {
    %c0_i32 = arith.constant 0 : i32
    %c0_i32_0 = arith.constant 0 : i32
    return %arg0, %arg1, %c0_i32 : i32, i32, i32
  }
}

module attributes {stable_mosaic.version = 11 : i64} {
  func.func @conv_kernel(%arg0: i32, %arg1: i32, %arg2: memref<1x128x128xbf16, #tpu.memory_space<vmem>>, %arg3: memref<128x128xbf16, #tpu.memory_space<vmem>>, %arg4: memref<1x128xf32, #tpu.memory_space<vmem>>, %arg5: memref<1x128x128xbf16, #tpu.memory_space<vmem>>) attributes {dimension_semantics = [#tpu.dimension_semantics<parallel>, #tpu.dimension_semantics<arbitrary>], iteration_bounds = array<i64: 2, 3>, scalar_prefetch = 0 : i64, scratch_operands = 0 : i64, tpu.core_type = #tpu.core_type<tc>, window_params = [{transform_indices = @transform_0, window_bounds = array<i64: 1, 128, 128>}, {pipeline_mode = #tpu.pipeline_mode<synchronous>, transform_indices = @transform_1, window_bounds = array<i64: 128, 128>}, {pipeline_mode = #tpu.pipeline_mode<synchronous>, transform_indices = @transform_2, window_bounds = array<i64: 1, 128>}, {transform_indices = @transform_3, window_bounds = array<i64: 1, 128, 128>}]} {
    %c0 = arith.constant 0 : index
    %c0_0 = arith.constant 0 : index
    %c0_1 = arith.constant 0 : index
    %0 = vector.load %arg2[%c0, %c0_0, %c0_1] : memref<1x128x128xbf16, #tpu.memory_space<vmem>>, vector<1x128x128xbf16>
    %1 = vector.shape_cast %0 : vector<1x128x128xbf16> to vector<128x128xbf16>
    %c0_2 = arith.constant 0 : index
    %c0_3 = arith.constant 0 : index
    %2 = vector.load %arg3[%c0_2, %c0_3] : memref<128x128xbf16, #tpu.memory_space<vmem>>, vector<128x128xbf16>
    %cst = arith.constant dense<0.000000e+00> : vector<128x128xf32>
    %3 = tpu.matmul %1, %2, %cst {dimension_numbers = #tpu.dot_dimension_numbers<[1], [0], [0], [1], [0, 0, 1, 1], [], []>} : vector<128x128xbf16>, vector<128x128xbf16>, vector<128x128xf32> -> vector<128x128xf32>
    %c0_4 = arith.constant 0 : index
    %c0_5 = arith.constant 0 : index
    %4 = vector.load %arg4[%c0_4, %c0_5] : memref<1x128xf32, #tpu.memory_space<vmem>>, vector<1x128xf32>
    %5 = vector.broadcast %4 : vector<1x128xf32> to vector<128x128xf32>
    %6 = arith.addf %3, %5 : vector<128x128xf32>
    %cst_6 = arith.constant 0.000000e+00 : f32
    %7 = vector.broadcast %cst_6 : f32 to vector<128x128xf32>
    %8 = arith.cmpf oge, %6, %7 : vector<128x128xf32>
    %cst_7 = arith.constant 0.00999999977 : f32
    %9 = vector.broadcast %cst_7 : f32 to vector<128x128xf32>
    %10 = arith.mulf %9, %6 : vector<128x128xf32>
    %11 = arith.select %8, %6, %10 : vector<128x128xi1>, vector<128x128xf32>
    %12 = arith.truncf %11 : vector<128x128xf32> to vector<128x128xbf16>
    %c0_8 = arith.constant 0 : index
    %c0_9 = arith.constant 0 : index
    %c0_10 = arith.constant 0 : index
    %13 = vector.load %arg5[%c0_8, %c0_9, %c0_10] : memref<1x128x128xbf16, #tpu.memory_space<vmem>>, vector<1x128x128xbf16>
    %14 = vector.shape_cast %13 : vector<1x128x128xbf16> to vector<128x128xbf16>
    %15 = vector.shape_cast %12 : vector<128x128xbf16> to vector<1x128x128xbf16>
    tpu.vector_store %arg5[%c0_8, %c0_9, %c0_10], %15 {strides = array<i32>} : memref<1x128x128xbf16, #tpu.memory_space<vmem>>, vector<1x128x128xbf16>,
    return
  }
  func.func @transform_0(%arg0: i32, %arg1: i32) -> (i32, i32, i32) {
    %c0_i32 = arith.constant 0 : i32
    %c0_i32_0 = arith.constant 0 : i32
    return %arg0, %arg1, %c0_i32 : i32, i32, i32
  }
  func.func @transform_1(%arg0: i32, %arg1: i32) -> (i32, i32) {
    %c0_i32 = arith.constant 0 : i32
    %c0_i32_0 = arith.constant 0 : i32
    %c0_i32_1 = arith.constant 0 : i32
    return %c0_i32, %c0_i32_0 : i32, i32
  }
  func.func @transform_2(%arg0: i32, %arg1: i32) -> (i32, i32) {
    %c0_i32 = arith.constant 0 : i32
    %c0_i32_0 = arith.constant 0 : i32
    %c0_i32_1 = arith.constant 0 : i32
    return %c0_i32, %c0_i32_0 : i32, i32
  }
  func.func @transform_3(%arg0: i32, %arg1: i32) -> (i32, i32, i32) {
    %c0_i32 = arith.constant 0 : i32
    %c0_i32_0 = arith.constant 0 : i32
    return %arg0, %arg1, %c0_i32 : i32, i32, i32
  }
}

module attributes {stable_mosaic.version = 11 : i64} {
  func.func @conv_kernel(%arg0: i32, %arg1: i32, %arg2: memref<1x88x128xbf16, #tpu.memory_space<vmem>>, %arg3: memref<128x128xbf16, #tpu.memory_space<vmem>>, %arg4: memref<1x128xf32, #tpu.memory_space<vmem>>, %arg5: memref<1x88x128xbf16, #tpu.memory_space<vmem>>) attributes {dimension_semantics = [#tpu.dimension_semantics<parallel>, #tpu.dimension_semantics<arbitrary>], iteration_bounds = array<i64: 2, 1>, scalar_prefetch = 0 : i64, scratch_operands = 0 : i64, tpu.core_type = #tpu.core_type<tc>, window_params = [{transform_indices = @transform_0, window_bounds = array<i64: 1, 88, 128>}, {pipeline_mode = #tpu.pipeline_mode<synchronous>, transform_indices = @transform_1, window_bounds = array<i64: 128, 128>}, {pipeline_mode = #tpu.pipeline_mode<synchronous>, transform_indices = @transform_2, window_bounds = array<i64: 1, 128>}, {transform_indices = @transform_3, window_bounds = array<i64: 1, 88, 128>}]} {
    %c0 = arith.constant 0 : index
    %c0_0 = arith.constant 0 : index
    %c0_1 = arith.constant 0 : index
    %0 = vector.load %arg2[%c0, %c0_0, %c0_1] : memref<1x88x128xbf16, #tpu.memory_space<vmem>>, vector<1x88x128xbf16>
    %1 = vector.shape_cast %0 : vector<1x88x128xbf16> to vector<88x128xbf16>
    %c0_2 = arith.constant 0 : index
    %c0_3 = arith.constant 0 : index
    %2 = vector.load %arg3[%c0_2, %c0_3] : memref<128x128xbf16, #tpu.memory_space<vmem>>, vector<128x128xbf16>
    %cst = arith.constant dense<0.000000e+00> : vector<88x128xf32>
    %3 = tpu.matmul %1, %2, %cst {dimension_numbers = #tpu.dot_dimension_numbers<[1], [0], [0], [1], [0, 0, 1, 1], [], []>} : vector<88x128xbf16>, vector<128x128xbf16>, vector<88x128xf32> -> vector<88x128xf32>
    %c0_4 = arith.constant 0 : index
    %c0_5 = arith.constant 0 : index
    %4 = vector.load %arg4[%c0_4, %c0_5] : memref<1x128xf32, #tpu.memory_space<vmem>>, vector<1x128xf32>
    %5 = vector.broadcast %4 : vector<1x128xf32> to vector<88x128xf32>
    %6 = arith.addf %3, %5 : vector<88x128xf32>
    %cst_6 = arith.constant 0.000000e+00 : f32
    %7 = vector.broadcast %cst_6 : f32 to vector<88x128xf32>
    %8 = arith.cmpf oge, %6, %7 : vector<88x128xf32>
    %cst_7 = arith.constant 0.00999999977 : f32
    %9 = vector.broadcast %cst_7 : f32 to vector<88x128xf32>
    %10 = arith.mulf %9, %6 : vector<88x128xf32>
    %11 = arith.select %8, %6, %10 : vector<88x128xi1>, vector<88x128xf32>
    %12 = arith.truncf %11 : vector<88x128xf32> to vector<88x128xbf16>
    %c0_8 = arith.constant 0 : index
    %c0_9 = arith.constant 0 : index
    %c0_10 = arith.constant 0 : index
    %13 = vector.load %arg5[%c0_8, %c0_9, %c0_10] : memref<1x88x128xbf16, #tpu.memory_space<vmem>>, vector<1x88x128xbf16>
    %14 = vector.shape_cast %13 : vector<1x88x128xbf16> to vector<88x128xbf16>
    %15 = vector.shape_cast %12 : vector<88x128xbf16> to vector<1x88x128xbf16>
    tpu.vector_store %arg5[%c0_8, %c0_9, %c0_10], %15 {strides = array<i32>} : memref<1x88x128xbf16, #tpu.memory_space<vmem>>, vector<1x88x128xbf16>,
    return
  }
  func.func @transform_0(%arg0: i32, %arg1: i32) -> (i32, i32, i32) {
    %c0_i32 = arith.constant 0 : i32
    %c0_i32_0 = arith.constant 0 : i32
    return %arg0, %arg1, %c0_i32 : i32, i32, i32
  }
  func.func @transform_1(%arg0: i32, %arg1: i32) -> (i32, i32) {
    %c0_i32 = arith.constant 0 : i32
    %c0_i32_0 = arith.constant 0 : i32
    %c0_i32_1 = arith.constant 0 : i32
    return %c0_i32, %c0_i32_0 : i32, i32
  }
  func.func @transform_2(%arg0: i32, %arg1: i32) -> (i32, i32) {
    %c0_i32 = arith.constant 0 : i32
    %c0_i32_0 = arith.constant 0 : i32
    %c0_i32_1 = arith.constant 0 : i32
    return %c0_i32, %c0_i32_0 : i32, i32
  }
  func.func @transform_3(%arg0: i32, %arg1: i32) -> (i32, i32, i32) {
    %c0_i32 = arith.constant 0 : i32
    %c0_i32_0 = arith.constant 0 : i32
    return %arg0, %arg1, %c0_i32 : i32, i32, i32
  }
}

module attributes {stable_mosaic.version = 11 : i64} {
  func.func @conv_kernel(%arg0: i32, %arg1: i32, %arg2: memref<1x88x256xbf16, #tpu.memory_space<vmem>>, %arg3: memref<256x128xbf16, #tpu.memory_space<vmem>>, %arg4: memref<1x128xf32, #tpu.memory_space<vmem>>, %arg5: memref<1x88x128xbf16, #tpu.memory_space<vmem>>) attributes {dimension_semantics = [#tpu.dimension_semantics<parallel>, #tpu.dimension_semantics<arbitrary>], iteration_bounds = array<i64: 2, 1>, scalar_prefetch = 0 : i64, scratch_operands = 0 : i64, tpu.core_type = #tpu.core_type<tc>, window_params = [{transform_indices = @transform_0, window_bounds = array<i64: 1, 88, 256>}, {pipeline_mode = #tpu.pipeline_mode<synchronous>, transform_indices = @transform_1, window_bounds = array<i64: 256, 128>}, {pipeline_mode = #tpu.pipeline_mode<synchronous>, transform_indices = @transform_2, window_bounds = array<i64: 1, 128>}, {transform_indices = @transform_3, window_bounds = array<i64: 1, 88, 128>}]} {
    %c0 = arith.constant 0 : index
    %c0_0 = arith.constant 0 : index
    %c0_1 = arith.constant 0 : index
    %0 = vector.load %arg2[%c0, %c0_0, %c0_1] : memref<1x88x256xbf16, #tpu.memory_space<vmem>>, vector<1x88x256xbf16>
    %1 = vector.shape_cast %0 : vector<1x88x256xbf16> to vector<88x256xbf16>
    %c0_2 = arith.constant 0 : index
    %c0_3 = arith.constant 0 : index
    %2 = vector.load %arg3[%c0_2, %c0_3] : memref<256x128xbf16, #tpu.memory_space<vmem>>, vector<256x128xbf16>
    %cst = arith.constant dense<0.000000e+00> : vector<88x128xf32>
    %3 = tpu.matmul %1, %2, %cst {dimension_numbers = #tpu.dot_dimension_numbers<[1], [0], [0], [1], [0, 0, 1, 1], [], []>} : vector<88x256xbf16>, vector<256x128xbf16>, vector<88x128xf32> -> vector<88x128xf32>
    %c0_4 = arith.constant 0 : index
    %c0_5 = arith.constant 0 : index
    %4 = vector.load %arg4[%c0_4, %c0_5] : memref<1x128xf32, #tpu.memory_space<vmem>>, vector<1x128xf32>
    %5 = vector.broadcast %4 : vector<1x128xf32> to vector<88x128xf32>
    %6 = arith.addf %3, %5 : vector<88x128xf32>
    %7 = arith.truncf %6 : vector<88x128xf32> to vector<88x128xbf16>
    %c0_6 = arith.constant 0 : index
    %c0_7 = arith.constant 0 : index
    %c0_8 = arith.constant 0 : index
    %8 = vector.load %arg5[%c0_6, %c0_7, %c0_8] : memref<1x88x128xbf16, #tpu.memory_space<vmem>>, vector<1x88x128xbf16>
    %9 = vector.shape_cast %8 : vector<1x88x128xbf16> to vector<88x128xbf16>
    %10 = vector.shape_cast %7 : vector<88x128xbf16> to vector<1x88x128xbf16>
    tpu.vector_store %arg5[%c0_6, %c0_7, %c0_8], %10 {strides = array<i32>} : memref<1x88x128xbf16, #tpu.memory_space<vmem>>, vector<1x88x128xbf16>,
    return
  }
  func.func @transform_0(%arg0: i32, %arg1: i32) -> (i32, i32, i32) {
    %c0_i32 = arith.constant 0 : i32
    %c0_i32_0 = arith.constant 0 : i32
    return %arg0, %arg1, %c0_i32 : i32, i32, i32
  }
  func.func @transform_1(%arg0: i32, %arg1: i32) -> (i32, i32) {
    %c0_i32 = arith.constant 0 : i32
    %c0_i32_0 = arith.constant 0 : i32
    %c0_i32_1 = arith.constant 0 : i32
    return %c0_i32, %c0_i32_0 : i32, i32
  }
  func.func @transform_2(%arg0: i32, %arg1: i32) -> (i32, i32) {
    %c0_i32 = arith.constant 0 : i32
    %c0_i32_0 = arith.constant 0 : i32
    %c0_i32_1 = arith.constant 0 : i32
    return %c0_i32, %c0_i32_0 : i32, i32
  }
  func.func @transform_3(%arg0: i32, %arg1: i32) -> (i32, i32, i32) {
    %c0_i32 = arith.constant 0 : i32
    %c0_i32_0 = arith.constant 0 : i32
    return %arg0, %arg1, %c0_i32 : i32, i32, i32
  }
}

module attributes {stable_mosaic.version = 11 : i64} {
  func.func @conv_kernel(%arg0: i32, %arg1: i32, %arg2: memref<1x88x256xbf16, #tpu.memory_space<vmem>>, %arg3: memref<256x128xbf16, #tpu.memory_space<vmem>>, %arg4: memref<1x128xf32, #tpu.memory_space<vmem>>, %arg5: memref<1x88x128xbf16, #tpu.memory_space<vmem>>) attributes {dimension_semantics = [#tpu.dimension_semantics<parallel>, #tpu.dimension_semantics<arbitrary>], iteration_bounds = array<i64: 2, 1>, scalar_prefetch = 0 : i64, scratch_operands = 0 : i64, tpu.core_type = #tpu.core_type<tc>, window_params = [{transform_indices = @transform_0, window_bounds = array<i64: 1, 88, 256>}, {pipeline_mode = #tpu.pipeline_mode<synchronous>, transform_indices = @transform_1, window_bounds = array<i64: 256, 128>}, {pipeline_mode = #tpu.pipeline_mode<synchronous>, transform_indices = @transform_2, window_bounds = array<i64: 1, 128>}, {transform_indices = @transform_3, window_bounds = array<i64: 1, 88, 128>}]} {
    %c0 = arith.constant 0 : index
    %c0_0 = arith.constant 0 : index
    %c0_1 = arith.constant 0 : index
    %0 = vector.load %arg2[%c0, %c0_0, %c0_1] : memref<1x88x256xbf16, #tpu.memory_space<vmem>>, vector<1x88x256xbf16>
    %1 = vector.shape_cast %0 : vector<1x88x256xbf16> to vector<88x256xbf16>
    %c0_2 = arith.constant 0 : index
    %c0_3 = arith.constant 0 : index
    %2 = vector.load %arg3[%c0_2, %c0_3] : memref<256x128xbf16, #tpu.memory_space<vmem>>, vector<256x128xbf16>
    %cst = arith.constant dense<0.000000e+00> : vector<88x128xf32>
    %3 = tpu.matmul %1, %2, %cst {dimension_numbers = #tpu.dot_dimension_numbers<[1], [0], [0], [1], [0, 0, 1, 1], [], []>} : vector<88x256xbf16>, vector<256x128xbf16>, vector<88x128xf32> -> vector<88x128xf32>
    %c0_4 = arith.constant 0 : index
    %c0_5 = arith.constant 0 : index
    %4 = vector.load %arg4[%c0_4, %c0_5] : memref<1x128xf32, #tpu.memory_space<vmem>>, vector<1x128xf32>
    %5 = vector.broadcast %4 : vector<1x128xf32> to vector<88x128xf32>
    %6 = arith.addf %3, %5 : vector<88x128xf32>
    %cst_6 = arith.constant 0.000000e+00 : f32
    %7 = vector.broadcast %cst_6 : f32 to vector<88x128xf32>
    %8 = arith.cmpf oge, %6, %7 : vector<88x128xf32>
    %cst_7 = arith.constant 0.00999999977 : f32
    %9 = vector.broadcast %cst_7 : f32 to vector<88x128xf32>
    %10 = arith.mulf %9, %6 : vector<88x128xf32>
    %11 = arith.select %8, %6, %10 : vector<88x128xi1>, vector<88x128xf32>
    %12 = arith.truncf %11 : vector<88x128xf32> to vector<88x128xbf16>
    %c0_8 = arith.constant 0 : index
    %c0_9 = arith.constant 0 : index
    %c0_10 = arith.constant 0 : index
    %13 = vector.load %arg5[%c0_8, %c0_9, %c0_10] : memref<1x88x128xbf16, #tpu.memory_space<vmem>>, vector<1x88x128xbf16>
    %14 = vector.shape_cast %13 : vector<1x88x128xbf16> to vector<88x128xbf16>
    %15 = vector.shape_cast %12 : vector<88x128xbf16> to vector<1x88x128xbf16>
    tpu.vector_store %arg5[%c0_8, %c0_9, %c0_10], %15 {strides = array<i32>} : memref<1x88x128xbf16, #tpu.memory_space<vmem>>, vector<1x88x128xbf16>,
    return
  }
  func.func @transform_0(%arg0: i32, %arg1: i32) -> (i32, i32, i32) {
    %c0_i32 = arith.constant 0 : i32
    %c0_i32_0 = arith.constant 0 : i32
    return %arg0, %arg1, %c0_i32 : i32, i32, i32
  }
  func.func @transform_1(%arg0: i32, %arg1: i32) -> (i32, i32) {
    %c0_i32 = arith.constant 0 : i32
    %c0_i32_0 = arith.constant 0 : i32
    %c0_i32_1 = arith.constant 0 : i32
    return %c0_i32, %c0_i32_0 : i32, i32
  }
  func.func @transform_2(%arg0: i32, %arg1: i32) -> (i32, i32) {
    %c0_i32 = arith.constant 0 : i32
    %c0_i32_0 = arith.constant 0 : i32
    %c0_i32_1 = arith.constant 0 : i32
    return %c0_i32, %c0_i32_0 : i32, i32
  }
  func.func @transform_3(%arg0: i32, %arg1: i32) -> (i32, i32, i32) {
    %c0_i32 = arith.constant 0 : i32
    %c0_i32_0 = arith.constant 0 : i32
    return %arg0, %arg1, %c0_i32 : i32, i32, i32
  }
}

module attributes {stable_mosaic.version = 11 : i64} {
  func.func @conv_bn_kernel(%arg0: i32, %arg1: i32, %arg2: memref<1x128x128xbf16, #tpu.memory_space<vmem>>, %arg3: memref<128x128xbf16, #tpu.memory_space<vmem>>, %arg4: memref<1x128xf32, #tpu.memory_space<vmem>>, %arg5: memref<1x128x128xbf16, #tpu.memory_space<vmem>>, %arg6: memref<1x128xf32, #tpu.memory_space<vmem>>, %arg7: memref<1x128xf32, #tpu.memory_space<vmem>>) attributes {dimension_semantics = [#tpu.dimension_semantics<arbitrary>, #tpu.dimension_semantics<arbitrary>], iteration_bounds = array<i64: 2, 3>, scalar_prefetch = 0 : i64, scratch_operands = 0 : i64, tpu.core_type = #tpu.core_type<tc>, window_params = [{transform_indices = @transform_0, window_bounds = array<i64: 1, 128, 128>}, {pipeline_mode = #tpu.pipeline_mode<synchronous>, transform_indices = @transform_1, window_bounds = array<i64: 128, 128>}, {pipeline_mode = #tpu.pipeline_mode<synchronous>, transform_indices = @transform_2, window_bounds = array<i64: 1, 128>}, {transform_indices = @transform_3, window_bounds = array<i64: 1, 128, 128>}, {pipeline_mode = #tpu.pipeline_mode<synchronous>, transform_indices = @transform_4, window_bounds = array<i64: 1, 128>}, {pipeline_mode = #tpu.pipeline_mode<synchronous>, transform_indices = @transform_5, window_bounds = array<i64: 1, 128>}]} {
    %c0_i32 = arith.constant 0 : i32
    %0 = arith.cmpi eq, %arg0, %c0_i32 : i32
    %c0_i32_0 = arith.constant 0 : i32
    %1 = arith.cmpi eq, %arg1, %c0_i32_0 : i32
    %2 = arith.andi %0, %1 : i1
    %3 = arith.extui %2 : i1 to i32
    %c0_i32_1 = arith.constant 0 : i32
    %4 = arith.cmpi ne, %3, %c0_i32_1 : i32
    scf.if %4 {
      %cst_24 = arith.constant 0.000000e+00 : f32
      %40 = vector.broadcast %cst_24 : f32 to vector<1x128xf32>
      %c0_25 = arith.constant 0 : index
      %c0_26 = arith.constant 0 : index
      %41 = vector.load %arg6[%c0_25, %c0_26] : memref<1x128xf32, #tpu.memory_space<vmem>>, vector<1x128xf32>
      tpu.vector_store %arg6[%c0_25, %c0_26], %40 {strides = array<i32>} : memref<1x128xf32, #tpu.memory_space<vmem>>, vector<1x128xf32>,
      %cst_27 = arith.constant 0.000000e+00 : f32
      %42 = vector.broadcast %cst_27 : f32 to vector<1x128xf32>
      %c0_28 = arith.constant 0 : index
      %c0_29 = arith.constant 0 : index
      %43 = vector.load %arg7[%c0_28, %c0_29] : memref<1x128xf32, #tpu.memory_space<vmem>>, vector<1x128xf32>
      tpu.vector_store %arg7[%c0_28, %c0_29], %42 {strides = array<i32>} : memref<1x128xf32, #tpu.memory_space<vmem>>, vector<1x128xf32>,
    } else {
    }
    %c0 = arith.constant 0 : index
    %c0_2 = arith.constant 0 : index
    %c0_3 = arith.constant 0 : index
    %5 = vector.load %arg2[%c0, %c0_2, %c0_3] : memref<1x128x128xbf16, #tpu.memory_space<vmem>>, vector<1x128x128xbf16>
    %6 = vector.shape_cast %5 : vector<1x128x128xbf16> to vector<128x128xbf16>
    %c0_4 = arith.constant 0 : index
    %c0_5 = arith.constant 0 : index
    %7 = vector.load %arg3[%c0_4, %c0_5] : memref<128x128xbf16, #tpu.memory_space<vmem>>, vector<128x128xbf16>
    %cst = arith.constant dense<0.000000e+00> : vector<128x128xf32>
    %8 = tpu.matmul %6, %7, %cst {dimension_numbers = #tpu.dot_dimension_numbers<[1], [0], [0], [1], [0, 0, 1, 1], [], []>} : vector<128x128xbf16>, vector<128x128xbf16>, vector<128x128xf32> -> vector<128x128xf32>
    %c0_6 = arith.constant 0 : index
    %c0_7 = arith.constant 0 : index
    %9 = vector.load %arg4[%c0_6, %c0_7] : memref<1x128xf32, #tpu.memory_space<vmem>>, vector<1x128xf32>
    %10 = vector.broadcast %9 : vector<1x128xf32> to vector<128x128xf32>
    %11 = arith.addf %8, %10 : vector<128x128xf32>
    %cst_8 = arith.constant 0.000000e+00 : f32
    %12 = vector.broadcast %cst_8 : f32 to vector<128x128xf32>
    %13 = arith.cmpf oge, %11, %12 : vector<128x128xf32>
    %cst_9 = arith.constant 0.00999999977 : f32
    %14 = vector.broadcast %cst_9 : f32 to vector<128x128xf32>
    %15 = arith.mulf %14, %11 : vector<128x128xf32>
    %16 = arith.select %13, %11, %15 : vector<128x128xi1>, vector<128x128xf32>
    %17 = tpu.iota {dimensions = array<i32: 0>} : vector<128x128xi32>
    %c128_i32 = arith.constant 128 : i32
    %18 = arith.muli %arg1, %c128_i32 : i32
    %19 = vector.broadcast %18 : i32 to vector<128x128xi32>
    %20 = arith.addi %17, %19 : vector<128x128xi32>
    %c324_i32 = arith.constant 324 : i32
    %21 = vector.broadcast %c324_i32 : i32 to vector<128x128xi32>
    %22 = arith.cmpi slt, %20, %21 : vector<128x128xi32>
    %cst_10 = arith.constant 0.000000e+00 : f32
    %23 = vector.broadcast %cst_10 : f32 to vector<128x128xf32>
    %24 = arith.select %22, %16, %23 : vector<128x128xi1>, vector<128x128xf32>
    %c0_11 = arith.constant 0 : index
    %c0_12 = arith.constant 0 : index
    %25 = vector.load %arg6[%c0_11, %c0_12] : memref<1x128xf32, #tpu.memory_space<vmem>>, vector<1x128xf32>
    %cst_13 = arith.constant dense<0.000000e+00> : vector<128xf32>
    %26 = vector.multi_reduction <add>, %24, %cst_13 [0] : vector<128x128xf32> to vector<128xf32>
    %27 = vector.shape_cast %26 : vector<128xf32> to vector<1x128xf32>
    %28 = arith.addf %25, %27 : vector<1x128xf32>
    %c0_14 = arith.constant 0 : index
    %c0_15 = arith.constant 0 : index
    %29 = vector.load %arg6[%c0_14, %c0_15] : memref<1x128xf32, #tpu.memory_space<vmem>>, vector<1x128xf32>
    tpu.vector_store %arg6[%c0_14, %c0_15], %28 {strides = array<i32>} : memref<1x128xf32, #tpu.memory_space<vmem>>, vector<1x128xf32>,
    %c0_16 = arith.constant 0 : index
    %c0_17 = arith.constant 0 : index
    %30 = vector.load %arg7[%c0_16, %c0_17] : memref<1x128xf32, #tpu.memory_space<vmem>>, vector<1x128xf32>
    %31 = arith.mulf %24, %24 : vector<128x128xf32>
    %cst_18 = arith.constant dense<0.000000e+00> : vector<128xf32>
    %32 = vector.multi_reduction <add>, %31, %cst_18 [0] : vector<128x128xf32> to vector<128xf32>
    %33 = vector.shape_cast %32 : vector<128xf32> to vector<1x128xf32>
    %34 = arith.addf %30, %33 : vector<1x128xf32>
    %c0_19 = arith.constant 0 : index
    %c0_20 = arith.constant 0 : index
    %35 = vector.load %arg7[%c0_19, %c0_20] : memref<1x128xf32, #tpu.memory_space<vmem>>, vector<1x128xf32>
    tpu.vector_store %arg7[%c0_19, %c0_20], %34 {strides = array<i32>} : memref<1x128xf32, #tpu.memory_space<vmem>>, vector<1x128xf32>,
    %36 = arith.truncf %16 : vector<128x128xf32> to vector<128x128xbf16>
    %c0_21 = arith.constant 0 : index
    %c0_22 = arith.constant 0 : index
    %c0_23 = arith.constant 0 : index
    %37 = vector.load %arg5[%c0_21, %c0_22, %c0_23] : memref<1x128x128xbf16, #tpu.memory_space<vmem>>, vector<1x128x128xbf16>
    %38 = vector.shape_cast %37 : vector<1x128x128xbf16> to vector<128x128xbf16>
    %39 = vector.shape_cast %36 : vector<128x128xbf16> to vector<1x128x128xbf16>
    tpu.vector_store %arg5[%c0_21, %c0_22, %c0_23], %39 {strides = array<i32>} : memref<1x128x128xbf16, #tpu.memory_space<vmem>>, vector<1x128x128xbf16>,
    return
  }
  func.func @transform_0(%arg0: i32, %arg1: i32) -> (i32, i32, i32) {
    %c0_i32 = arith.constant 0 : i32
    %c0_i32_0 = arith.constant 0 : i32
    return %arg0, %arg1, %c0_i32 : i32, i32, i32
  }
  func.func @transform_1(%arg0: i32, %arg1: i32) -> (i32, i32) {
    %c0_i32 = arith.constant 0 : i32
    %c0_i32_0 = arith.constant 0 : i32
    %c0_i32_1 = arith.constant 0 : i32
    return %c0_i32, %c0_i32_0 : i32, i32
  }
  func.func @transform_2(%arg0: i32, %arg1: i32) -> (i32, i32) {
    %c0_i32 = arith.constant 0 : i32
    %c0_i32_0 = arith.constant 0 : i32
    %c0_i32_1 = arith.constant 0 : i32
    return %c0_i32, %c0_i32_0 : i32, i32
  }
  func.func @transform_3(%arg0: i32, %arg1: i32) -> (i32, i32, i32) {
    %c0_i32 = arith.constant 0 : i32
    %c0_i32_0 = arith.constant 0 : i32
    return %arg0, %arg1, %c0_i32 : i32, i32, i32
  }
  func.func @transform_4(%arg0: i32, %arg1: i32) -> (i32, i32) {
    %c0_i32 = arith.constant 0 : i32
    %c0_i32_0 = arith.constant 0 : i32
    %c0_i32_1 = arith.constant 0 : i32
    return %c0_i32, %c0_i32_0 : i32, i32
  }
  func.func @transform_5(%arg0: i32, %arg1: i32) -> (i32, i32) {
    %c0_i32 = arith.constant 0 : i32
    %c0_i32_0 = arith.constant 0 : i32
    %c0_i32_1 = arith.constant 0 : i32
    return %c0_i32, %c0_i32_0 : i32, i32
  }
}

module attributes {stable_mosaic.version = 11 : i64} {
  func.func @conv_kernel(%arg0: i32, %arg1: i32, %arg2: memref<1x128x128xbf16, #tpu.memory_space<vmem>>, %arg3: memref<128x128xbf16, #tpu.memory_space<vmem>>, %arg4: memref<1x128xf32, #tpu.memory_space<vmem>>, %arg5: memref<1x128x128xf32, #tpu.memory_space<vmem>>) attributes {dimension_semantics = [#tpu.dimension_semantics<parallel>, #tpu.dimension_semantics<arbitrary>], iteration_bounds = array<i64: 2, 3>, scalar_prefetch = 0 : i64, scratch_operands = 0 : i64, tpu.core_type = #tpu.core_type<tc>, window_params = [{transform_indices = @transform_0, window_bounds = array<i64: 1, 128, 128>}, {pipeline_mode = #tpu.pipeline_mode<synchronous>, transform_indices = @transform_1, window_bounds = array<i64: 128, 128>}, {pipeline_mode = #tpu.pipeline_mode<synchronous>, transform_indices = @transform_2, window_bounds = array<i64: 1, 128>}, {transform_indices = @transform_3, window_bounds = array<i64: 1, 128, 128>}]} {
    %c0 = arith.constant 0 : index
    %c0_0 = arith.constant 0 : index
    %c0_1 = arith.constant 0 : index
    %0 = vector.load %arg2[%c0, %c0_0, %c0_1] : memref<1x128x128xbf16, #tpu.memory_space<vmem>>, vector<1x128x128xbf16>
    %1 = vector.shape_cast %0 : vector<1x128x128xbf16> to vector<128x128xbf16>
    %c0_2 = arith.constant 0 : index
    %c0_3 = arith.constant 0 : index
    %2 = vector.load %arg3[%c0_2, %c0_3] : memref<128x128xbf16, #tpu.memory_space<vmem>>, vector<128x128xbf16>
    %cst = arith.constant dense<0.000000e+00> : vector<128x128xf32>
    %3 = tpu.matmul %1, %2, %cst {dimension_numbers = #tpu.dot_dimension_numbers<[1], [0], [0], [1], [0, 0, 1, 1], [], []>} : vector<128x128xbf16>, vector<128x128xbf16>, vector<128x128xf32> -> vector<128x128xf32>
    %c0_4 = arith.constant 0 : index
    %c0_5 = arith.constant 0 : index
    %4 = vector.load %arg4[%c0_4, %c0_5] : memref<1x128xf32, #tpu.memory_space<vmem>>, vector<1x128xf32>
    %5 = vector.broadcast %4 : vector<1x128xf32> to vector<128x128xf32>
    %6 = arith.addf %3, %5 : vector<128x128xf32>
    %7 = tpu.iota {dimensions = array<i32: 1>} : vector<128x128xi32>
    %c4_i32 = arith.constant 4 : i32
    %8 = vector.broadcast %c4_i32 : i32 to vector<128x128xi32>
    %9 = arith.cmpi slt, %7, %8 : vector<128x128xi32>
    %cst_6 = arith.constant -1.000000e+30 : f32
    %10 = vector.broadcast %cst_6 : f32 to vector<128x128xf32>
    %11 = arith.select %9, %6, %10 : vector<128x128xi1>, vector<128x128xf32>
    %cst_7 = arith.constant dense<0xFF800000> : vector<128xf32>
    %12 = vector.multi_reduction <maximumf>, %11, %cst_7 [1] : vector<128x128xf32> to vector<128xf32>
    %13 = vector.shape_cast %12 : vector<128xf32> to vector<128x1xf32>
    %14 = vector.broadcast %13 : vector<128x1xf32> to vector<128x128xf32>
    %15 = arith.subf %11, %14 : vector<128x128xf32>
    %16 = math.exp %15 : vector<128x128xf32>
    %cst_8 = arith.constant 0.000000e+00 : f32
    %17 = vector.broadcast %cst_8 : f32 to vector<128x128xf32>
    %18 = arith.select %9, %16, %17 : vector<128x128xi1>, vector<128x128xf32>
    %cst_9 = arith.constant dense<0.000000e+00> : vector<128xf32>
    %19 = vector.multi_reduction <add>, %18, %cst_9 [1] : vector<128x128xf32> to vector<128xf32>
    %20 = vector.shape_cast %19 : vector<128xf32> to vector<128x1xf32>
    %21 = vector.broadcast %20 : vector<128x1xf32> to vector<128x128xf32>
    %22 = arith.divf %18, %21 : vector<128x128xf32>
    %c0_10 = arith.constant 0 : index
    %c0_11 = arith.constant 0 : index
    %c0_12 = arith.constant 0 : index
    %23 = vector.load %arg5[%c0_10, %c0_11, %c0_12] : memref<1x128x128xf32, #tpu.memory_space<vmem>>, vector<1x128x128xf32>
    %24 = vector.shape_cast %23 : vector<1x128x128xf32> to vector<128x128xf32>
    %25 = vector.shape_cast %22 : vector<128x128xf32> to vector<1x128x128xf32>
    tpu.vector_store %arg5[%c0_10, %c0_11, %c0_12], %25 {strides = array<i32>} : memref<1x128x128xf32, #tpu.memory_space<vmem>>, vector<1x128x128xf32>,
    return
  }
  func.func @transform_0(%arg0: i32, %arg1: i32) -> (i32, i32, i32) {
    %c0_i32 = arith.constant 0 : i32
    %c0_i32_0 = arith.constant 0 : i32
    return %arg0, %arg1, %c0_i32 : i32, i32, i32
  }
  func.func @transform_1(%arg0: i32, %arg1: i32) -> (i32, i32) {
    %c0_i32 = arith.constant 0 : i32
    %c0_i32_0 = arith.constant 0 : i32
    %c0_i32_1 = arith.constant 0 : i32
    return %c0_i32, %c0_i32_0 : i32, i32
  }
  func.func @transform_2(%arg0: i32, %arg1: i32) -> (i32, i32) {
    %c0_i32 = arith.constant 0 : i32
    %c0_i32_0 = arith.constant 0 : i32
    %c0_i32_1 = arith.constant 0 : i32
    return %c0_i32, %c0_i32_0 : i32, i32
  }
  func.func @transform_3(%arg0: i32, %arg1: i32) -> (i32, i32, i32) {
    %c0_i32 = arith.constant 0 : i32
    %c0_i32_0 = arith.constant 0 : i32
    return %arg0, %arg1, %c0_i32 : i32, i32, i32
  }
}

module attributes {stable_mosaic.version = 11 : i64} {
  func.func @conv_kernel(%arg0: i32, %arg1: i32, %arg2: memref<1x128x128xbf16, #tpu.memory_space<vmem>>, %arg3: memref<128x128xbf16, #tpu.memory_space<vmem>>, %arg4: memref<1x128xf32, #tpu.memory_space<vmem>>, %arg5: memref<1x128x128xf32, #tpu.memory_space<vmem>>) attributes {dimension_semantics = [#tpu.dimension_semantics<parallel>, #tpu.dimension_semantics<arbitrary>], iteration_bounds = array<i64: 2, 3>, scalar_prefetch = 0 : i64, scratch_operands = 0 : i64, tpu.core_type = #tpu.core_type<tc>, window_params = [{transform_indices = @transform_0, window_bounds = array<i64: 1, 128, 128>}, {pipeline_mode = #tpu.pipeline_mode<synchronous>, transform_indices = @transform_1, window_bounds = array<i64: 128, 128>}, {pipeline_mode = #tpu.pipeline_mode<synchronous>, transform_indices = @transform_2, window_bounds = array<i64: 1, 128>}, {transform_indices = @transform_3, window_bounds = array<i64: 1, 128, 128>}]} {
    %c0 = arith.constant 0 : index
    %c0_0 = arith.constant 0 : index
    %c0_1 = arith.constant 0 : index
    %0 = vector.load %arg2[%c0, %c0_0, %c0_1] : memref<1x128x128xbf16, #tpu.memory_space<vmem>>, vector<1x128x128xbf16>
    %1 = vector.shape_cast %0 : vector<1x128x128xbf16> to vector<128x128xbf16>
    %c0_2 = arith.constant 0 : index
    %c0_3 = arith.constant 0 : index
    %2 = vector.load %arg3[%c0_2, %c0_3] : memref<128x128xbf16, #tpu.memory_space<vmem>>, vector<128x128xbf16>
    %cst = arith.constant dense<0.000000e+00> : vector<128x128xf32>
    %3 = tpu.matmul %1, %2, %cst {dimension_numbers = #tpu.dot_dimension_numbers<[1], [0], [0], [1], [0, 0, 1, 1], [], []>} : vector<128x128xbf16>, vector<128x128xbf16>, vector<128x128xf32> -> vector<128x128xf32>
    %c0_4 = arith.constant 0 : index
    %c0_5 = arith.constant 0 : index
    %4 = vector.load %arg4[%c0_4, %c0_5] : memref<1x128xf32, #tpu.memory_space<vmem>>, vector<1x128xf32>
    %5 = vector.broadcast %4 : vector<1x128xf32> to vector<128x128xf32>
    %6 = arith.addf %3, %5 : vector<128x128xf32>
    %7 = math.absf %6 : vector<128x128xf32>
    %cst_6 = arith.constant 0.000000e+00 : f32
    %8 = vector.broadcast %cst_6 : f32 to vector<128x128xf32>
    %9 = arith.subf %8, %7 : vector<128x128xf32>
    %10 = math.exp %9 : vector<128x128xf32>
    %cst_7 = arith.constant 0.000000e+00 : f32
    %11 = vector.broadcast %cst_7 : f32 to vector<128x128xf32>
    %12 = arith.cmpf oge, %6, %11 : vector<128x128xf32>
    %cst_8 = arith.constant 1.000000e+00 : f32
    %13 = vector.broadcast %cst_8 : f32 to vector<128x128xf32>
    %14 = arith.select %12, %13, %10 : vector<128x128xi1>, vector<128x128xf32>
    %cst_9 = arith.constant 1.000000e+00 : f32
    %15 = vector.broadcast %cst_9 : f32 to vector<128x128xf32>
    %16 = arith.addf %15, %10 : vector<128x128xf32>
    %17 = tpu.reciprocal %16 {approx = true} : vector<128x128xf32> -> vector<128x128xf32>
    %18 = arith.mulf %14, %17 : vector<128x128xf32>
    %cst_10 = arith.constant 0.000000e+00 : f32
    %cst_11 = arith.constant 1.000000e+00 : f32
    %19 = vector.broadcast %cst_10 : f32 to vector<128x128xf32>
    %20 = arith.maximumf %19, %18 : vector<128x128xf32>
    %21 = vector.broadcast %cst_11 : f32 to vector<128x128xf32>
    %22 = arith.minimumf %21, %20 : vector<128x128xf32>
    %c0_12 = arith.constant 0 : index
    %c0_13 = arith.constant 0 : index
    %c0_14 = arith.constant 0 : index
    %23 = vector.load %arg5[%c0_12, %c0_13, %c0_14] : memref<1x128x128xf32, #tpu.memory_space<vmem>>, vector<1x128x128xf32>
    %24 = vector.shape_cast %23 : vector<1x128x128xf32> to vector<128x128xf32>
    %25 = vector.shape_cast %22 : vector<128x128xf32> to vector<1x128x128xf32>
    tpu.vector_store %arg5[%c0_12, %c0_13, %c0_14], %25 {strides = array<i32>} : memref<1x128x128xf32, #tpu.memory_space<vmem>>, vector<1x128x128xf32>,
    return
  }
  func.func @transform_0(%arg0: i32, %arg1: i32) -> (i32, i32, i32) {
    %c0_i32 = arith.constant 0 : i32
    %c0_i32_0 = arith.constant 0 : i32
    return %arg0, %arg1, %c0_i32 : i32, i32, i32
  }
  func.func @transform_1(%arg0: i32, %arg1: i32) -> (i32, i32) {
    %c0_i32 = arith.constant 0 : i32
    %c0_i32_0 = arith.constant 0 : i32
    %c0_i32_1 = arith.constant 0 : i32
    return %c0_i32, %c0_i32_0 : i32, i32
  }
  func.func @transform_2(%arg0: i32, %arg1: i32) -> (i32, i32) {
    %c0_i32 = arith.constant 0 : i32
    %c0_i32_0 = arith.constant 0 : i32
    %c0_i32_1 = arith.constant 0 : i32
    return %c0_i32, %c0_i32_0 : i32, i32
  }
  func.func @transform_3(%arg0: i32, %arg1: i32) -> (i32, i32, i32) {
    %c0_i32 = arith.constant 0 : i32
    %c0_i32_0 = arith.constant 0 : i32
    return %arg0, %arg1, %c0_i32 : i32, i32, i32
  }
}

</mosaic_0001>

<llo_original>
// kernel: _lambda_.12
$region0: #{_lambda_.12}
  #allocation0 [shape = 'u32[]', space=smem, size = 0x4, offset = 0x4, fixed_abs, tag = 'smem constant byte address 0x4 - core index']
  #allocation1 [shape = 'u32[144,128]{1,0:T(1,128)}', space=vmem, size = 0x12000, scoped, tag = 'internal scratch']
  %s0 = inlined_call_operand.vmem [shape: bf16[2,384,128], index: 0, kind: input, shape index: {}]
  %s1 = inlined_call_operand.vmem [shape: bf16[128,128], index: 1, kind: input, shape index: {}]
  %s2 = inlined_call_operand.vmem [shape: f32[1,128], index: 2, kind: input, shape index: {}]
  %s3 = inlined_call_operand.vmem [shape: bf16[2,384,128], index: 3, kind: output, shape index: {}]
  %s4 = sld [smem:[#allocation0]]
  $region45: #{_lambda_.12} parent=0
    _
  %s6 = ssub.s32 1, %s4
  %s7 = scalar_select 0, %s6, %s4
  loop: start=0, step=1, limit=8
  $region2: #{_lambda_.12} parent=0 // loop_pre_header
    _
  $region3: #{_lambda_.12} parent=0 // loop_header
    %s9 = sphi 0, %s13
    %p10 = scmp.ge.s32.totalorder %s9, 8
    %s16 = sphi 0, %s28
    %s17 = sphi 0, %s24
    %s18 = sphi 0, %s16
    %s19 = sphi 0, %s17
    %s20 = sphi 0, %s18
    %s21 = sphi 0, %s19
    %s33 = sphi 0, %s35
    %s36 = sphi 0, %s33
    %s37 = sphi 0, %s36
    %s53 = sphi 0, %s37
    %s57 = sphi 0, %s57
    %s59 = sphi 0, %s57
    %s60 = sphi 0, %s59
    %s74 = sphi 0, %s60
    %s78 = sphi 0, %s78
    %s80 = sphi 0, %s78
    %s81 = sphi 0, %s80
    %s95 = sphi 0, %s81
    %s103 = sphi 0, %s105
    %s106 = sphi 0, %s103
    %s107 = sphi 0, %s106
    %s123 = sphi 0, %s107
  $region4: #{_lambda_.12} parent=0 // loop_header_branch
    %12 = sbr.rel (%p10) target = $region8
  $region5: #{_lambda_.12} parent=0 // loop_body
    %s14 = ssub.s32 %s9, 1
    %s15 = ssub.s32 %s9, 2
    %s22 = sadd.s32 1, %s17
    %p23 = scmp.ge.s32.totalorder %s22, 3
    %s24 = scalar_select %p23, 0, %s22
    %s25 = sadd.s32 1, %s16
    %s26 = scalar_select %p23, %s25, %s16
    %p27 = scmp.ge.s32.totalorder %s26, 2
    %s28 = scalar_select %p27, 0, %s26
    %s29 = ssub.s32 %s16, %s28
    %s30 = ssub.s32 %s17, %s24
    %s31 = sor.u32 %s29, %s30
    %p32 = scmp.eq.s32.totalorder %s31, 0
    %s34 = sadd.s32 %s33, 1
    %s35 = scalar_select %p32, %s33, %s34
    %p38 = pneg %p32
    %p39 = scmp.eq.s32.totalorder %s9, 5
    %p40 = por %p38, %p39
    %p41 = scmp.ne.s32.totalorder %s33, %s36
    %p42 = scmp.eq.s32.totalorder %s9, 0
    %p43 = por %p41, %p42
    %p44 = scmp.ne.s32.totalorder %s33, %s36
    %p45 = scmp.eq.s32.totalorder %s14, 5
    %p46 = por %p44, %p45
    %p47 = scmp.ne.s32.totalorder %s36, %s37
    %p48 = scmp.eq.s32.totalorder %s14, 0
    %p49 = por %p47, %p48
    %p50 = scmp.ne.s32.totalorder %s36, %s37
    %p51 = scmp.eq.s32.totalorder %s15, 5
    %p52 = por %p50, %p51
    %p54 = scmp.ne.s32.totalorder %s37, %s53
    %p55 = scmp.eq.s32.totalorder %s15, 0
    %p56 = por %p54, %p55
    %s58 = sadd.s32 %s57, 1
    %p61 = scmp.eq.s32.totalorder %s9, 5
    %p62 = scmp.ne.s32.totalorder %s57, %s59
    %p63 = scmp.eq.s32.totalorder %s9, 0
    %p64 = por %p62, %p63
    %p65 = scmp.ne.s32.totalorder %s57, %s59
    %p66 = scmp.eq.s32.totalorder %s14, 5
    %p67 = por %p65, %p66
    %p68 = scmp.ne.s32.totalorder %s59, %s60
    %p69 = scmp.eq.s32.totalorder %s14, 0
    %p70 = por %p68, %p69
    %p71 = scmp.ne.s32.totalorder %s59, %s60
    %p72 = scmp.eq.s32.totalorder %s15, 5
    %p73 = por %p71, %p72
    %p75 = scmp.ne.s32.totalorder %s60, %s74
    %p76 = scmp.eq.s32.totalorder %s15, 0
    %p77 = por %p75, %p76
    %s79 = sadd.s32 %s78, 1
    %p82 = scmp.eq.s32.totalorder %s9, 5
    %p83 = scmp.ne.s32.totalorder %s78, %s80
    %p84 = scmp.eq.s32.totalorder %s9, 0
    %p85 = por %p83, %p84
    %p86 = scmp.ne.s32.totalorder %s78, %s80
    %p87 = scmp.eq.s32.totalorder %s14, 5
    %p88 = por %p86, %p87
    %p89 = scmp.ne.s32.totalorder %s80, %s81
    %p90 = scmp.eq.s32.totalorder %s14, 0
    %p91 = por %p89, %p90
    %p92 = scmp.ne.s32.totalorder %s80, %s81
    %p93 = scmp.eq.s32.totalorder %s15, 5
    %p94 = por %p92, %p93
    %p96 = scmp.ne.s32.totalorder %s81, %s95
    %p97 = scmp.eq.s32.totalorder %s15, 0
    %p98 = por %p96, %p97
    %s99 = ssub.s32 %s16, %s28
    %s100 = ssub.s32 %s17, %s24
    %s101 = sor.u32 %s99, %s100
    %p102 = scmp.eq.s32.totalorder %s101, 0
    %s104 = sadd.s32 %s103, 1
    %s105 = scalar_select %p102, %s103, %s104
    %p108 = pneg %p102
    %p109 = scmp.eq.s32.totalorder %s9, 5
    %p110 = por %p108, %p109
    %p111 = scmp.ne.s32.totalorder %s103, %s106
    %p112 = scmp.eq.s32.totalorder %s9, 0
    %p113 = por %p111, %p112
    %p114 = scmp.ne.s32.totalorder %s103, %s106
    %p115 = scmp.eq.s32.totalorder %s14, 5
    %p116 = por %p114, %p115
    %p117 = scmp.ne.s32.totalorder %s106, %s107
    %p118 = scmp.eq.s32.totalorder %s14, 0
    %p119 = por %p117, %p118
    %p120 = scmp.ne.s32.totalorder %s106, %s107
    %p121 = scmp.eq.s32.totalorder %s15, 5
    %p122 = por %p120, %p121
    %p124 = scmp.ne.s32.totalorder %s107, %s123
    %p125 = scmp.eq.s32.totalorder %s15, 0
    %p126 = por %p124, %p125
    %p127 = scmp.le.s32.totalorder 1, %s9
    %p128 = scmp.lt.s32.totalorder %s9, 7
    %p129 = pnand %p127, %p128
    %p130 = pneg %p129
    // Predicated region
    $region9: #{_lambda_.12} parent=5 // pred_check
      _
    $region10: #{_lambda_.12} parent=5 // pred_check_branch
      %132 = sbr.rel (%p129) target = $region12
    $region11: #{_lambda_.12} parent=5 // pred_region
      %s133 = ssub.s32 %s9, 1
      // Predicated region
      $region13: #{_lambda_.12} parent=11 // pred_check
        %p134 = pneg %p70
      $region14: #{_lambda_.12} parent=11 // pred_check_branch
        %136 = sbr.rel (%p134) target = $region16
      $region15: #{_lambda_.12} parent=11 // pred_region
        _
      $region16: #{_lambda_.12} parent=11 // pred_fallthru
        _
      // Predicated region
      $region17: #{_lambda_.12} parent=11 // pred_check
        %p137 = pneg %p91
      $region18: #{_lambda_.12} parent=11 // pred_check_branch
        %139 = sbr.rel (%p137) target = $region20
      $region19: #{_lambda_.12} parent=11 // pred_region
        _
      $region20: #{_lambda_.12} parent=11 // pred_fallthru
        _
    $region12: #{_lambda_.12} parent=5 // pred_fallthru
      _
    %p140 = scmp.lt.s32.totalorder %s9, 6
    // Predicated region
    $region21: #{_lambda_.12} parent=5 // pred_check
      %p141 = pneg %p140
    $region22: #{_lambda_.12} parent=5 // pred_check_branch
      %143 = sbr.rel (%p141) target = $region24
    $region23: #{_lambda_.12} parent=5 // pred_region
      // Predicated region
      $region25: #{_lambda_.12} parent=23 // pred_check
        %p144 = pneg %p43
      $region26: #{_lambda_.12} parent=23 // pred_check_branch
        %146 = sbr.rel (%p144) target = $region28
      $region27: #{_lambda_.12} parent=23 // pred_region
        %s147 = smul.u32 16, %s17
        %p148 = scmp.lt.s32.totalorder %s16, 1
        %s149 = scalar_select %p148, %s16, 1
        %p150 = scmp.lt.s32.totalorder %s147, 47
        %s151 = scalar_select %p150, %s147, 47
        %s152 = smul.addr %s149, 48
        %s153 = sadd.s32 %s151, %s152
        %s154 = smul.addr %s153, 4
        %s155 = scalar_lea.vmem %s0, %s154
        %s156 = smul.u32 16, %s17
      $region28: #{_lambda_.12} parent=23 // pred_fallthru
        _
    $region24: #{_lambda_.12} parent=5 // pred_fallthru
      _
    %p157 = scmp.le.s32.totalorder 1, %s9
    %p158 = scmp.lt.s32.totalorder %s9, 7
    %p159 = pnand %p157, %p158
    %p160 = pneg %p159
    // Predicated region
    $region29: #{_lambda_.12} parent=5 // pred_check
      _
    $region30: #{_lambda_.12} parent=5 // pred_check_branch
      %162 = sbr.rel (%p159) target = $region32
    $region31: #{_lambda_.12} parent=5 // pred_region
      %s163 = ssub.s32 %s9, 1
      %s164 = smul.u32 16, %s19
      %p165 = scmp.lt.s32.totalorder %s18, 1
      %s166 = scalar_select %p165, %s18, 1
      %p167 = scmp.lt.s32.totalorder %s164, 47
      %s168 = scalar_select %p167, %s164, 47
      %s169 = smul.addr %s166, 48
      %s170 = sadd.s32 %s168, %s169
      %s171 = smul.addr %s170, 4
      %s172 = scalar_lea.vmem %s0, %s171
      %p173 = pneg %p49
      %p174 = pneg %p46
      %p175 = pneg %p70
      %p176 = pneg %p67
      %p177 = pneg %p91
      %p178 = pneg %p88
      %p179 = pneg %p119
      %p180 = pneg %p116
      %s181 = smul.u32 16, %s19
      %p182 = scmp.lt.s32.totalorder %s18, 1
      %s183 = scalar_select %p182, %s18, 1
      %p184 = scmp.lt.s32.totalorder %s181, 47
      %s185 = scalar_select %p184, %s181, 47
      %s186 = smul.addr %s183, 48
      %s187 = sadd.s32 %s185, %s186
      %s188 = smul.addr %s187, 4
      %s189 = scalar_lea.vmem %s3, %s188
      %s190 = smul.u32 16, %s19
      %p191 = scmp.lt.s32.totalorder %s18, 1
      %s192 = scalar_select %p191, %s18, 1
      %p193 = scmp.lt.s32.totalorder %s190, 47
      %s194 = scalar_select %p193, %s190, 47
      %s195 = smul.addr %s192, 48
      %s196 = sadd.s32 %s194, %s195
      %s197 = smul.addr %s196, 4
      %s198 = scalar_lea.vmem %s0, %s197
      %s199 = smul.u32 16, %s19
      %s200 = smul.u32 16, %s19
      %p201 = scmp.lt.s32.totalorder %s18, 1
      %s202 = scalar_select %p201, %s18, 1
      %p203 = scmp.lt.s32.totalorder %s200, 47
      %s204 = scalar_select %p203, %s200, 47
      %s205 = smul.addr %s202, 48
      %s206 = sadd.s32 %s204, %s205
      %s207 = smul.addr %s206, 4
      %s208 = scalar_lea.vmem %s3, %s207
      %s209 = smul.u32 16, %s19
      %v211 = vld [vmem:[%s198] sm:$0xf]
      %v212 = vld [vmem:[%s198 + $0x4] sm:$0xf]
      %v213 = vld [vmem:[%s198 + $0x8] sm:$0xf]
      %v214 = vld [vmem:[%s198 + $0xc] sm:$0xf]
      %v215 = vld [vmem:[%s198 + $0x10] sm:$0xf]
      %v216 = vld [vmem:[%s198 + $0x14] sm:$0xf]
      %v217 = vld [vmem:[%s198 + $0x18] sm:$0xf]
      %v218 = vld [vmem:[%s198 + $0x1c] sm:$0xf]
      %v219 = vld [vmem:[%s198 + $0x20] sm:$0xf]
      %v220 = vld [vmem:[%s198 + $0x24] sm:$0xf]
      %v221 = vld [vmem:[%s198 + $0x28] sm:$0xf]
      %v222 = vld [vmem:[%s198 + $0x2c] sm:$0xf]
      %v223 = vld [vmem:[%s198 + $0x30] sm:$0xf]
      %v224 = vld [vmem:[%s198 + $0x34] sm:$0xf]
      %v225 = vld [vmem:[%s198 + $0x38] sm:$0xf]
      %v226 = vld [vmem:[%s198 + $0x3c] sm:$0xf]
      %v227 = vld [vmem:[%s1] sm:$0xf]
      %v228 = vld [vmem:[%s1 + $0x4] sm:$0xf]
      %v229 = vld [vmem:[%s1 + $0x8] sm:$0xf]
      %v230 = vld [vmem:[%s1 + $0xc] sm:$0xf]
      %v231 = vld [vmem:[%s1 + $0x10] sm:$0xf]
      %v232 = vld [vmem:[%s1 + $0x14] sm:$0xf]
      %v233 = vld [vmem:[%s1 + $0x18] sm:$0xf]
      %v234 = vld [vmem:[%s1 + $0x1c] sm:$0xf]
      %v235 = vld [vmem:[%s1 + $0x20] sm:$0xf]
      %v236 = vld [vmem:[%s1 + $0x24] sm:$0xf]
      %v237 = vld [vmem:[%s1 + $0x28] sm:$0xf]
      %v238 = vld [vmem:[%s1 + $0x2c] sm:$0xf]
      %v239 = vld [vmem:[%s1 + $0x30] sm:$0xf]
      %v240 = vld [vmem:[%s1 + $0x34] sm:$0xf]
      %v241 = vld [vmem:[%s1 + $0x38] sm:$0xf]
      %v242 = vld [vmem:[%s1 + $0x3c] sm:$0xf]
      %v243 = vld [vmem:[%s2] sm:$0x1]
      %v245 = vlaneseq
      %v246 = vshrl.u32 %v245, 7
      %v247 = vsub.s32 0, %v246
      %v248 = vrot.slane %v243, %v247
      %v266 = vunpack.c.l.b16 %v211
      %v267 = vunpack.c.l.b16 %v212
      %v268 = vunpack.c.l.b16 %v213
      %v269 = vunpack.c.l.b16 %v214
      %v270 = vunpack.c.l.b16 %v215
      %v271 = vunpack.c.l.b16 %v216
      %v272 = vunpack.c.l.b16 %v217
      %v273 = vunpack.c.l.b16 %v218
      %v274 = vunpack.c.l.b16 %v219
      %v275 = vunpack.c.l.b16 %v220
      %v276 = vunpack.c.l.b16 %v221
      %v277 = vunpack.c.l.b16 %v222
      %v278 = vunpack.c.l.b16 %v223
      %v279 = vunpack.c.l.b16 %v224
      %v280 = vunpack.c.l.b16 %v225
      %v281 = vunpack.c.l.b16 %v226
      %v282 = vpack.c.b16 %v267, %v266
      %v283 = vpack.c.b16 %v269, %v268
      %v284 = vpack.c.b16 %v271, %v270
      %v285 = vpack.c.b16 %v273, %v272
      %v286 = vpack.c.b16 %v275, %v274
      %v287 = vpack.c.b16 %v277, %v276
      %v288 = vpack.c.b16 %v279, %v278
      %v289 = vpack.c.b16 %v281, %v280
      %v314 = vunpack.c.l.b16 %v227
      %v315 = vunpack.c.l.b16 %v228
      %v316 = vunpack.c.l.b16 %v229
      %v317 = vunpack.c.l.b16 %v230
      %v318 = vunpack.c.l.b16 %v231
      %v319 = vunpack.c.l.b16 %v232
      %v320 = vunpack.c.l.b16 %v233
      %v321 = vunpack.c.l.b16 %v234
      %v322 = vunpack.c.l.b16 %v235
      %v323 = vunpack.c.l.b16 %v236
      %v324 = vunpack.c.l.b16 %v237
      %v325 = vunpack.c.l.b16 %v238
      %v326 = vunpack.c.l.b16 %v239
      %v327 = vunpack.c.l.b16 %v240
      %v328 = vunpack.c.l.b16 %v241
      %v329 = vunpack.c.l.b16 %v242
      %v330 = vpack.c.b16 %v315, %v314
      %v331 = vpack.c.b16 %v317, %v316
      %v332 = vpack.c.b16 %v319, %v318
      %v333 = vpack.c.b16 %v321, %v320
      %v334 = vpack.c.b16 %v323, %v322
      %v335 = vpack.c.b16 %v325, %v324
      %v336 = vpack.c.b16 %v327, %v326
      %v337 = vpack.c.b16 %v329, %v328
      %346 = vmatprep.subr.bf16.mxu0 0
      %347 = vmatpush1.bf16.msra.mxu0 %v330
      %348 = vmatprep.subr.bf16.mxu0 0
      %349 = vmatpush1.bf16.msra.mxu0 %v331
      %350 = vmatprep.subr.bf16.mxu0 0
      %351 = vmatpush1.bf16.msra.mxu0 %v332
      %352 = vmatprep.subr.bf16.mxu0 0
      %353 = vmatpush1.bf16.msra.mxu0 %v333
      %354 = vmatprep.subr.bf16.mxu0 0
      %355 = vmatpush1.bf16.msra.mxu0 %v334
      %356 = vmatprep.subr.bf16.mxu0 0
      %357 = vmatpush1.bf16.msra.mxu0 %v335
      %358 = vmatprep.subr.bf16.mxu0 0
      %359 = vmatpush1.bf16.msra.mxu0 %v336
      %360 = vmatprep.subr.bf16.mxu0 0
      %361 = vmatpush1.bf16.msra.mxu0 %v337
      %362 = vmatprep.subr.bf16.mxu0 0
      %363 = vmatpush1.bf16.msra.mxu0 0
      %364 = vmatprep.subr.bf16.mxu0 0
      %365 = vmatpush1.bf16.msra.mxu0 0
      %366 = vmatprep.subr.bf16.mxu0 0
      %367 = vmatpush1.bf16.msra.mxu0 0
      %368 = vmatprep.subr.bf16.mxu0 0
      %369 = vmatpush1.bf16.msra.mxu0 0
      %370 = vmatprep.subr.bf16.mxu0 0
      %371 = vmatpush1.bf16.msra.mxu0 0
      %372 = vmatprep.subr.bf16.mxu0 0
      %373 = vmatpush1.bf16.msra.mxu0 0
      %374 = vmatprep.subr.bf16.mxu0 0
      %375 = vmatpush1.bf16.msra.mxu0 0
      %376 = vmatprep.subr.bf16.mxu0 0
      %377 = vmatpush1.bf16.msra.mxu0 0
      %378 = vmatprep.mubr.bf16.mxu0 0
      %379 = vmatmul.mubr.bf16.gmra.mrb[0].mxu0 %v282
      %v380 = vpop.f32.mrb[0].mxu0
      %v381 = vadd.f32 %v248, %v380
      %v382 = vpop.f32.mrb[0].mxu0
      %v383 = vpop.f32.mrb[0].mxu0
      %v384 = vadd.f32 %v248, %v383
      %v385 = vpop.f32.mrb[0].mxu0
      %386 = vmatprep.mubr.bf16.mxu0 0
      %387 = vmatmul.mubr.bf16.gmra.mrb[0].mxu0 %v283
      %v388 = vpop.f32.mrb[0].mxu0
      %v389 = vadd.f32 %v248, %v388
      %v390 = vpop.f32.mrb[0].mxu0
      %v391 = vpop.f32.mrb[0].mxu0
      %v392 = vadd.f32 %v248, %v391
      %v393 = vpop.f32.mrb[0].mxu0
      %394 = vmatprep.mubr.bf16.mxu0 0
      %395 = vmatmul.mubr.bf16.gmra.mrb[0].mxu0 %v284
      %v396 = vpop.f32.mrb[0].mxu0
      %v397 = vadd.f32 %v248, %v396
      %v398 = vpop.f32.mrb[0].mxu0
      %v399 = vpop.f32.mrb[0].mxu0
      %v400 = vadd.f32 %v248, %v399
      %v401 = vpop.f32.mrb[0].mxu0
      %402 = vmatprep.mubr.bf16.mxu0 0
      %403 = vmatmul.mubr.bf16.gmra.mrb[0].mxu0 %v285
      %v404 = vpop.f32.mrb[0].mxu0
      %v405 = vadd.f32 %v248, %v404
      %v406 = vpop.f32.mrb[0].mxu0
      %v407 = vpop.f32.mrb[0].mxu0
      %v408 = vadd.f32 %v248, %v407
      %v409 = vpop.f32.mrb[0].mxu0
      %410 = vmatprep.mubr.bf16.mxu0 0
      %411 = vmatmul.mubr.bf16.gmra.mrb[0].mxu0 %v286
      %v412 = vpop.f32.mrb[0].mxu0
      %v413 = vadd.f32 %v248, %v412
      %v414 = vpop.f32.mrb[0].mxu0
      %v415 = vpop.f32.mrb[0].mxu0
      %v416 = vadd.f32 %v248, %v415
      %v417 = vpop.f32.mrb[0].mxu0
      %418 = vmatprep.mubr.bf16.mxu0 0
      %419 = vmatmul.mubr.bf16.gmra.mrb[0].mxu0 %v287
      %v420 = vpop.f32.mrb[0].mxu0
      %v421 = vadd.f32 %v248, %v420
      %v422 = vpop.f32.mrb[0].mxu0
      %v423 = vpop.f32.mrb[0].mxu0
      %v424 = vadd.f32 %v248, %v423
      %v425 = vpop.f32.mrb[0].mxu0
      %426 = vmatprep.mubr.bf16.mxu0 0
      %427 = vmatmul.mubr.bf16.gmra.mrb[0].mxu0 %v288
      %v428 = vpop.f32.mrb[0].mxu0
      %v429 = vadd.f32 %v248, %v428
      %v430 = vpop.f32.mrb[0].mxu0
      %v431 = vpop.f32.mrb[0].mxu0
      %v432 = vadd.f32 %v248, %v431
      %v433 = vpop.f32.mrb[0].mxu0
      %434 = vmatprep.mubr.bf16.mxu0 0
      %435 = vmatmul.mubr.bf16.gmra.mrb[0].mxu0 %v289
      %v436 = vpop.f32.mrb[0].mxu0
      %v437 = vadd.f32 %v248, %v436
      %v438 = vpop.f32.mrb[0].mxu0
      %v439 = vpop.f32.mrb[0].mxu0
      %v440 = vadd.f32 %v248, %v439
      %v441 = vpop.f32.mrb[0].mxu0
      %442 = vdwg.mxu0
      %v443 = vpack.c.bf16 %v384, %v381
      %v444 = vpack.c.bf16 %v392, %v389
      %v445 = vpack.c.bf16 %v400, %v397
      %v446 = vpack.c.bf16 %v408, %v405
      %v447 = vpack.c.bf16 %v416, %v413
      %v448 = vpack.c.bf16 %v424, %v421
      %v449 = vpack.c.bf16 %v432, %v429
      %v450 = vpack.c.bf16 %v440, %v437
      %v459 = vunpack.c.l.b16 %v443
      %v460 = vunpack.c.h.b16 %v443
      %v461 = vunpack.c.l.b16 %v444
      %v462 = vunpack.c.h.b16 %v444
      %v463 = vunpack.c.l.b16 %v445
      %v464 = vunpack.c.h.b16 %v445
      %v465 = vunpack.c.l.b16 %v446
      %v466 = vunpack.c.h.b16 %v446
      %v467 = vunpack.c.l.b16 %v447
      %v468 = vunpack.c.h.b16 %v447
      %v469 = vunpack.c.l.b16 %v448
      %v470 = vunpack.c.h.b16 %v448
      %v471 = vunpack.c.l.b16 %v449
      %v472 = vunpack.c.h.b16 %v449
      %v473 = vunpack.c.l.b16 %v450
      %v474 = vunpack.c.h.b16 %v450
      %v475 = vpack.c.b16 %v459, %v459
      %v476 = vpack.c.b16 %v460, %v460
      %v477 = vpack.c.b16 %v461, %v461
      %v478 = vpack.c.b16 %v462, %v462
      %v479 = vpack.c.b16 %v463, %v463
      %v480 = vpack.c.b16 %v464, %v464
      %v481 = vpack.c.b16 %v465, %v465
      %v482 = vpack.c.b16 %v466, %v466
      %v483 = vpack.c.b16 %v467, %v467
      %v484 = vpack.c.b16 %v468, %v468
      %v485 = vpack.c.b16 %v469, %v469
      %v486 = vpack.c.b16 %v470, %v470
      %v487 = vpack.c.b16 %v471, %v471
      %v488 = vpack.c.b16 %v472, %v472
      %v489 = vpack.c.b16 %v473, %v473
      %v490 = vpack.c.b16 %v474, %v474
      %507 = vst [vmem:[%s208] sm:$0xf] %v475
      %508 = vst [vmem:[%s208 + $0x4] sm:$0xf] %v476
      %509 = vst [vmem:[%s208 + $0x8] sm:$0xf] %v477
      %510 = vst [vmem:[%s208 + $0xc] sm:$0xf] %v478
      %511 = vst [vmem:[%s208 + $0x10] sm:$0xf] %v479
      %512 = vst [vmem:[%s208 + $0x14] sm:$0xf] %v480
      %513 = vst [vmem:[%s208 + $0x18] sm:$0xf] %v481
      %514 = vst [vmem:[%s208 + $0x1c] sm:$0xf] %v482
      %515 = vst [vmem:[%s208 + $0x20] sm:$0xf] %v483
      %516 = vst [vmem:[%s208 + $0x24] sm:$0xf] %v484
      %517 = vst [vmem:[%s208 + $0x28] sm:$0xf] %v485
      %518 = vst [vmem:[%s208 + $0x2c] sm:$0xf] %v486
      %519 = vst [vmem:[%s208 + $0x30] sm:$0xf] %v487
      %520 = vst [vmem:[%s208 + $0x34] sm:$0xf] %v488
      %521 = vst [vmem:[%s208 + $0x38] sm:$0xf] %v489
      %522 = vst [vmem:[%s208 + $0x3c] sm:$0xf] %v490
      %s523 = smul.u32 16, %s19
      %p524 = scmp.lt.s32.totalorder %s18, 1
      %s525 = scalar_select %p524, %s18, 1
      %p526 = scmp.lt.s32.totalorder %s523, 47
      %s527 = scalar_select %p526, %s523, 47
      %s528 = smul.addr %s525, 48
      %s529 = sadd.s32 %s527, %s528
      %s530 = smul.addr %s529, 4
      %s531 = scalar_lea.vmem %s3, %s530
      // Predicated region
      $region33: #{_lambda_.12} parent=31 // pred_check
        %p532 = pneg %p116
      $region34: #{_lambda_.12} parent=31 // pred_check_branch
        %534 = sbr.rel (%p532) target = $region36
      $region35: #{_lambda_.12} parent=31 // pred_region
        %s535 = smul.u32 16, %s19
      $region36: #{_lambda_.12} parent=31 // pred_fallthru
        _
    $region32: #{_lambda_.12} parent=5 // pred_fallthru
      _
    %p536 = scmp.le.s32.totalorder 2, %s9
    // Predicated region
    $region37: #{_lambda_.12} parent=5 // pred_check
      %p537 = pneg %p536
    $region38: #{_lambda_.12} parent=5 // pred_check_branch
      %539 = sbr.rel (%p537) target = $region40
    $region39: #{_lambda_.12} parent=5 // pred_region
      %s540 = ssub.s32 %s9, 2
      // Predicated region
      $region41: #{_lambda_.12} parent=39 // pred_check
        %p541 = pneg %p122
      $region42: #{_lambda_.12} parent=39 // pred_check_branch
        %543 = sbr.rel (%p541) target = $region44
      $region43: #{_lambda_.12} parent=39 // pred_region
        %s544 = smul.u32 16, %s21
        %p545 = scmp.lt.s32.totalorder %s20, 1
        %s546 = scalar_select %p545, %s20, 1
        %p547 = scmp.lt.s32.totalorder %s544, 47
        %s548 = scalar_select %p547, %s544, 47
        %s549 = smul.addr %s546, 48
        %s550 = sadd.s32 %s548, %s549
        %s551 = smul.addr %s550, 4
        %s552 = scalar_lea.vmem %s3, %s551
      $region44: #{_lambda_.12} parent=39 // pred_fallthru
        _
    $region40: #{_lambda_.12} parent=5 // pred_fallthru
      _
  $region6: #{_lambda_.12} parent=0 // loop_footer
    %s13 = sadd.s32 1, %s9
  $region7: #{_lambda_.12} parent=0 // loop_footer_branch
    %8 = sbr.rel target = $region3
  $region8: #{_lambda_.12} parent=0 // loop_exit
    _

// kernel: _lambda_.13
$region0: #{_lambda_.13}
  #allocation0 [shape = 'u32[]', space=smem, size = 0x4, offset = 0x4, fixed_abs, tag = 'smem constant byte address 0x4 - core index']
  #allocation1 [shape = 'u32[144,128]{1,0:T(1,128)}', space=vmem, size = 0x12000, scoped, tag = 'internal scratch']
  %s0 = inlined_call_operand.vmem [shape: bf16[2,384,128], index: 0, kind: input, shape index: {}]
  %s1 = inlined_call_operand.vmem [shape: bf16[128,128], index: 1, kind: input, shape index: {}]
  %s2 = inlined_call_operand.vmem [shape: f32[1,128], index: 2, kind: input, shape index: {}]
  %s3 = inlined_call_operand.vmem [shape: bf16[2,384,128], index: 3, kind: output, shape index: {}]
  %s4 = sld [smem:[#allocation0]]
  $region45: #{_lambda_.13} parent=0
    _
  %s6 = ssub.s32 1, %s4
  %s7 = scalar_select 0, %s6, %s4
  loop: start=0, step=1, limit=8
  $region2: #{_lambda_.13} parent=0 // loop_pre_header
    _
  $region3: #{_lambda_.13} parent=0 // loop_header
    %s9 = sphi 0, %s13
    %p10 = scmp.ge.s32.totalorder %s9, 8
    %s16 = sphi 0, %s28
    %s17 = sphi 0, %s24
    %s18 = sphi 0, %s16
    %s19 = sphi 0, %s17
    %s20 = sphi 0, %s18
    %s21 = sphi 0, %s19
    %s33 = sphi 0, %s35
    %s36 = sphi 0, %s33
    %s37 = sphi 0, %s36
    %s53 = sphi 0, %s37
    %s57 = sphi 0, %s57
    %s59 = sphi 0, %s57
    %s60 = sphi 0, %s59
    %s74 = sphi 0, %s60
    %s78 = sphi 0, %s78
    %s80 = sphi 0, %s78
    %s81 = sphi 0, %s80
    %s95 = sphi 0, %s81
    %s103 = sphi 0, %s105
    %s106 = sphi 0, %s103
    %s107 = sphi 0, %s106
    %s123 = sphi 0, %s107
  $region4: #{_lambda_.13} parent=0 // loop_header_branch
    %12 = sbr.rel (%p10) target = $region8
  $region5: #{_lambda_.13} parent=0 // loop_body
    %s14 = ssub.s32 %s9, 1
    %s15 = ssub.s32 %s9, 2
    %s22 = sadd.s32 1, %s17
    %p23 = scmp.ge.s32.totalorder %s22, 3
    %s24 = scalar_select %p23, 0, %s22
    %s25 = sadd.s32 1, %s16
    %s26 = scalar_select %p23, %s25, %s16
    %p27 = scmp.ge.s32.totalorder %s26, 2
    %s28 = scalar_select %p27, 0, %s26
    %s29 = ssub.s32 %s16, %s28
    %s30 = ssub.s32 %s17, %s24
    %s31 = sor.u32 %s29, %s30
    %p32 = scmp.eq.s32.totalorder %s31, 0
    %s34 = sadd.s32 %s33, 1
    %s35 = scalar_select %p32, %s33, %s34
    %p38 = pneg %p32
    %p39 = scmp.eq.s32.totalorder %s9, 5
    %p40 = por %p38, %p39
    %p41 = scmp.ne.s32.totalorder %s33, %s36
    %p42 = scmp.eq.s32.totalorder %s9, 0
    %p43 = por %p41, %p42
    %p44 = scmp.ne.s32.totalorder %s33, %s36
    %p45 = scmp.eq.s32.totalorder %s14, 5
    %p46 = por %p44, %p45
    %p47 = scmp.ne.s32.totalorder %s36, %s37
    %p48 = scmp.eq.s32.totalorder %s14, 0
    %p49 = por %p47, %p48
    %p50 = scmp.ne.s32.totalorder %s36, %s37
    %p51 = scmp.eq.s32.totalorder %s15, 5
    %p52 = por %p50, %p51
    %p54 = scmp.ne.s32.totalorder %s37, %s53
    %p55 = scmp.eq.s32.totalorder %s15, 0
    %p56 = por %p54, %p55
    %s58 = sadd.s32 %s57, 1
    %p61 = scmp.eq.s32.totalorder %s9, 5
    %p62 = scmp.ne.s32.totalorder %s57, %s59
    %p63 = scmp.eq.s32.totalorder %s9, 0
    %p64 = por %p62, %p63
    %p65 = scmp.ne.s32.totalorder %s57, %s59
    %p66 = scmp.eq.s32.totalorder %s14, 5
    %p67 = por %p65, %p66
    %p68 = scmp.ne.s32.totalorder %s59, %s60
    %p69 = scmp.eq.s32.totalorder %s14, 0
    %p70 = por %p68, %p69
    %p71 = scmp.ne.s32.totalorder %s59, %s60
    %p72 = scmp.eq.s32.totalorder %s15, 5
    %p73 = por %p71, %p72
    %p75 = scmp.ne.s32.totalorder %s60, %s74
    %p76 = scmp.eq.s32.totalorder %s15, 0
    %p77 = por %p75, %p76
    %s79 = sadd.s32 %s78, 1
    %p82 = scmp.eq.s32.totalorder %s9, 5
    %p83 = scmp.ne.s32.totalorder %s78, %s80
    %p84 = scmp.eq.s32.totalorder %s9, 0
    %p85 = por %p83, %p84
    %p86 = scmp.ne.s32.totalorder %s78, %s80
    %p87 = scmp.eq.s32.totalorder %s14, 5
    %p88 = por %p86, %p87
    %p89 = scmp.ne.s32.totalorder %s80, %s81
    %p90 = scmp.eq.s32.totalorder %s14, 0
    %p91 = por %p89, %p90
    %p92 = scmp.ne.s32.totalorder %s80, %s81
    %p93 = scmp.eq.s32.totalorder %s15, 5
    %p94 = por %p92, %p93
    %p96 = scmp.ne.s32.totalorder %s81, %s95
    %p97 = scmp.eq.s32.totalorder %s15, 0
    %p98 = por %p96, %p97
    %s99 = ssub.s32 %s16, %s28
    %s100 = ssub.s32 %s17, %s24
    %s101 = sor.u32 %s99, %s100
    %p102 = scmp.eq.s32.totalorder %s101, 0
    %s104 = sadd.s32 %s103, 1
    %s105 = scalar_select %p102, %s103, %s104
    %p108 = pneg %p102
    %p109 = scmp.eq.s32.totalorder %s9, 5
    %p110 = por %p108, %p109
    %p111 = scmp.ne.s32.totalorder %s103, %s106
    %p112 = scmp.eq.s32.totalorder %s9, 0
    %p113 = por %p111, %p112
    %p114 = scmp.ne.s32.totalorder %s103, %s106
    %p115 = scmp.eq.s32.totalorder %s14, 5
    %p116 = por %p114, %p115
    %p117 = scmp.ne.s32.totalorder %s106, %s107
    %p118 = scmp.eq.s32.totalorder %s14, 0
    %p119 = por %p117, %p118
    %p120 = scmp.ne.s32.totalorder %s106, %s107
    %p121 = scmp.eq.s32.totalorder %s15, 5
    %p122 = por %p120, %p121
    %p124 = scmp.ne.s32.totalorder %s107, %s123
    %p125 = scmp.eq.s32.totalorder %s15, 0
    %p126 = por %p124, %p125
    %p127 = scmp.le.s32.totalorder 1, %s9
    %p128 = scmp.lt.s32.totalorder %s9, 7
    %p129 = pnand %p127, %p128
    %p130 = pneg %p129
    // Predicated region
    $region9: #{_lambda_.13} parent=5 // pred_check
      _
    $region10: #{_lambda_.13} parent=5 // pred_check_branch
      %132 = sbr.rel (%p129) target = $region12
    $region11: #{_lambda_.13} parent=5 // pred_region
      %s133 = ssub.s32 %s9, 1
      // Predicated region
      $region13: #{_lambda_.13} parent=11 // pred_check
        %p134 = pneg %p70
      $region14: #{_lambda_.13} parent=11 // pred_check_branch
        %136 = sbr.rel (%p134) target = $region16
      $region15: #{_lambda_.13} parent=11 // pred_region
        _
      $region16: #{_lambda_.13} parent=11 // pred_fallthru
        _
      // Predicated region
      $region17: #{_lambda_.13} parent=11 // pred_check
        %p137 = pneg %p91
      $region18: #{_lambda_.13} parent=11 // pred_check_branch
        %139 = sbr.rel (%p137) target = $region20
      $region19: #{_lambda_.13} parent=11 // pred_region
        _
      $region20: #{_lambda_.13} parent=11 // pred_fallthru
        _
    $region12: #{_lambda_.13} parent=5 // pred_fallthru
      _
    %p140 = scmp.lt.s32.totalorder %s9, 6
    // Predicated region
    $region21: #{_lambda_.13} parent=5 // pred_check
      %p141 = pneg %p140
    $region22: #{_lambda_.13} parent=5 // pred_check_branch
      %143 = sbr.rel (%p141) target = $region24
    $region23: #{_lambda_.13} parent=5 // pred_region
      // Predicated region
      $region25: #{_lambda_.13} parent=23 // pred_check
        %p144 = pneg %p43
      $region26: #{_lambda_.13} parent=23 // pred_check_branch
        %146 = sbr.rel (%p144) target = $region28
      $region27: #{_lambda_.13} parent=23 // pred_region
        %s147 = smul.u32 16, %s17
        %p148 = scmp.lt.s32.totalorder %s16, 1
        %s149 = scalar_select %p148, %s16, 1
        %p150 = scmp.lt.s32.totalorder %s147, 47
        %s151 = scalar_select %p150, %s147, 47
        %s152 = smul.addr %s149, 48
        %s153 = sadd.s32 %s151, %s152
        %s154 = smul.addr %s153, 4
        %s155 = scalar_lea.vmem %s0, %s154
        %s156 = smul.u32 16, %s17
      $region28: #{_lambda_.13} parent=23 // pred_fallthru
        _
    $region24: #{_lambda_.13} parent=5 // pred_fallthru
      _
    %p157 = scmp.le.s32.totalorder 1, %s9
    %p158 = scmp.lt.s32.totalorder %s9, 7
    %p159 = pnand %p157, %p158
    %p160 = pneg %p159
    // Predicated region
    $region29: #{_lambda_.13} parent=5 // pred_check
      _
    $region30: #{_lambda_.13} parent=5 // pred_check_branch
      %162 = sbr.rel (%p159) target = $region32
    $region31: #{_lambda_.13} parent=5 // pred_region
      %s163 = ssub.s32 %s9, 1
      %s164 = smul.u32 16, %s19
      %p165 = scmp.lt.s32.totalorder %s18, 1
      %s166 = scalar_select %p165, %s18, 1
      %p167 = scmp.lt.s32.totalorder %s164, 47
      %s168 = scalar_select %p167, %s164, 47
      %s169 = smul.addr %s166, 48
      %s170 = sadd.s32 %s168, %s169
      %s171 = smul.addr %s170, 4
      %s172 = scalar_lea.vmem %s0, %s171
      %p173 = pneg %p49
      %p174 = pneg %p46
      %p175 = pneg %p70
      %p176 = pneg %p67
      %p177 = pneg %p91
      %p178 = pneg %p88
      %p179 = pneg %p119
      %p180 = pneg %p116
      %s181 = smul.u32 16, %s19
      %p182 = scmp.lt.s32.totalorder %s18, 1
      %s183 = scalar_select %p182, %s18, 1
      %p184 = scmp.lt.s32.totalorder %s181, 47
      %s185 = scalar_select %p184, %s181, 47
      %s186 = smul.addr %s183, 48
      %s187 = sadd.s32 %s185, %s186
      %s188 = smul.addr %s187, 4
      %s189 = scalar_lea.vmem %s3, %s188
      %s190 = smul.u32 16, %s19
      %p191 = scmp.lt.s32.totalorder %s18, 1
      %s192 = scalar_select %p191, %s18, 1
      %p193 = scmp.lt.s32.totalorder %s190, 47
      %s194 = scalar_select %p193, %s190, 47
      %s195 = smul.addr %s192, 48
      %s196 = sadd.s32 %s194, %s195
      %s197 = smul.addr %s196, 4
      %s198 = scalar_lea.vmem %s0, %s197
      %s199 = smul.u32 16, %s19
      %s200 = smul.u32 16, %s19
      %p201 = scmp.lt.s32.totalorder %s18, 1
      %s202 = scalar_select %p201, %s18, 1
      %p203 = scmp.lt.s32.totalorder %s200, 47
      %s204 = scalar_select %p203, %s200, 47
      %s205 = smul.addr %s202, 48
      %s206 = sadd.s32 %s204, %s205
      %s207 = smul.addr %s206, 4
      %s208 = scalar_lea.vmem %s3, %s207
      %s209 = smul.u32 16, %s19
      %v211 = vld [vmem:[%s198] sm:$0xf]
      %v212 = vld [vmem:[%s198 + $0x4] sm:$0xf]
      %v213 = vld [vmem:[%s198 + $0x8] sm:$0xf]
      %v214 = vld [vmem:[%s198 + $0xc] sm:$0xf]
      %v215 = vld [vmem:[%s198 + $0x10] sm:$0xf]
      %v216 = vld [vmem:[%s198 + $0x14] sm:$0xf]
      %v217 = vld [vmem:[%s198 + $0x18] sm:$0xf]
      %v218 = vld [vmem:[%s198 + $0x1c] sm:$0xf]
      %v219 = vld [vmem:[%s198 + $0x20] sm:$0xf]
      %v220 = vld [vmem:[%s198 + $0x24] sm:$0xf]
      %v221 = vld [vmem:[%s198 + $0x28] sm:$0xf]
      %v222 = vld [vmem:[%s198 + $0x2c] sm:$0xf]
      %v223 = vld [vmem:[%s198 + $0x30] sm:$0xf]
      %v224 = vld [vmem:[%s198 + $0x34] sm:$0xf]
      %v225 = vld [vmem:[%s198 + $0x38] sm:$0xf]
      %v226 = vld [vmem:[%s198 + $0x3c] sm:$0xf]
      %v227 = vld [vmem:[%s1] sm:$0xf]
      %v228 = vld [vmem:[%s1 + $0x4] sm:$0xf]
      %v229 = vld [vmem:[%s1 + $0x8] sm:$0xf]
      %v230 = vld [vmem:[%s1 + $0xc] sm:$0xf]
      %v231 = vld [vmem:[%s1 + $0x10] sm:$0xf]
      %v232 = vld [vmem:[%s1 + $0x14] sm:$0xf]
      %v233 = vld [vmem:[%s1 + $0x18] sm:$0xf]
      %v234 = vld [vmem:[%s1 + $0x1c] sm:$0xf]
      %v235 = vld [vmem:[%s1 + $0x20] sm:$0xf]
      %v236 = vld [vmem:[%s1 + $0x24] sm:$0xf]
      %v237 = vld [vmem:[%s1 + $0x28] sm:$0xf]
      %v238 = vld [vmem:[%s1 + $0x2c] sm:$0xf]
      %v239 = vld [vmem:[%s1 + $0x30] sm:$0xf]
      %v240 = vld [vmem:[%s1 + $0x34] sm:$0xf]
      %v241 = vld [vmem:[%s1 + $0x38] sm:$0xf]
      %v242 = vld [vmem:[%s1 + $0x3c] sm:$0xf]
      %v243 = vld [vmem:[%s2] sm:$0x1]
      %v245 = vlaneseq
      %v246 = vshrl.u32 %v245, 7
      %v247 = vsub.s32 0, %v246
      %v248 = vrot.slane %v243, %v247
      %v266 = vunpack.c.l.b16 %v211
      %v267 = vunpack.c.l.b16 %v212
      %v268 = vunpack.c.l.b16 %v213
      %v269 = vunpack.c.l.b16 %v214
      %v270 = vunpack.c.l.b16 %v215
      %v271 = vunpack.c.l.b16 %v216
      %v272 = vunpack.c.l.b16 %v217
      %v273 = vunpack.c.l.b16 %v218
      %v274 = vunpack.c.l.b16 %v219
      %v275 = vunpack.c.l.b16 %v220
      %v276 = vunpack.c.l.b16 %v221
      %v277 = vunpack.c.l.b16 %v222
      %v278 = vunpack.c.l.b16 %v223
      %v279 = vunpack.c.l.b16 %v224
      %v280 = vunpack.c.l.b16 %v225
      %v281 = vunpack.c.l.b16 %v226
      %v282 = vpack.c.b16 %v267, %v266
      %v283 = vpack.c.b16 %v269, %v268
      %v284 = vpack.c.b16 %v271, %v270
      %v285 = vpack.c.b16 %v273, %v272
      %v286 = vpack.c.b16 %v275, %v274
      %v287 = vpack.c.b16 %v277, %v276
      %v288 = vpack.c.b16 %v279, %v278
      %v289 = vpack.c.b16 %v281, %v280
      %v314 = vunpack.c.l.b16 %v227
      %v315 = vunpack.c.l.b16 %v228
      %v316 = vunpack.c.l.b16 %v229
      %v317 = vunpack.c.l.b16 %v230
      %v318 = vunpack.c.l.b16 %v231
      %v319 = vunpack.c.l.b16 %v232
      %v320 = vunpack.c.l.b16 %v233
      %v321 = vunpack.c.l.b16 %v234
      %v322 = vunpack.c.l.b16 %v235
      %v323 = vunpack.c.l.b16 %v236
      %v324 = vunpack.c.l.b16 %v237
      %v325 = vunpack.c.l.b16 %v238
      %v326 = vunpack.c.l.b16 %v239
      %v327 = vunpack.c.l.b16 %v240
      %v328 = vunpack.c.l.b16 %v241
      %v329 = vunpack.c.l.b16 %v242
      %v330 = vpack.c.b16 %v315, %v314
      %v331 = vpack.c.b16 %v317, %v316
      %v332 = vpack.c.b16 %v319, %v318
      %v333 = vpack.c.b16 %v321, %v320
      %v334 = vpack.c.b16 %v323, %v322
      %v335 = vpack.c.b16 %v325, %v324
      %v336 = vpack.c.b16 %v327, %v326
      %v337 = vpack.c.b16 %v329, %v328
      %346 = vmatprep.subr.bf16.mxu0 0
      %347 = vmatpush1.bf16.msra.mxu0 %v330
      %348 = vmatprep.subr.bf16.mxu0 0
      %349 = vmatpush1.bf16.msra.mxu0 %v331
      %350 = vmatprep.subr.bf16.mxu0 0
      %351 = vmatpush1.bf16.msra.mxu0 %v332
      %352 = vmatprep.subr.bf16.mxu0 0
      %353 = vmatpush1.bf16.msra.mxu0 %v333
      %354 = vmatprep.subr.bf16.mxu0 0
      %355 = vmatpush1.bf16.msra.mxu0 %v334
      %356 = vmatprep.subr.bf16.mxu0 0
      %357 = vmatpush1.bf16.msra.mxu0 %v335
      %358 = vmatprep.subr.bf16.mxu0 0
      %359 = vmatpush1.bf16.msra.mxu0 %v336
      %360 = vmatprep.subr.bf16.mxu0 0
      %361 = vmatpush1.bf16.msra.mxu0 %v337
      %362 = vmatprep.subr.bf16.mxu0 0
      %363 = vmatpush1.bf16.msra.mxu0 0
      %364 = vmatprep.subr.bf16.mxu0 0
      %365 = vmatpush1.bf16.msra.mxu0 0
      %366 = vmatprep.subr.bf16.mxu0 0
      %367 = vmatpush1.bf16.msra.mxu0 0
      %368 = vmatprep.subr.bf16.mxu0 0
      %369 = vmatpush1.bf16.msra.mxu0 0
      %370 = vmatprep.subr.bf16.mxu0 0
      %371 = vmatpush1.bf16.msra.mxu0 0
      %372 = vmatprep.subr.bf16.mxu0 0
      %373 = vmatpush1.bf16.msra.mxu0 0
      %374 = vmatprep.subr.bf16.mxu0 0
      %375 = vmatpush1.bf16.msra.mxu0 0
      %376 = vmatprep.subr.bf16.mxu0 0
      %377 = vmatpush1.bf16.msra.mxu0 0
      %378 = vmatprep.mubr.bf16.mxu0 0
      %379 = vmatmul.mubr.bf16.gmra.mrb[0].mxu0 %v282
      %v380 = vpop.f32.mrb[0].mxu0
      %v381 = vadd.f32 %v248, %v380
      %v382 = vpop.f32.mrb[0].mxu0
      %v383 = vpop.f32.mrb[0].mxu0
      %v384 = vadd.f32 %v248, %v383
      %v385 = vpop.f32.mrb[0].mxu0
      %386 = vmatprep.mubr.bf16.mxu0 0
      %387 = vmatmul.mubr.bf16.gmra.mrb[0].mxu0 %v283
      %v388 = vpop.f32.mrb[0].mxu0
      %v389 = vadd.f32 %v248, %v388
      %v390 = vpop.f32.mrb[0].mxu0
      %v391 = vpop.f32.mrb[0].mxu0
      %v392 = vadd.f32 %v248, %v391
      %v393 = vpop.f32.mrb[0].mxu0
      %394 = vmatprep.mubr.bf16.mxu0 0
      %395 = vmatmul.mubr.bf16.gmra.mrb[0].mxu0 %v284
      %v396 = vpop.f32.mrb[0].mxu0
      %v397 = vadd.f32 %v248, %v396
      %v398 = vpop.f32.mrb[0].mxu0
      %v399 = vpop.f32.mrb[0].mxu0
      %v400 = vadd.f32 %v248, %v399
      %v401 = vpop.f32.mrb[0].mxu0
      %402 = vmatprep.mubr.bf16.mxu0 0
      %403 = vmatmul.mubr.bf16.gmra.mrb[0].mxu0 %v285
      %v404 = vpop.f32.mrb[0].mxu0
      %v405 = vadd.f32 %v248, %v404
      %v406 = vpop.f32.mrb[0].mxu0
      %v407 = vpop.f32.mrb[0].mxu0
      %v408 = vadd.f32 %v248, %v407
      %v409 = vpop.f32.mrb[0].mxu0
      %410 = vmatprep.mubr.bf16.mxu0 0
      %411 = vmatmul.mubr.bf16.gmra.mrb[0].mxu0 %v286
      %v412 = vpop.f32.mrb[0].mxu0
      %v413 = vadd.f32 %v248, %v412
      %v414 = vpop.f32.mrb[0].mxu0
      %v415 = vpop.f32.mrb[0].mxu0
      %v416 = vadd.f32 %v248, %v415
      %v417 = vpop.f32.mrb[0].mxu0
      %418 = vmatprep.mubr.bf16.mxu0 0
      %419 = vmatmul.mubr.bf16.gmra.mrb[0].mxu0 %v287
      %v420 = vpop.f32.mrb[0].mxu0
      %v421 = vadd.f32 %v248, %v420
      %v422 = vpop.f32.mrb[0].mxu0
      %v423 = vpop.f32.mrb[0].mxu0
      %v424 = vadd.f32 %v248, %v423
      %v425 = vpop.f32.mrb[0].mxu0
      %426 = vmatprep.mubr.bf16.mxu0 0
      %427 = vmatmul.mubr.bf16.gmra.mrb[0].mxu0 %v288
      %v428 = vpop.f32.mrb[0].mxu0
      %v429 = vadd.f32 %v248, %v428
      %v430 = vpop.f32.mrb[0].mxu0
      %v431 = vpop.f32.mrb[0].mxu0
      %v432 = vadd.f32 %v248, %v431
      %v433 = vpop.f32.mrb[0].mxu0
      %434 = vmatprep.mubr.bf16.mxu0 0
      %435 = vmatmul.mubr.bf16.gmra.mrb[0].mxu0 %v289
      %v436 = vpop.f32.mrb[0].mxu0
      %v437 = vadd.f32 %v248, %v436
      %v438 = vpop.f32.mrb[0].mxu0
      %v439 = vpop.f32.mrb[0].mxu0
      %v440 = vadd.f32 %v248, %v439
      %v441 = vpop.f32.mrb[0].mxu0
      %442 = vdwg.mxu0
      %vm443 = vcmp.ge.f32.partialorder %v381, 0.0
      %vm444 = vcmp.ge.f32.partialorder %v384, 0.0
      %vm445 = vcmp.ge.f32.partialorder %v389, 0.0
      %vm446 = vcmp.ge.f32.partialorder %v392, 0.0
      %vm447 = vcmp.ge.f32.partialorder %v397, 0.0
      %vm448 = vcmp.ge.f32.partialorder %v400, 0.0
      %vm449 = vcmp.ge.f32.partialorder %v405, 0.0
      %vm450 = vcmp.ge.f32.partialorder %v408, 0.0
      %vm451 = vcmp.ge.f32.partialorder %v413, 0.0
      %vm452 = vcmp.ge.f32.partialorder %v416, 0.0
      %vm453 = vcmp.ge.f32.partialorder %v421, 0.0
      %vm454 = vcmp.ge.f32.partialorder %v424, 0.0
      %vm455 = vcmp.ge.f32.partialorder %v429, 0.0
      %vm456 = vcmp.ge.f32.partialorder %v432, 0.0
      %vm457 = vcmp.ge.f32.partialorder %v437, 0.0
      %vm458 = vcmp.ge.f32.partialorder %v440, 0.0
      %v459 = vmul.f32 %v381, 0.01
      %v460 = vmul.f32 %v384, 0.01
      %v461 = vmul.f32 %v389, 0.01
      %v462 = vmul.f32 %v392, 0.01
      %v463 = vmul.f32 %v397, 0.01
      %v464 = vmul.f32 %v400, 0.01
      %v465 = vmul.f32 %v405, 0.01
      %v466 = vmul.f32 %v408, 0.01
      %v467 = vmul.f32 %v413, 0.01
      %v468 = vmul.f32 %v416, 0.01
      %v469 = vmul.f32 %v421, 0.01
      %v470 = vmul.f32 %v424, 0.01
      %v471 = vmul.f32 %v429, 0.01
      %v472 = vmul.f32 %v432, 0.01
      %v473 = vmul.f32 %v437, 0.01
      %v474 = vmul.f32 %v440, 0.01
      %v475 = vsel %vm443, %v381, %v459
      %v476 = vsel %vm444, %v384, %v460
      %v477 = vsel %vm445, %v389, %v461
      %v478 = vsel %vm446, %v392, %v462
      %v479 = vsel %vm447, %v397, %v463
      %v480 = vsel %vm448, %v400, %v464
      %v481 = vsel %vm449, %v405, %v465
      %v482 = vsel %vm450, %v408, %v466
      %v483 = vsel %vm451, %v413, %v467
      %v484 = vsel %vm452, %v416, %v468
      %v485 = vsel %vm453, %v421, %v469
      %v486 = vsel %vm454, %v424, %v470
      %v487 = vsel %vm455, %v429, %v471
      %v488 = vsel %vm456, %v432, %v472
      %v489 = vsel %vm457, %v437, %v473
      %v490 = vsel %vm458, %v440, %v474
      %v491 = vpack.c.bf16 %v476, %v475
      %v492 = vpack.c.bf16 %v478, %v477
      %v493 = vpack.c.bf16 %v480, %v479
      %v494 = vpack.c.bf16 %v482, %v481
      %v495 = vpack.c.bf16 %v484, %v483
      %v496 = vpack.c.bf16 %v486, %v485
      %v497 = vpack.c.bf16 %v488, %v487
      %v498 = vpack.c.bf16 %v490, %v489
      %v507 = vunpack.c.l.b16 %v491
      %v508 = vunpack.c.h.b16 %v491
      %v509 = vunpack.c.l.b16 %v492
      %v510 = vunpack.c.h.b16 %v492
      %v511 = vunpack.c.l.b16 %v493
      %v512 = vunpack.c.h.b16 %v493
      %v513 = vunpack.c.l.b16 %v494
      %v514 = vunpack.c.h.b16 %v494
      %v515 = vunpack.c.l.b16 %v495
      %v516 = vunpack.c.h.b16 %v495
      %v517 = vunpack.c.l.b16 %v496
      %v518 = vunpack.c.h.b16 %v496
      %v519 = vunpack.c.l.b16 %v497
      %v520 = vunpack.c.h.b16 %v497
      %v521 = vunpack.c.l.b16 %v498
      %v522 = vunpack.c.h.b16 %v498
      %v523 = vpack.c.b16 %v507, %v507
      %v524 = vpack.c.b16 %v508, %v508
      %v525 = vpack.c.b16 %v509, %v509
      %v526 = vpack.c.b16 %v510, %v510
      %v527 = vpack.c.b16 %v511, %v511
      %v528 = vpack.c.b16 %v512, %v512
      %v529 = vpack.c.b16 %v513, %v513
      %v530 = vpack.c.b16 %v514, %v514
      %v531 = vpack.c.b16 %v515, %v515
      %v532 = vpack.c.b16 %v516, %v516
      %v533 = vpack.c.b16 %v517, %v517
      %v534 = vpack.c.b16 %v518, %v518
      %v535 = vpack.c.b16 %v519, %v519
      %v536 = vpack.c.b16 %v520, %v520
      %v537 = vpack.c.b16 %v521, %v521
      %v538 = vpack.c.b16 %v522, %v522
      %555 = vst [vmem:[%s208] sm:$0xf] %v523
      %556 = vst [vmem:[%s208 + $0x4] sm:$0xf] %v524
      %557 = vst [vmem:[%s208 + $0x8] sm:$0xf] %v525
      %558 = vst [vmem:[%s208 + $0xc] sm:$0xf] %v526
      %559 = vst [vmem:[%s208 + $0x10] sm:$0xf] %v527
      %560 = vst [vmem:[%s208 + $0x14] sm:$0xf] %v528
      %561 = vst [vmem:[%s208 + $0x18] sm:$0xf] %v529
      %562 = vst [vmem:[%s208 + $0x1c] sm:$0xf] %v530
      %563 = vst [vmem:[%s208 + $0x20] sm:$0xf] %v531
      %564 = vst [vmem:[%s208 + $0x24] sm:$0xf] %v532
      %565 = vst [vmem:[%s208 + $0x28] sm:$0xf] %v533
      %566 = vst [vmem:[%s208 + $0x2c] sm:$0xf] %v534
      %567 = vst [vmem:[%s208 + $0x30] sm:$0xf] %v535
      %568 = vst [vmem:[%s208 + $0x34] sm:$0xf] %v536
      %569 = vst [vmem:[%s208 + $0x38] sm:$0xf] %v537
      %570 = vst [vmem:[%s208 + $0x3c] sm:$0xf] %v538
      %s571 = smul.u32 16, %s19
      %p572 = scmp.lt.s32.totalorder %s18, 1
      %s573 = scalar_select %p572, %s18, 1
      %p574 = scmp.lt.s32.totalorder %s571, 47
      %s575 = scalar_select %p574, %s571, 47
      %s576 = smul.addr %s573, 48
      %s577 = sadd.s32 %s575, %s576
      %s578 = smul.addr %s577, 4
      %s579 = scalar_lea.vmem %s3, %s578
      // Predicated region
      $region33: #{_lambda_.13} parent=31 // pred_check
        %p580 = pneg %p116
      $region34: #{_lambda_.13} parent=31 // pred_check_branch
        %582 = sbr.rel (%p580) target = $region36
      $region35: #{_lambda_.13} parent=31 // pred_region
        %s583 = smul.u32 16, %s19
      $region36: #{_lambda_.13} parent=31 // pred_fallthru
        _
    $region32: #{_lambda_.13} parent=5 // pred_fallthru
      _
    %p584 = scmp.le.s32.totalorder 2, %s9
    // Predicated region
    $region37: #{_lambda_.13} parent=5 // pred_check
      %p585 = pneg %p584
    $region38: #{_lambda_.13} parent=5 // pred_check_branch
      %587 = sbr.rel (%p585) target = $region40
    $region39: #{_lambda_.13} parent=5 // pred_region
      %s588 = ssub.s32 %s9, 2
      // Predicated region
      $region41: #{_lambda_.13} parent=39 // pred_check
        %p589 = pneg %p122
      $region42: #{_lambda_.13} parent=39 // pred_check_branch
        %591 = sbr.rel (%p589) target = $region44
      $region43: #{_lambda_.13} parent=39 // pred_region
        %s592 = smul.u32 16, %s21
        %p593 = scmp.lt.s32.totalorder %s20, 1
        %s594 = scalar_select %p593, %s20, 1
        %p595 = scmp.lt.s32.totalorder %s592, 47
        %s596 = scalar_select %p595, %s592, 47
        %s597 = smul.addr %s594, 48
        %s598 = sadd.s32 %s596, %s597
        %s599 = smul.addr %s598, 4
        %s600 = scalar_lea.vmem %s3, %s599
      $region44: #{_lambda_.13} parent=39 // pred_fallthru
        _
    $region40: #{_lambda_.13} parent=5 // pred_fallthru
      _
  $region6: #{_lambda_.13} parent=0 // loop_footer
    %s13 = sadd.s32 1, %s9
  $region7: #{_lambda_.13} parent=0 // loop_footer_branch
    %8 = sbr.rel target = $region3
  $region8: #{_lambda_.13} parent=0 // loop_exit
    _

// kernel: _lambda_.15
$region0: #{_lambda_.15}
  #allocation0 [shape = 'u32[]', space=smem, size = 0x4, offset = 0x4, fixed_abs, tag = 'smem constant byte address 0x4 - core index']
  #allocation1 [shape = 'u32[144,128]{1,0:T(1,128)}', space=vmem, size = 0x12000, scoped, tag = 'internal scratch']
  %s0 = inlined_call_operand.vmem [shape: bf16[2,88,128], index: 0, kind: input, shape index: {}]
  %s1 = inlined_call_operand.vmem [shape: bf16[128,128], index: 1, kind: input, shape index: {}]
  %s2 = inlined_call_operand.vmem [shape: f32[1,128], index: 2, kind: input, shape index: {}]
  %s3 = inlined_call_operand.vmem [shape: bf16[2,88,128], index: 3, kind: output, shape index: {}]
  %s4 = sld [smem:[#allocation0]]
  $region45: #{_lambda_.15} parent=0
    _
  %s6 = ssub.s32 1, %s4
  %s7 = scalar_select 0, %s6, %s4
  loop: start=0, step=1, limit=4
  $region2: #{_lambda_.15} parent=0 // loop_pre_header
    _
  $region3: #{_lambda_.15} parent=0 // loop_header
    %s9 = sphi 0, %s13
    %p10 = scmp.ge.s32.totalorder %s9, 4
    %s16 = sphi 0, %s28
    %s17 = sphi 0, %s24
    %s18 = sphi 0, %s16
    %s19 = sphi 0, %s17
    %s20 = sphi 0, %s18
    %s21 = sphi 0, %s19
    %s33 = sphi 0, %s35
    %s36 = sphi 0, %s33
    %s37 = sphi 0, %s36
    %s53 = sphi 0, %s37
    %s57 = sphi 0, %s57
    %s59 = sphi 0, %s57
    %s60 = sphi 0, %s59
    %s74 = sphi 0, %s60
    %s78 = sphi 0, %s78
    %s80 = sphi 0, %s78
    %s81 = sphi 0, %s80
    %s95 = sphi 0, %s81
    %s103 = sphi 0, %s105
    %s106 = sphi 0, %s103
    %s107 = sphi 0, %s106
    %s123 = sphi 0, %s107
  $region4: #{_lambda_.15} parent=0 // loop_header_branch
    %12 = sbr.rel (%p10) target = $region8
  $region5: #{_lambda_.15} parent=0 // loop_body
    %s14 = ssub.s32 %s9, 1
    %s15 = ssub.s32 %s9, 2
    %s22 = sadd.s32 1, %s17
    %p23 = scmp.ge.s32.totalorder %s22, 1
    %s24 = scalar_select %p23, 0, %s22
    %s25 = sadd.s32 1, %s16
    %s26 = scalar_select %p23, %s25, %s16
    %p27 = scmp.ge.s32.totalorder %s26, 2
    %s28 = scalar_select %p27, 0, %s26
    %s29 = ssub.s32 %s16, %s28
    %s30 = ssub.s32 %s17, %s24
    %s31 = sor.u32 %s29, %s30
    %p32 = scmp.eq.s32.totalorder %s31, 0
    %s34 = sadd.s32 %s33, 1
    %s35 = scalar_select %p32, %s33, %s34
    %p38 = pneg %p32
    %p39 = scmp.eq.s32.totalorder %s9, 1
    %p40 = por %p38, %p39
    %p41 = scmp.ne.s32.totalorder %s33, %s36
    %p42 = scmp.eq.s32.totalorder %s9, 0
    %p43 = por %p41, %p42
    %p44 = scmp.ne.s32.totalorder %s33, %s36
    %p45 = scmp.eq.s32.totalorder %s14, 1
    %p46 = por %p44, %p45
    %p47 = scmp.ne.s32.totalorder %s36, %s37
    %p48 = scmp.eq.s32.totalorder %s14, 0
    %p49 = por %p47, %p48
    %p50 = scmp.ne.s32.totalorder %s36, %s37
    %p51 = scmp.eq.s32.totalorder %s15, 1
    %p52 = por %p50, %p51
    %p54 = scmp.ne.s32.totalorder %s37, %s53
    %p55 = scmp.eq.s32.totalorder %s15, 0
    %p56 = por %p54, %p55
    %s58 = sadd.s32 %s57, 1
    %p61 = scmp.eq.s32.totalorder %s9, 1
    %p62 = scmp.ne.s32.totalorder %s57, %s59
    %p63 = scmp.eq.s32.totalorder %s9, 0
    %p64 = por %p62, %p63
    %p65 = scmp.ne.s32.totalorder %s57, %s59
    %p66 = scmp.eq.s32.totalorder %s14, 1
    %p67 = por %p65, %p66
    %p68 = scmp.ne.s32.totalorder %s59, %s60
    %p69 = scmp.eq.s32.totalorder %s14, 0
    %p70 = por %p68, %p69
    %p71 = scmp.ne.s32.totalorder %s59, %s60
    %p72 = scmp.eq.s32.totalorder %s15, 1
    %p73 = por %p71, %p72
    %p75 = scmp.ne.s32.totalorder %s60, %s74
    %p76 = scmp.eq.s32.totalorder %s15, 0
    %p77 = por %p75, %p76
    %s79 = sadd.s32 %s78, 1
    %p82 = scmp.eq.s32.totalorder %s9, 1
    %p83 = scmp.ne.s32.totalorder %s78, %s80
    %p84 = scmp.eq.s32.totalorder %s9, 0
    %p85 = por %p83, %p84
    %p86 = scmp.ne.s32.totalorder %s78, %s80
    %p87 = scmp.eq.s32.totalorder %s14, 1
    %p88 = por %p86, %p87
    %p89 = scmp.ne.s32.totalorder %s80, %s81
    %p90 = scmp.eq.s32.totalorder %s14, 0
    %p91 = por %p89, %p90
    %p92 = scmp.ne.s32.totalorder %s80, %s81
    %p93 = scmp.eq.s32.totalorder %s15, 1
    %p94 = por %p92, %p93
    %p96 = scmp.ne.s32.totalorder %s81, %s95
    %p97 = scmp.eq.s32.totalorder %s15, 0
    %p98 = por %p96, %p97
    %s99 = ssub.s32 %s16, %s28
    %s100 = ssub.s32 %s17, %s24
    %s101 = sor.u32 %s99, %s100
    %p102 = scmp.eq.s32.totalorder %s101, 0
    %s104 = sadd.s32 %s103, 1
    %s105 = scalar_select %p102, %s103, %s104
    %p108 = pneg %p102
    %p109 = scmp.eq.s32.totalorder %s9, 1
    %p110 = por %p108, %p109
    %p111 = scmp.ne.s32.totalorder %s103, %s106
    %p112 = scmp.eq.s32.totalorder %s9, 0
    %p113 = por %p111, %p112
    %p114 = scmp.ne.s32.totalorder %s103, %s106
    %p115 = scmp.eq.s32.totalorder %s14, 1
    %p116 = por %p114, %p115
    %p117 = scmp.ne.s32.totalorder %s106, %s107
    %p118 = scmp.eq.s32.totalorder %s14, 0
    %p119 = por %p117, %p118
    %p120 = scmp.ne.s32.totalorder %s106, %s107
    %p121 = scmp.eq.s32.totalorder %s15, 1
    %p122 = por %p120, %p121
    %p124 = scmp.ne.s32.totalorder %s107, %s123
    %p125 = scmp.eq.s32.totalorder %s15, 0
    %p126 = por %p124, %p125
    %p127 = scmp.le.s32.totalorder 1, %s9
    %p128 = scmp.lt.s32.totalorder %s9, 3
    %p129 = pnand %p127, %p128
    %p130 = pneg %p129
    // Predicated region
    $region9: #{_lambda_.15} parent=5 // pred_check
      _
    $region10: #{_lambda_.15} parent=5 // pred_check_branch
      %132 = sbr.rel (%p129) target = $region12
    $region11: #{_lambda_.15} parent=5 // pred_region
      %s133 = ssub.s32 %s9, 1
      // Predicated region
      $region13: #{_lambda_.15} parent=11 // pred_check
        %p134 = pneg %p70
      $region14: #{_lambda_.15} parent=11 // pred_check_branch
        %136 = sbr.rel (%p134) target = $region16
      $region15: #{_lambda_.15} parent=11 // pred_region
        _
      $region16: #{_lambda_.15} parent=11 // pred_fallthru
        _
      // Predicated region
      $region17: #{_lambda_.15} parent=11 // pred_check
        %p137 = pneg %p91
      $region18: #{_lambda_.15} parent=11 // pred_check_branch
        %139 = sbr.rel (%p137) target = $region20
      $region19: #{_lambda_.15} parent=11 // pred_region
        _
      $region20: #{_lambda_.15} parent=11 // pred_fallthru
        _
    $region12: #{_lambda_.15} parent=5 // pred_fallthru
      _
    %p140 = scmp.lt.s32.totalorder %s9, 2
    // Predicated region
    $region21: #{_lambda_.15} parent=5 // pred_check
      %p141 = pneg %p140
    $region22: #{_lambda_.15} parent=5 // pred_check_branch
      %143 = sbr.rel (%p141) target = $region24
    $region23: #{_lambda_.15} parent=5 // pred_region
      // Predicated region
      $region25: #{_lambda_.15} parent=23 // pred_check
        %p144 = pneg %p43
      $region26: #{_lambda_.15} parent=23 // pred_check_branch
        %146 = sbr.rel (%p144) target = $region28
      $region27: #{_lambda_.15} parent=23 // pred_region
        %s147 = smul.u32 11, %s17
        %p148 = scmp.lt.s32.totalorder %s16, 1
        %s149 = scalar_select %p148, %s16, 1
        %p150 = scmp.lt.s32.totalorder %s147, 10
        %s151 = scalar_select %p150, %s147, 10
        %s152 = smul.addr %s149, 11
        %s153 = sadd.s32 %s151, %s152
        %s154 = smul.addr %s153, 4
        %s155 = scalar_lea.vmem %s0, %s154
        %s156 = smul.u32 11, %s17
      $region28: #{_lambda_.15} parent=23 // pred_fallthru
        _
    $region24: #{_lambda_.15} parent=5 // pred_fallthru
      _
    %p157 = scmp.le.s32.totalorder 1, %s9
    %p158 = scmp.lt.s32.totalorder %s9, 3
    %p159 = pnand %p157, %p158
    %p160 = pneg %p159
    // Predicated region
    $region29: #{_lambda_.15} parent=5 // pred_check
      _
    $region30: #{_lambda_.15} parent=5 // pred_check_branch
      %162 = sbr.rel (%p159) target = $region32
    $region31: #{_lambda_.15} parent=5 // pred_region
      %s163 = ssub.s32 %s9, 1
      %s164 = smul.u32 11, %s19
      %p165 = scmp.lt.s32.totalorder %s18, 1
      %s166 = scalar_select %p165, %s18, 1
      %p167 = scmp.lt.s32.totalorder %s164, 10
      %s168 = scalar_select %p167, %s164, 10
      %s169 = smul.addr %s166, 11
      %s170 = sadd.s32 %s168, %s169
      %s171 = smul.addr %s170, 4
      %s172 = scalar_lea.vmem %s0, %s171
      %p173 = pneg %p49
      %p174 = pneg %p46
      %p175 = pneg %p70
      %p176 = pneg %p67
      %p177 = pneg %p91
      %p178 = pneg %p88
      %p179 = pneg %p119
      %p180 = pneg %p116
      %s181 = smul.u32 11, %s19
      %p182 = scmp.lt.s32.totalorder %s18, 1
      %s183 = scalar_select %p182, %s18, 1
      %p184 = scmp.lt.s32.totalorder %s181, 10
      %s185 = scalar_select %p184, %s181, 10
      %s186 = smul.addr %s183, 11
      %s187 = sadd.s32 %s185, %s186
      %s188 = smul.addr %s187, 4
      %s189 = scalar_lea.vmem %s3, %s188
      %s190 = smul.u32 11, %s19
      %p191 = scmp.lt.s32.totalorder %s18, 1
      %s192 = scalar_select %p191, %s18, 1
      %p193 = scmp.lt.s32.totalorder %s190, 10
      %s194 = scalar_select %p193, %s190, 10
      %s195 = smul.addr %s192, 11
      %s196 = sadd.s32 %s194, %s195
      %s197 = smul.addr %s196, 4
      %s198 = scalar_lea.vmem %s0, %s197
      %s199 = smul.u32 11, %s19
      %s200 = smul.u32 11, %s19
      %p201 = scmp.lt.s32.totalorder %s18, 1
      %s202 = scalar_select %p201, %s18, 1
      %p203 = scmp.lt.s32.totalorder %s200, 10
      %s204 = scalar_select %p203, %s200, 10
      %s205 = smul.addr %s202, 11
      %s206 = sadd.s32 %s204, %s205
      %s207 = smul.addr %s206, 4
      %s208 = scalar_lea.vmem %s3, %s207
      %s209 = smul.u32 11, %s19
      %v211 = vld [vmem:[%s198] sm:$0xf]
      %v212 = vld [vmem:[%s198 + $0x4] sm:$0xf]
      %v213 = vld [vmem:[%s198 + $0x8] sm:$0xf]
      %v214 = vld [vmem:[%s198 + $0xc] sm:$0xf]
      %v215 = vld [vmem:[%s198 + $0x10] sm:$0xf]
      %v216 = vld [vmem:[%s198 + $0x14] sm:$0xf]
      %v217 = vld [vmem:[%s198 + $0x18] sm:$0xf]
      %v218 = vld [vmem:[%s198 + $0x1c] sm:$0xf]
      %v219 = vld [vmem:[%s198 + $0x20] sm:$0xf]
      %v220 = vld [vmem:[%s198 + $0x24] sm:$0xf]
      %v221 = vld [vmem:[%s198 + $0x28] sm:$0xf]
      %v222 = vld [vmem:[%s1] sm:$0xf]
      %v223 = vld [vmem:[%s1 + $0x4] sm:$0xf]
      %v224 = vld [vmem:[%s1 + $0x8] sm:$0xf]
      %v225 = vld [vmem:[%s1 + $0xc] sm:$0xf]
      %v226 = vld [vmem:[%s1 + $0x10] sm:$0xf]
      %v227 = vld [vmem:[%s1 + $0x14] sm:$0xf]
      %v228 = vld [vmem:[%s1 + $0x18] sm:$0xf]
      %v229 = vld [vmem:[%s1 + $0x1c] sm:$0xf]
      %v230 = vld [vmem:[%s1 + $0x20] sm:$0xf]
      %v231 = vld [vmem:[%s1 + $0x24] sm:$0xf]
      %v232 = vld [vmem:[%s1 + $0x28] sm:$0xf]
      %v233 = vld [vmem:[%s1 + $0x2c] sm:$0xf]
      %v234 = vld [vmem:[%s1 + $0x30] sm:$0xf]
      %v235 = vld [vmem:[%s1 + $0x34] sm:$0xf]
      %v236 = vld [vmem:[%s1 + $0x38] sm:$0xf]
      %v237 = vld [vmem:[%s1 + $0x3c] sm:$0xf]
      %v238 = vld [vmem:[%s2] sm:$0x1]
      %v240 = vlaneseq
      %v241 = vshrl.u32 %v240, 7
      %v242 = vsub.s32 0, %v241
      %v243 = vrot.slane %v238, %v242
      %v256 = vunpack.c.l.b16 %v211
      %v257 = vunpack.c.l.b16 %v212
      %v258 = vunpack.c.l.b16 %v213
      %v259 = vunpack.c.l.b16 %v214
      %v260 = vunpack.c.l.b16 %v215
      %v261 = vunpack.c.l.b16 %v216
      %v262 = vunpack.c.l.b16 %v217
      %v263 = vunpack.c.l.b16 %v218
      %v264 = vunpack.c.l.b16 %v219
      %v265 = vunpack.c.l.b16 %v220
      %v266 = vunpack.c.l.b16 %v221
      %v267 = vpack.c.b16 %v257, %v256
      %v268 = vpack.c.b16 %v259, %v258
      %v269 = vpack.c.b16 %v261, %v260
      %v270 = vpack.c.b16 %v263, %v262
      %v271 = vpack.c.b16 %v265, %v264
      %v272 = vpack.c.b16 %v266, %v266
      %v295 = vunpack.c.l.b16 %v222
      %v296 = vunpack.c.l.b16 %v223
      %v297 = vunpack.c.l.b16 %v224
      %v298 = vunpack.c.l.b16 %v225
      %v299 = vunpack.c.l.b16 %v226
      %v300 = vunpack.c.l.b16 %v227
      %v301 = vunpack.c.l.b16 %v228
      %v302 = vunpack.c.l.b16 %v229
      %v303 = vunpack.c.l.b16 %v230
      %v304 = vunpack.c.l.b16 %v231
      %v305 = vunpack.c.l.b16 %v232
      %v306 = vunpack.c.l.b16 %v233
      %v307 = vunpack.c.l.b16 %v234
      %v308 = vunpack.c.l.b16 %v235
      %v309 = vunpack.c.l.b16 %v236
      %v310 = vunpack.c.l.b16 %v237
      %v311 = vpack.c.b16 %v296, %v295
      %v312 = vpack.c.b16 %v298, %v297
      %v313 = vpack.c.b16 %v300, %v299
      %v314 = vpack.c.b16 %v302, %v301
      %v315 = vpack.c.b16 %v304, %v303
      %v316 = vpack.c.b16 %v306, %v305
      %v317 = vpack.c.b16 %v308, %v307
      %v318 = vpack.c.b16 %v310, %v309
      %327 = vmatprep.subr.bf16.mxu0 0
      %328 = vmatpush1.bf16.msra.mxu0 %v311
      %329 = vmatprep.subr.bf16.mxu0 0
      %330 = vmatpush1.bf16.msra.mxu0 %v312
      %331 = vmatprep.subr.bf16.mxu0 0
      %332 = vmatpush1.bf16.msra.mxu0 %v313
      %333 = vmatprep.subr.bf16.mxu0 0
      %334 = vmatpush1.bf16.msra.mxu0 %v314
      %335 = vmatprep.subr.bf16.mxu0 0
      %336 = vmatpush1.bf16.msra.mxu0 %v315
      %337 = vmatprep.subr.bf16.mxu0 0
      %338 = vmatpush1.bf16.msra.mxu0 %v316
      %339 = vmatprep.subr.bf16.mxu0 0
      %340 = vmatpush1.bf16.msra.mxu0 %v317
      %341 = vmatprep.subr.bf16.mxu0 0
      %342 = vmatpush1.bf16.msra.mxu0 %v318
      %343 = vmatprep.subr.bf16.mxu0 0
      %344 = vmatpush1.bf16.msra.mxu0 0
      %345 = vmatprep.subr.bf16.mxu0 0
      %346 = vmatpush1.bf16.msra.mxu0 0
      %347 = vmatprep.subr.bf16.mxu0 0
      %348 = vmatpush1.bf16.msra.mxu0 0
      %349 = vmatprep.subr.bf16.mxu0 0
      %350 = vmatpush1.bf16.msra.mxu0 0
      %351 = vmatprep.subr.bf16.mxu0 0
      %352 = vmatpush1.bf16.msra.mxu0 0
      %353 = vmatprep.subr.bf16.mxu0 0
      %354 = vmatpush1.bf16.msra.mxu0 0
      %355 = vmatprep.subr.bf16.mxu0 0
      %356 = vmatpush1.bf16.msra.mxu0 0
      %357 = vmatprep.subr.bf16.mxu0 0
      %358 = vmatpush1.bf16.msra.mxu0 0
      %359 = vmatprep.mubr.bf16.mxu0 0
      %360 = vmatmul.mubr.bf16.gmra.mrb[0].mxu0 %v267
      %v361 = vpop.f32.mrb[0].mxu0
      %v362 = vadd.f32 %v243, %v361
      %v363 = vpop.f32.mrb[0].mxu0
      %v364 = vpop.f32.mrb[0].mxu0
      %v365 = vadd.f32 %v243, %v364
      %v366 = vpop.f32.mrb[0].mxu0
      %367 = vmatprep.mubr.bf16.mxu0 0
      %368 = vmatmul.mubr.bf16.gmra.mrb[0].mxu0 %v268
      %v369 = vpop.f32.mrb[0].mxu0
      %v370 = vadd.f32 %v243, %v369
      %v371 = vpop.f32.mrb[0].mxu0
      %v372 = vpop.f32.mrb[0].mxu0
      %v373 = vadd.f32 %v243, %v372
      %v374 = vpop.f32.mrb[0].mxu0
      %375 = vmatprep.mubr.bf16.mxu0 0
      %376 = vmatmul.mubr.bf16.gmra.mrb[0].mxu0 %v269
      %v377 = vpop.f32.mrb[0].mxu0
      %v378 = vadd.f32 %v243, %v377
      %v379 = vpop.f32.mrb[0].mxu0
      %v380 = vpop.f32.mrb[0].mxu0
      %v381 = vadd.f32 %v243, %v380
      %v382 = vpop.f32.mrb[0].mxu0
      %383 = vmatprep.mubr.bf16.mxu0 0
      %384 = vmatmul.mubr.bf16.gmra.mrb[0].mxu0 %v270
      %v385 = vpop.f32.mrb[0].mxu0
      %v386 = vadd.f32 %v243, %v385
      %v387 = vpop.f32.mrb[0].mxu0
      %v388 = vpop.f32.mrb[0].mxu0
      %v389 = vadd.f32 %v243, %v388
      %v390 = vpop.f32.mrb[0].mxu0
      %391 = vmatprep.mubr.bf16.mxu0 0
      %392 = vmatmul.mubr.bf16.gmra.mrb[0].mxu0 %v271
      %v393 = vpop.f32.mrb[0].mxu0
      %v394 = vadd.f32 %v243, %v393
      %v395 = vpop.f32.mrb[0].mxu0
      %v396 = vpop.f32.mrb[0].mxu0
      %v397 = vadd.f32 %v243, %v396
      %v398 = vpop.f32.mrb[0].mxu0
      %399 = vmatprep.mubr.bf16.mxu0 0
      %400 = vmatmul.mubr.bf16.gmra.mrb[0].mxu0 %v272
      %v401 = vpop.f32.mrb[0].mxu0
      %v402 = vadd.f32 %v243, %v401
      %v403 = vpop.f32.mrb[0].mxu0
      %v404 = vpop.f32.mrb[0].mxu0
      %v405 = vpop.f32.mrb[0].mxu0
      %406 = vdwg.mxu0
      %vm407 = vcmp.ge.f32.partialorder %v362, 0.0
      %vm408 = vcmp.ge.f32.partialorder %v365, 0.0
      %vm409 = vcmp.ge.f32.partialorder %v370, 0.0
      %vm410 = vcmp.ge.f32.partialorder %v373, 0.0
      %vm411 = vcmp.ge.f32.partialorder %v378, 0.0
      %vm412 = vcmp.ge.f32.partialorder %v381, 0.0
      %vm413 = vcmp.ge.f32.partialorder %v386, 0.0
      %vm414 = vcmp.ge.f32.partialorder %v389, 0.0
      %vm415 = vcmp.ge.f32.partialorder %v394, 0.0
      %vm416 = vcmp.ge.f32.partialorder %v397, 0.0
      %vm417 = vcmp.ge.f32.partialorder %v402, 0.0
      %v418 = vmul.f32 %v362, 0.01
      %v419 = vmul.f32 %v365, 0.01
      %v420 = vmul.f32 %v370, 0.01
      %v421 = vmul.f32 %v373, 0.01
      %v422 = vmul.f32 %v378, 0.01
      %v423 = vmul.f32 %v381, 0.01
      %v424 = vmul.f32 %v386, 0.01
      %v425 = vmul.f32 %v389, 0.01
      %v426 = vmul.f32 %v394, 0.01
      %v427 = vmul.f32 %v397, 0.01
      %v428 = vmul.f32 %v402, 0.01
      %v429 = vsel %vm407, %v362, %v418
      %v430 = vsel %vm408, %v365, %v419
      %v431 = vsel %vm409, %v370, %v420
      %v432 = vsel %vm410, %v373, %v421
      %v433 = vsel %vm411, %v378, %v422
      %v434 = vsel %vm412, %v381, %v423
      %v435 = vsel %vm413, %v386, %v424
      %v436 = vsel %vm414, %v389, %v425
      %v437 = vsel %vm415, %v394, %v426
      %v438 = vsel %vm416, %v397, %v427
      %v439 = vsel %vm417, %v402, %v428
      %v440 = vpack.c.bf16 %v430, %v429
      %v441 = vpack.c.bf16 %v432, %v431
      %v442 = vpack.c.bf16 %v434, %v433
      %v443 = vpack.c.bf16 %v436, %v435
      %v444 = vpack.c.bf16 %v438, %v437
      %v445 = vpack.c.bf16 %v439, %v439
      %v452 = vunpack.c.l.b16 %v440
      %v453 = vunpack.c.h.b16 %v440
      %v454 = vunpack.c.l.b16 %v441
      %v455 = vunpack.c.h.b16 %v441
      %v456 = vunpack.c.l.b16 %v442
      %v457 = vunpack.c.h.b16 %v442
      %v458 = vunpack.c.l.b16 %v443
      %v459 = vunpack.c.h.b16 %v443
      %v460 = vunpack.c.l.b16 %v444
      %v461 = vunpack.c.h.b16 %v444
      %v462 = vunpack.c.l.b16 %v445
      %v463 = vpack.c.b16 %v452, %v452
      %v464 = vpack.c.b16 %v453, %v453
      %v465 = vpack.c.b16 %v454, %v454
      %v466 = vpack.c.b16 %v455, %v455
      %v467 = vpack.c.b16 %v456, %v456
      %v468 = vpack.c.b16 %v457, %v457
      %v469 = vpack.c.b16 %v458, %v458
      %v470 = vpack.c.b16 %v459, %v459
      %v471 = vpack.c.b16 %v460, %v460
      %v472 = vpack.c.b16 %v461, %v461
      %v473 = vpack.c.b16 %v462, %v462
      %485 = vst [vmem:[%s208] sm:$0xf] %v463
      %486 = vst [vmem:[%s208 + $0x4] sm:$0xf] %v464
      %487 = vst [vmem:[%s208 + $0x8] sm:$0xf] %v465
      %488 = vst [vmem:[%s208 + $0xc] sm:$0xf] %v466
      %489 = vst [vmem:[%s208 + $0x10] sm:$0xf] %v467
      %490 = vst [vmem:[%s208 + $0x14] sm:$0xf] %v468
      %491 = vst [vmem:[%s208 + $0x18] sm:$0xf] %v469
      %492 = vst [vmem:[%s208 + $0x1c] sm:$0xf] %v470
      %493 = vst [vmem:[%s208 + $0x20] sm:$0xf] %v471
      %494 = vst [vmem:[%s208 + $0x24] sm:$0xf] %v472
      %495 = vst [vmem:[%s208 + $0x28] sm:$0xf] %v473
      %s496 = smul.u32 11, %s19
      %p497 = scmp.lt.s32.totalorder %s18, 1
      %s498 = scalar_select %p497, %s18, 1
      %p499 = scmp.lt.s32.totalorder %s496, 10
      %s500 = scalar_select %p499, %s496, 10
      %s501 = smul.addr %s498, 11
      %s502 = sadd.s32 %s500, %s501
      %s503 = smul.addr %s502, 4
      %s504 = scalar_lea.vmem %s3, %s503
      // Predicated region
      $region33: #{_lambda_.15} parent=31 // pred_check
        %p505 = pneg %p116
      $region34: #{_lambda_.15} parent=31 // pred_check_branch
        %507 = sbr.rel (%p505) target = $region36
      $region35: #{_lambda_.15} parent=31 // pred_region
        %s508 = smul.u32 11, %s19
      $region36: #{_lambda_.15} parent=31 // pred_fallthru
        _
    $region32: #{_lambda_.15} parent=5 // pred_fallthru
      _
    %p509 = scmp.le.s32.totalorder 2, %s9
    // Predicated region
    $region37: #{_lambda_.15} parent=5 // pred_check
      %p510 = pneg %p509
    $region38: #{_lambda_.15} parent=5 // pred_check_branch
      %512 = sbr.rel (%p510) target = $region40
    $region39: #{_lambda_.15} parent=5 // pred_region
      %s513 = ssub.s32 %s9, 2
      // Predicated region
      $region41: #{_lambda_.15} parent=39 // pred_check
        %p514 = pneg %p122
      $region42: #{_lambda_.15} parent=39 // pred_check_branch
        %516 = sbr.rel (%p514) target = $region44
      $region43: #{_lambda_.15} parent=39 // pred_region
        %s517 = smul.u32 11, %s21
        %p518 = scmp.lt.s32.totalorder %s20, 1
        %s519 = scalar_select %p518, %s20, 1
        %p520 = scmp.lt.s32.totalorder %s517, 10
        %s521 = scalar_select %p520, %s517, 10
        %s522 = smul.addr %s519, 11
        %s523 = sadd.s32 %s521, %s522
        %s524 = smul.addr %s523, 4
        %s525 = scalar_lea.vmem %s3, %s524
      $region44: #{_lambda_.15} parent=39 // pred_fallthru
        _
    $region40: #{_lambda_.15} parent=5 // pred_fallthru
      _
  $region6: #{_lambda_.15} parent=0 // loop_footer
    %s13 = sadd.s32 1, %s9
  $region7: #{_lambda_.15} parent=0 // loop_footer_branch
    %8 = sbr.rel target = $region3
  $region8: #{_lambda_.15} parent=0 // loop_exit
    _

// kernel: _lambda_.16
$region0: #{_lambda_.16}
  #allocation0 [shape = 'u32[]', space=smem, size = 0x4, offset = 0x4, fixed_abs, tag = 'smem constant byte address 0x4 - core index']
  #allocation1 [shape = 'u32[144,128]{1,0:T(1,128)}', space=vmem, size = 0x12000, scoped, tag = 'internal scratch']
  %s0 = inlined_call_operand.vmem [shape: bf16[2,88,256], index: 0, kind: input, shape index: {}]
  %s1 = inlined_call_operand.vmem [shape: bf16[256,128], index: 1, kind: input, shape index: {}]
  %s2 = inlined_call_operand.vmem [shape: f32[1,128], index: 2, kind: input, shape index: {}]
  %s3 = inlined_call_operand.vmem [shape: bf16[2,88,128], index: 3, kind: output, shape index: {}]
  %s4 = sld [smem:[#allocation0]]
  $region45: #{_lambda_.16} parent=0
    _
  %s6 = ssub.s32 1, %s4
  %s7 = scalar_select 0, %s6, %s4
  loop: start=0, step=1, limit=4
  $region2: #{_lambda_.16} parent=0 // loop_pre_header
    _
  $region3: #{_lambda_.16} parent=0 // loop_header
    %s9 = sphi 0, %s13
    %p10 = scmp.ge.s32.totalorder %s9, 4
    %s16 = sphi 0, %s28
    %s17 = sphi 0, %s24
    %s18 = sphi 0, %s16
    %s19 = sphi 0, %s17
    %s20 = sphi 0, %s18
    %s21 = sphi 0, %s19
    %s33 = sphi 0, %s35
    %s36 = sphi 0, %s33
    %s37 = sphi 0, %s36
    %s53 = sphi 0, %s37
    %s57 = sphi 0, %s57
    %s59 = sphi 0, %s57
    %s60 = sphi 0, %s59
    %s74 = sphi 0, %s60
    %s78 = sphi 0, %s78
    %s80 = sphi 0, %s78
    %s81 = sphi 0, %s80
    %s95 = sphi 0, %s81
    %s103 = sphi 0, %s105
    %s106 = sphi 0, %s103
    %s107 = sphi 0, %s106
    %s123 = sphi 0, %s107
  $region4: #{_lambda_.16} parent=0 // loop_header_branch
    %12 = sbr.rel (%p10) target = $region8
  $region5: #{_lambda_.16} parent=0 // loop_body
    %s14 = ssub.s32 %s9, 1
    %s15 = ssub.s32 %s9, 2
    %s22 = sadd.s32 1, %s17
    %p23 = scmp.ge.s32.totalorder %s22, 1
    %s24 = scalar_select %p23, 0, %s22
    %s25 = sadd.s32 1, %s16
    %s26 = scalar_select %p23, %s25, %s16
    %p27 = scmp.ge.s32.totalorder %s26, 2
    %s28 = scalar_select %p27, 0, %s26
    %s29 = ssub.s32 %s16, %s28
    %s30 = ssub.s32 %s17, %s24
    %s31 = sor.u32 %s29, %s30
    %p32 = scmp.eq.s32.totalorder %s31, 0
    %s34 = sadd.s32 %s33, 1
    %s35 = scalar_select %p32, %s33, %s34
    %p38 = pneg %p32
    %p39 = scmp.eq.s32.totalorder %s9, 1
    %p40 = por %p38, %p39
    %p41 = scmp.ne.s32.totalorder %s33, %s36
    %p42 = scmp.eq.s32.totalorder %s9, 0
    %p43 = por %p41, %p42
    %p44 = scmp.ne.s32.totalorder %s33, %s36
    %p45 = scmp.eq.s32.totalorder %s14, 1
    %p46 = por %p44, %p45
    %p47 = scmp.ne.s32.totalorder %s36, %s37
    %p48 = scmp.eq.s32.totalorder %s14, 0
    %p49 = por %p47, %p48
    %p50 = scmp.ne.s32.totalorder %s36, %s37
    %p51 = scmp.eq.s32.totalorder %s15, 1
    %p52 = por %p50, %p51
    %p54 = scmp.ne.s32.totalorder %s37, %s53
    %p55 = scmp.eq.s32.totalorder %s15, 0
    %p56 = por %p54, %p55
    %s58 = sadd.s32 %s57, 1
    %p61 = scmp.eq.s32.totalorder %s9, 1
    %p62 = scmp.ne.s32.totalorder %s57, %s59
    %p63 = scmp.eq.s32.totalorder %s9, 0
    %p64 = por %p62, %p63
    %p65 = scmp.ne.s32.totalorder %s57, %s59
    %p66 = scmp.eq.s32.totalorder %s14, 1
    %p67 = por %p65, %p66
    %p68 = scmp.ne.s32.totalorder %s59, %s60
    %p69 = scmp.eq.s32.totalorder %s14, 0
    %p70 = por %p68, %p69
    %p71 = scmp.ne.s32.totalorder %s59, %s60
    %p72 = scmp.eq.s32.totalorder %s15, 1
    %p73 = por %p71, %p72
    %p75 = scmp.ne.s32.totalorder %s60, %s74
    %p76 = scmp.eq.s32.totalorder %s15, 0
    %p77 = por %p75, %p76
    %s79 = sadd.s32 %s78, 1
    %p82 = scmp.eq.s32.totalorder %s9, 1
    %p83 = scmp.ne.s32.totalorder %s78, %s80
    %p84 = scmp.eq.s32.totalorder %s9, 0
    %p85 = por %p83, %p84
    %p86 = scmp.ne.s32.totalorder %s78, %s80
    %p87 = scmp.eq.s32.totalorder %s14, 1
    %p88 = por %p86, %p87
    %p89 = scmp.ne.s32.totalorder %s80, %s81
    %p90 = scmp.eq.s32.totalorder %s14, 0
    %p91 = por %p89, %p90
    %p92 = scmp.ne.s32.totalorder %s80, %s81
    %p93 = scmp.eq.s32.totalorder %s15, 1
    %p94 = por %p92, %p93
    %p96 = scmp.ne.s32.totalorder %s81, %s95
    %p97 = scmp.eq.s32.totalorder %s15, 0
    %p98 = por %p96, %p97
    %s99 = ssub.s32 %s16, %s28
    %s100 = ssub.s32 %s17, %s24
    %s101 = sor.u32 %s99, %s100
    %p102 = scmp.eq.s32.totalorder %s101, 0
    %s104 = sadd.s32 %s103, 1
    %s105 = scalar_select %p102, %s103, %s104
    %p108 = pneg %p102
    %p109 = scmp.eq.s32.totalorder %s9, 1
    %p110 = por %p108, %p109
    %p111 = scmp.ne.s32.totalorder %s103, %s106
    %p112 = scmp.eq.s32.totalorder %s9, 0
    %p113 = por %p111, %p112
    %p114 = scmp.ne.s32.totalorder %s103, %s106
    %p115 = scmp.eq.s32.totalorder %s14, 1
    %p116 = por %p114, %p115
    %p117 = scmp.ne.s32.totalorder %s106, %s107
    %p118 = scmp.eq.s32.totalorder %s14, 0
    %p119 = por %p117, %p118
    %p120 = scmp.ne.s32.totalorder %s106, %s107
    %p121 = scmp.eq.s32.totalorder %s15, 1
    %p122 = por %p120, %p121
    %p124 = scmp.ne.s32.totalorder %s107, %s123
    %p125 = scmp.eq.s32.totalorder %s15, 0
    %p126 = por %p124, %p125
    %p127 = scmp.le.s32.totalorder 1, %s9
    %p128 = scmp.lt.s32.totalorder %s9, 3
    %p129 = pnand %p127, %p128
    %p130 = pneg %p129
    // Predicated region
    $region9: #{_lambda_.16} parent=5 // pred_check
      _
    $region10: #{_lambda_.16} parent=5 // pred_check_branch
      %132 = sbr.rel (%p129) target = $region12
    $region11: #{_lambda_.16} parent=5 // pred_region
      %s133 = ssub.s32 %s9, 1
      // Predicated region
      $region13: #{_lambda_.16} parent=11 // pred_check
        %p134 = pneg %p70
      $region14: #{_lambda_.16} parent=11 // pred_check_branch
        %136 = sbr.rel (%p134) target = $region16
      $region15: #{_lambda_.16} parent=11 // pred_region
        _
      $region16: #{_lambda_.16} parent=11 // pred_fallthru
        _
      // Predicated region
      $region17: #{_lambda_.16} parent=11 // pred_check
        %p137 = pneg %p91
      $region18: #{_lambda_.16} parent=11 // pred_check_branch
        %139 = sbr.rel (%p137) target = $region20
      $region19: #{_lambda_.16} parent=11 // pred_region
        _
      $region20: #{_lambda_.16} parent=11 // pred_fallthru
        _
    $region12: #{_lambda_.16} parent=5 // pred_fallthru
      _
    %p140 = scmp.lt.s32.totalorder %s9, 2
    // Predicated region
    $region21: #{_lambda_.16} parent=5 // pred_check
      %p141 = pneg %p140
    $region22: #{_lambda_.16} parent=5 // pred_check_branch
      %143 = sbr.rel (%p141) target = $region24
    $region23: #{_lambda_.16} parent=5 // pred_region
      // Predicated region
      $region25: #{_lambda_.16} parent=23 // pred_check
        %p144 = pneg %p43
      $region26: #{_lambda_.16} parent=23 // pred_check_branch
        %146 = sbr.rel (%p144) target = $region28
      $region27: #{_lambda_.16} parent=23 // pred_region
        %s147 = smul.u32 11, %s17
        %p148 = scmp.lt.s32.totalorder %s16, 1
        %s149 = scalar_select %p148, %s16, 1
        %p150 = scmp.lt.s32.totalorder %s147, 10
        %s151 = scalar_select %p150, %s147, 10
        %s152 = smul.addr %s151, 2
        %s153 = smul.addr %s149, 22
        %s154 = sadd.s32 %s152, %s153
        %s155 = smul.addr %s154, 4
        %s156 = scalar_lea.vmem %s0, %s155
        %s157 = smul.u32 11, %s17
      $region28: #{_lambda_.16} parent=23 // pred_fallthru
        _
    $region24: #{_lambda_.16} parent=5 // pred_fallthru
      _
    %p158 = scmp.le.s32.totalorder 1, %s9
    %p159 = scmp.lt.s32.totalorder %s9, 3
    %p160 = pnand %p158, %p159
    %p161 = pneg %p160
    // Predicated region
    $region29: #{_lambda_.16} parent=5 // pred_check
      _
    $region30: #{_lambda_.16} parent=5 // pred_check_branch
      %163 = sbr.rel (%p160) target = $region32
    $region31: #{_lambda_.16} parent=5 // pred_region
      %s164 = ssub.s32 %s9, 1
      %s165 = smul.u32 11, %s19
      %p166 = scmp.lt.s32.totalorder %s18, 1
      %s167 = scalar_select %p166, %s18, 1
      %p168 = scmp.lt.s32.totalorder %s165, 10
      %s169 = scalar_select %p168, %s165, 10
      %s170 = smul.addr %s169, 2
      %s171 = smul.addr %s167, 22
      %s172 = sadd.s32 %s170, %s171
      %s173 = smul.addr %s172, 4
      %s174 = scalar_lea.vmem %s0, %s173
      %p175 = pneg %p49
      %p176 = pneg %p46
      %p177 = pneg %p70
      %p178 = pneg %p67
      %p179 = pneg %p91
      %p180 = pneg %p88
      %p181 = pneg %p119
      %p182 = pneg %p116
      %s183 = smul.u32 11, %s19
      %p184 = scmp.lt.s32.totalorder %s18, 1
      %s185 = scalar_select %p184, %s18, 1
      %p186 = scmp.lt.s32.totalorder %s183, 10
      %s187 = scalar_select %p186, %s183, 10
      %s188 = smul.addr %s185, 11
      %s189 = sadd.s32 %s187, %s188
      %s190 = smul.addr %s189, 4
      %s191 = scalar_lea.vmem %s3, %s190
      %s192 = smul.u32 11, %s19
      %p193 = scmp.lt.s32.totalorder %s18, 1
      %s194 = scalar_select %p193, %s18, 1
      %p195 = scmp.lt.s32.totalorder %s192, 10
      %s196 = scalar_select %p195, %s192, 10
      %s197 = smul.addr %s196, 2
      %s198 = smul.addr %s194, 22
      %s199 = sadd.s32 %s197, %s198
      %s200 = smul.addr %s199, 4
      %s201 = scalar_lea.vmem %s0, %s200
      %s202 = smul.u32 11, %s19
      %s203 = smul.u32 11, %s19
      %p204 = scmp.lt.s32.totalorder %s18, 1
      %s205 = scalar_select %p204, %s18, 1
      %p206 = scmp.lt.s32.totalorder %s203, 10
      %s207 = scalar_select %p206, %s203, 10
      %s208 = smul.addr %s205, 11
      %s209 = sadd.s32 %s207, %s208
      %s210 = smul.addr %s209, 4
      %s211 = scalar_lea.vmem %s3, %s210
      %s212 = smul.u32 11, %s19
      %v214 = vld [vmem:[%s201] sm:$0xff]
      %v215 = vld [vmem:[%s201 + $0x8] sm:$0xff]
      %v216 = vld [vmem:[%s201 + $0x10] sm:$0xff]
      %v217 = vld [vmem:[%s201 + $0x18] sm:$0xff]
      %v218 = vld [vmem:[%s201 + $0x20] sm:$0xff]
      %v219 = vld [vmem:[%s201 + $0x28] sm:$0xff]
      %v220 = vld [vmem:[%s201 + $0x30] sm:$0xff]
      %v221 = vld [vmem:[%s201 + $0x38] sm:$0xff]
      %v222 = vld [vmem:[%s201 + $0x40] sm:$0xff]
      %v223 = vld [vmem:[%s201 + $0x48] sm:$0xff]
      %v224 = vld [vmem:[%s201 + $0x50] sm:$0xff]
      %v225 = vld [vmem:[%s1] sm:$0xf]
      %v226 = vld [vmem:[%s1 + $0x4] sm:$0xf]
      %v227 = vld [vmem:[%s1 + $0x8] sm:$0xf]
      %v228 = vld [vmem:[%s1 + $0xc] sm:$0xf]
      %v229 = vld [vmem:[%s1 + $0x10] sm:$0xf]
      %v230 = vld [vmem:[%s1 + $0x14] sm:$0xf]
      %v231 = vld [vmem:[%s1 + $0x18] sm:$0xf]
      %v232 = vld [vmem:[%s1 + $0x1c] sm:$0xf]
      %v233 = vld [vmem:[%s1 + $0x20] sm:$0xf]
      %v234 = vld [vmem:[%s1 + $0x24] sm:$0xf]
      %v235 = vld [vmem:[%s1 + $0x28] sm:$0xf]
      %v236 = vld [vmem:[%s1 + $0x2c] sm:$0xf]
      %v237 = vld [vmem:[%s1 + $0x30] sm:$0xf]
      %v238 = vld [vmem:[%s1 + $0x34] sm:$0xf]
      %v239 = vld [vmem:[%s1 + $0x38] sm:$0xf]
      %v240 = vld [vmem:[%s1 + $0x3c] sm:$0xf]
      %v241 = vld [vmem:[%s1 + $0x40] sm:$0xf]
      %v242 = vld [vmem:[%s1 + $0x44] sm:$0xf]
      %v243 = vld [vmem:[%s1 + $0x48] sm:$0xf]
      %v244 = vld [vmem:[%s1 + $0x4c] sm:$0xf]
      %v245 = vld [vmem:[%s1 + $0x50] sm:$0xf]
      %v246 = vld [vmem:[%s1 + $0x54] sm:$0xf]
      %v247 = vld [vmem:[%s1 + $0x58] sm:$0xf]
      %v248 = vld [vmem:[%s1 + $0x5c] sm:$0xf]
      %v249 = vld [vmem:[%s1 + $0x60] sm:$0xf]
      %v250 = vld [vmem:[%s1 + $0x64] sm:$0xf]
      %v251 = vld [vmem:[%s1 + $0x68] sm:$0xf]
      %v252 = vld [vmem:[%s1 + $0x6c] sm:$0xf]
      %v253 = vld [vmem:[%s1 + $0x70] sm:$0xf]
      %v254 = vld [vmem:[%s1 + $0x74] sm:$0xf]
      %v255 = vld [vmem:[%s1 + $0x78] sm:$0xf]
      %v256 = vld [vmem:[%s1 + $0x7c] sm:$0xf]
      %v257 = vld [vmem:[%s2] sm:$0x1]
      %v259 = vlaneseq
      %v260 = vshrl.u32 %v259, 7
      %v261 = vsub.s32 0, %v260
      %v262 = vrot.slane %v257, %v261
      %v275 = vunpack.c.l.b16 %v214
      %v276 = vunpack.c.h.b16 %v214
      %v277 = vunpack.c.l.b16 %v215
      %v278 = vunpack.c.h.b16 %v215
      %v279 = vunpack.c.l.b16 %v216
      %v280 = vunpack.c.h.b16 %v216
      %v281 = vunpack.c.l.b16 %v217
      %v282 = vunpack.c.h.b16 %v217
      %v283 = vunpack.c.l.b16 %v218
      %v284 = vunpack.c.h.b16 %v218
      %v285 = vunpack.c.l.b16 %v219
      %v286 = vunpack.c.h.b16 %v219
      %v287 = vunpack.c.l.b16 %v220
      %v288 = vunpack.c.h.b16 %v220
      %v289 = vunpack.c.l.b16 %v221
      %v290 = vunpack.c.h.b16 %v221
      %v291 = vunpack.c.l.b16 %v222
      %v292 = vunpack.c.h.b16 %v222
      %v293 = vunpack.c.l.b16 %v223
      %v294 = vunpack.c.h.b16 %v223
      %v295 = vunpack.c.l.b16 %v224
      %v296 = vunpack.c.h.b16 %v224
      %v297 = vpack.c.b16 %v277, %v275
      %v298 = vpack.c.b16 %v278, %v276
      %v299 = vpack.c.b16 %v281, %v279
      %v300 = vpack.c.b16 %v282, %v280
      %v301 = vpack.c.b16 %v285, %v283
      %v302 = vpack.c.b16 %v286, %v284
      %v303 = vpack.c.b16 %v289, %v287
      %v304 = vpack.c.b16 %v290, %v288
      %v305 = vpack.c.b16 %v293, %v291
      %v306 = vpack.c.b16 %v294, %v292
      %v307 = vpack.c.b16 %v295, %v295
      %v308 = vpack.c.b16 %v296, %v296
      %v353 = vunpack.c.l.b16 %v225
      %v354 = vunpack.c.l.b16 %v226
      %v355 = vunpack.c.l.b16 %v227
      %v356 = vunpack.c.l.b16 %v228
      %v357 = vunpack.c.l.b16 %v229
      %v358 = vunpack.c.l.b16 %v230
      %v359 = vunpack.c.l.b16 %v231
      %v360 = vunpack.c.l.b16 %v232
      %v361 = vunpack.c.l.b16 %v233
      %v362 = vunpack.c.l.b16 %v234
      %v363 = vunpack.c.l.b16 %v235
      %v364 = vunpack.c.l.b16 %v236
      %v365 = vunpack.c.l.b16 %v237
      %v366 = vunpack.c.l.b16 %v238
      %v367 = vunpack.c.l.b16 %v239
      %v368 = vunpack.c.l.b16 %v240
      %v369 = vunpack.c.l.b16 %v241
      %v370 = vunpack.c.l.b16 %v242
      %v371 = vunpack.c.l.b16 %v243
      %v372 = vunpack.c.l.b16 %v244
      %v373 = vunpack.c.l.b16 %v245
      %v374 = vunpack.c.l.b16 %v246
      %v375 = vunpack.c.l.b16 %v247
      %v376 = vunpack.c.l.b16 %v248
      %v377 = vunpack.c.l.b16 %v249
      %v378 = vunpack.c.l.b16 %v250
      %v379 = vunpack.c.l.b16 %v251
      %v380 = vunpack.c.l.b16 %v252
      %v381 = vunpack.c.l.b16 %v253
      %v382 = vunpack.c.l.b16 %v254
      %v383 = vunpack.c.l.b16 %v255
      %v384 = vunpack.c.l.b16 %v256
      %v385 = vpack.c.b16 %v354, %v353
      %v386 = vpack.c.b16 %v356, %v355
      %v387 = vpack.c.b16 %v358, %v357
      %v388 = vpack.c.b16 %v360, %v359
      %v389 = vpack.c.b16 %v362, %v361
      %v390 = vpack.c.b16 %v364, %v363
      %v391 = vpack.c.b16 %v366, %v365
      %v392 = vpack.c.b16 %v368, %v367
      %v393 = vpack.c.b16 %v370, %v369
      %v394 = vpack.c.b16 %v372, %v371
      %v395 = vpack.c.b16 %v374, %v373
      %v396 = vpack.c.b16 %v376, %v375
      %v397 = vpack.c.b16 %v378, %v377
      %v398 = vpack.c.b16 %v380, %v379
      %v399 = vpack.c.b16 %v382, %v381
      %v400 = vpack.c.b16 %v384, %v383
      %417 = vmatprep.subr.bf16.mxu0 0
      %418 = vmatpush1.bf16.msra.mxu0 %v385
      %419 = vmatprep.subr.bf16.mxu0 0
      %420 = vmatpush1.bf16.msra.mxu0 %v386
      %421 = vmatprep.subr.bf16.mxu0 0
      %422 = vmatpush1.bf16.msra.mxu0 %v387
      %423 = vmatprep.subr.bf16.mxu0 0
      %424 = vmatpush1.bf16.msra.mxu0 %v388
      %425 = vmatprep.subr.bf16.mxu0 0
      %426 = vmatpush1.bf16.msra.mxu0 %v389
      %427 = vmatprep.subr.bf16.mxu0 0
      %428 = vmatpush1.bf16.msra.mxu0 %v390
      %429 = vmatprep.subr.bf16.mxu0 0
      %430 = vmatpush1.bf16.msra.mxu0 %v391
      %431 = vmatprep.subr.bf16.mxu0 0
      %432 = vmatpush1.bf16.msra.mxu0 %v392
      %433 = vmatprep.subr.bf16.mxu0 0
      %434 = vmatpush1.bf16.msra.mxu0 %v393
      %435 = vmatprep.subr.bf16.mxu0 0
      %436 = vmatpush1.bf16.msra.mxu0 %v394
      %437 = vmatprep.subr.bf16.mxu0 0
      %438 = vmatpush1.bf16.msra.mxu0 %v395
      %439 = vmatprep.subr.bf16.mxu0 0
      %440 = vmatpush1.bf16.msra.mxu0 %v396
      %441 = vmatprep.subr.bf16.mxu0 0
      %442 = vmatpush1.bf16.msra.mxu0 %v397
      %443 = vmatprep.subr.bf16.mxu0 0
      %444 = vmatpush1.bf16.msra.mxu0 %v398
      %445 = vmatprep.subr.bf16.mxu0 0
      %446 = vmatpush1.bf16.msra.mxu0 %v399
      %447 = vmatprep.subr.bf16.mxu0 0
      %448 = vmatpush1.bf16.msra.mxu0 %v400
      %449 = vmatprep.mubr.bf16.mxu0 %v298
      %450 = vmatmul.mubr.bf16.gmra.mrb[0].mxu0 %v297
      %v451 = vpop.f32.mrb[0].mxu0
      %v452 = vadd.f32 %v262, %v451
      %v453 = vpop.f32.mrb[0].mxu0
      %v454 = vpop.f32.mrb[0].mxu0
      %v455 = vadd.f32 %v262, %v454
      %v456 = vpop.f32.mrb[0].mxu0
      %457 = vmatprep.mubr.bf16.mxu0 %v300
      %458 = vmatmul.mubr.bf16.gmra.mrb[0].mxu0 %v299
      %v459 = vpop.f32.mrb[0].mxu0
      %v460 = vadd.f32 %v262, %v459
      %v461 = vpop.f32.mrb[0].mxu0
      %v462 = vpop.f32.mrb[0].mxu0
      %v463 = vadd.f32 %v262, %v462
      %v464 = vpop.f32.mrb[0].mxu0
      %465 = vmatprep.mubr.bf16.mxu0 %v302
      %466 = vmatmul.mubr.bf16.gmra.mrb[0].mxu0 %v301
      %v467 = vpop.f32.mrb[0].mxu0
      %v468 = vadd.f32 %v262, %v467
      %v469 = vpop.f32.mrb[0].mxu0
      %v470 = vpop.f32.mrb[0].mxu0
      %v471 = vadd.f32 %v262, %v470
      %v472 = vpop.f32.mrb[0].mxu0
      %473 = vmatprep.mubr.bf16.mxu0 %v304
      %474 = vmatmul.mubr.bf16.gmra.mrb[0].mxu0 %v303
      %v475 = vpop.f32.mrb[0].mxu0
      %v476 = vadd.f32 %v262, %v475
      %v477 = vpop.f32.mrb[0].mxu0
      %v478 = vpop.f32.mrb[0].mxu0
      %v479 = vadd.f32 %v262, %v478
      %v480 = vpop.f32.mrb[0].mxu0
      %481 = vmatprep.mubr.bf16.mxu0 %v306
      %482 = vmatmul.mubr.bf16.gmra.mrb[0].mxu0 %v305
      %v483 = vpop.f32.mrb[0].mxu0
      %v484 = vadd.f32 %v262, %v483
      %v485 = vpop.f32.mrb[0].mxu0
      %v486 = vpop.f32.mrb[0].mxu0
      %v487 = vadd.f32 %v262, %v486
      %v488 = vpop.f32.mrb[0].mxu0
      %489 = vmatprep.mubr.bf16.mxu0 %v308
      %490 = vmatmul.mubr.bf16.gmra.mrb[0].mxu0 %v307
      %v491 = vpop.f32.mrb[0].mxu0
      %v492 = vadd.f32 %v262, %v491
      %v493 = vpop.f32.mrb[0].mxu0
      %v494 = vpop.f32.mrb[0].mxu0
      %v495 = vpop.f32.mrb[0].mxu0
      %496 = vdwg.mxu0
      %v497 = vpack.c.bf16 %v455, %v452
      %v498 = vpack.c.bf16 %v463, %v460
      %v499 = vpack.c.bf16 %v471, %v468
      %v500 = vpack.c.bf16 %v479, %v476
      %v501 = vpack.c.bf16 %v487, %v484
      %v502 = vpack.c.bf16 %v492, %v492
      %v509 = vunpack.c.l.b16 %v497
      %v510 = vunpack.c.h.b16 %v497
      %v511 = vunpack.c.l.b16 %v498
      %v512 = vunpack.c.h.b16 %v498
      %v513 = vunpack.c.l.b16 %v499
      %v514 = vunpack.c.h.b16 %v499
      %v515 = vunpack.c.l.b16 %v500
      %v516 = vunpack.c.h.b16 %v500
      %v517 = vunpack.c.l.b16 %v501
      %v518 = vunpack.c.h.b16 %v501
      %v519 = vunpack.c.l.b16 %v502
      %v520 = vpack.c.b16 %v509, %v509
      %v521 = vpack.c.b16 %v510, %v510
      %v522 = vpack.c.b16 %v511, %v511
      %v523 = vpack.c.b16 %v512, %v512
      %v524 = vpack.c.b16 %v513, %v513
      %v525 = vpack.c.b16 %v514, %v514
      %v526 = vpack.c.b16 %v515, %v515
      %v527 = vpack.c.b16 %v516, %v516
      %v528 = vpack.c.b16 %v517, %v517
      %v529 = vpack.c.b16 %v518, %v518
      %v530 = vpack.c.b16 %v519, %v519
      %542 = vst [vmem:[%s211] sm:$0xf] %v520
      %543 = vst [vmem:[%s211 + $0x4] sm:$0xf] %v521
      %544 = vst [vmem:[%s211 + $0x8] sm:$0xf] %v522
      %545 = vst [vmem:[%s211 + $0xc] sm:$0xf] %v523
      %546 = vst [vmem:[%s211 + $0x10] sm:$0xf] %v524
      %547 = vst [vmem:[%s211 + $0x14] sm:$0xf] %v525
      %548 = vst [vmem:[%s211 + $0x18] sm:$0xf] %v526
      %549 = vst [vmem:[%s211 + $0x1c] sm:$0xf] %v527
      %550 = vst [vmem:[%s211 + $0x20] sm:$0xf] %v528
      %551 = vst [vmem:[%s211 + $0x24] sm:$0xf] %v529
      %552 = vst [vmem:[%s211 + $0x28] sm:$0xf] %v530
      %s553 = smul.u32 11, %s19
      %p554 = scmp.lt.s32.totalorder %s18, 1
      %s555 = scalar_select %p554, %s18, 1
      %p556 = scmp.lt.s32.totalorder %s553, 10
      %s557 = scalar_select %p556, %s553, 10
      %s558 = smul.addr %s555, 11
      %s559 = sadd.s32 %s557, %s558
      %s560 = smul.addr %s559, 4
      %s561 = scalar_lea.vmem %s3, %s560
      // Predicated region
      $region33: #{_lambda_.16} parent=31 // pred_check
        %p562 = pneg %p116
      $region34: #{_lambda_.16} parent=31 // pred_check_branch
        %564 = sbr.rel (%p562) target = $region36
      $region35: #{_lambda_.16} parent=31 // pred_region
        %s565 = smul.u32 11, %s19
      $region36: #{_lambda_.16} parent=31 // pred_fallthru
        _
    $region32: #{_lambda_.16} parent=5 // pred_fallthru
      _
    %p566 = scmp.le.s32.totalorder 2, %s9
    // Predicated region
    $region37: #{_lambda_.16} parent=5 // pred_check
      %p567 = pneg %p566
    $region38: #{_lambda_.16} parent=5 // pred_check_branch
      %569 = sbr.rel (%p567) target = $region40
    $region39: #{_lambda_.16} parent=5 // pred_region
      %s570 = ssub.s32 %s9, 2
      // Predicated region
      $region41: #{_lambda_.16} parent=39 // pred_check
        %p571 = pneg %p122
      $region42: #{_lambda_.16} parent=39 // pred_check_branch
        %573 = sbr.rel (%p571) target = $region44
      $region43: #{_lambda_.16} parent=39 // pred_region
        %s574 = smul.u32 11, %s21
        %p575 = scmp.lt.s32.totalorder %s20, 1
        %s576 = scalar_select %p575, %s20, 1
        %p577 = scmp.lt.s32.totalorder %s574, 10
        %s578 = scalar_select %p577, %s574, 10
        %s579 = smul.addr %s576, 11
        %s580 = sadd.s32 %s578, %s579
        %s581 = smul.addr %s580, 4
        %s582 = scalar_lea.vmem %s3, %s581
      $region44: #{_lambda_.16} parent=39 // pred_fallthru
        _
    $region40: #{_lambda_.16} parent=5 // pred_fallthru
      _
  $region6: #{_lambda_.16} parent=0 // loop_footer
    %s13 = sadd.s32 1, %s9
  $region7: #{_lambda_.16} parent=0 // loop_footer_branch
    %8 = sbr.rel target = $region3
  $region8: #{_lambda_.16} parent=0 // loop_exit
    _

// kernel: _lambda_.18
$region0: #{_lambda_.18}
  #allocation0 [shape = 'u32[]', space=smem, size = 0x4, offset = 0x4, fixed_abs, tag = 'smem constant byte address 0x4 - core index']
  #allocation1 [shape = 'u32[144,128]{1,0:T(1,128)}', space=vmem, size = 0x12000, scoped, tag = 'internal scratch']
  %s0 = inlined_call_operand.vmem [shape: bf16[2,88,256], index: 0, kind: input, shape index: {}]
  %s1 = inlined_call_operand.vmem [shape: bf16[256,128], index: 1, kind: input, shape index: {}]
  %s2 = inlined_call_operand.vmem [shape: f32[1,128], index: 2, kind: input, shape index: {}]
  %s3 = inlined_call_operand.vmem [shape: bf16[2,88,128], index: 3, kind: output, shape index: {}]
  %s4 = sld [smem:[#allocation0]]
  $region45: #{_lambda_.18} parent=0
    _
  %s6 = ssub.s32 1, %s4
  %s7 = scalar_select 0, %s6, %s4
  loop: start=0, step=1, limit=4
  $region2: #{_lambda_.18} parent=0 // loop_pre_header
    _
  $region3: #{_lambda_.18} parent=0 // loop_header
    %s9 = sphi 0, %s13
    %p10 = scmp.ge.s32.totalorder %s9, 4
    %s16 = sphi 0, %s28
    %s17 = sphi 0, %s24
    %s18 = sphi 0, %s16
    %s19 = sphi 0, %s17
    %s20 = sphi 0, %s18
    %s21 = sphi 0, %s19
    %s33 = sphi 0, %s35
    %s36 = sphi 0, %s33
    %s37 = sphi 0, %s36
    %s53 = sphi 0, %s37
    %s57 = sphi 0, %s57
    %s59 = sphi 0, %s57
    %s60 = sphi 0, %s59
    %s74 = sphi 0, %s60
    %s78 = sphi 0, %s78
    %s80 = sphi 0, %s78
    %s81 = sphi 0, %s80
    %s95 = sphi 0, %s81
    %s103 = sphi 0, %s105
    %s106 = sphi 0, %s103
    %s107 = sphi 0, %s106
    %s123 = sphi 0, %s107
  $region4: #{_lambda_.18} parent=0 // loop_header_branch
    %12 = sbr.rel (%p10) target = $region8
  $region5: #{_lambda_.18} parent=0 // loop_body
    %s14 = ssub.s32 %s9, 1
    %s15 = ssub.s32 %s9, 2
    %s22 = sadd.s32 1, %s17
    %p23 = scmp.ge.s32.totalorder %s22, 1
    %s24 = scalar_select %p23, 0, %s22
    %s25 = sadd.s32 1, %s16
    %s26 = scalar_select %p23, %s25, %s16
    %p27 = scmp.ge.s32.totalorder %s26, 2
    %s28 = scalar_select %p27, 0, %s26
    %s29 = ssub.s32 %s16, %s28
    %s30 = ssub.s32 %s17, %s24
    %s31 = sor.u32 %s29, %s30
    %p32 = scmp.eq.s32.totalorder %s31, 0
    %s34 = sadd.s32 %s33, 1
    %s35 = scalar_select %p32, %s33, %s34
    %p38 = pneg %p32
    %p39 = scmp.eq.s32.totalorder %s9, 1
    %p40 = por %p38, %p39
    %p41 = scmp.ne.s32.totalorder %s33, %s36
    %p42 = scmp.eq.s32.totalorder %s9, 0
    %p43 = por %p41, %p42
    %p44 = scmp.ne.s32.totalorder %s33, %s36
    %p45 = scmp.eq.s32.totalorder %s14, 1
    %p46 = por %p44, %p45
    %p47 = scmp.ne.s32.totalorder %s36, %s37
    %p48 = scmp.eq.s32.totalorder %s14, 0
    %p49 = por %p47, %p48
    %p50 = scmp.ne.s32.totalorder %s36, %s37
    %p51 = scmp.eq.s32.totalorder %s15, 1
    %p52 = por %p50, %p51
    %p54 = scmp.ne.s32.totalorder %s37, %s53
    %p55 = scmp.eq.s32.totalorder %s15, 0
    %p56 = por %p54, %p55
    %s58 = sadd.s32 %s57, 1
    %p61 = scmp.eq.s32.totalorder %s9, 1
    %p62 = scmp.ne.s32.totalorder %s57, %s59
    %p63 = scmp.eq.s32.totalorder %s9, 0
    %p64 = por %p62, %p63
    %p65 = scmp.ne.s32.totalorder %s57, %s59
    %p66 = scmp.eq.s32.totalorder %s14, 1
    %p67 = por %p65, %p66
    %p68 = scmp.ne.s32.totalorder %s59, %s60
    %p69 = scmp.eq.s32.totalorder %s14, 0
    %p70 = por %p68, %p69
    %p71 = scmp.ne.s32.totalorder %s59, %s60
    %p72 = scmp.eq.s32.totalorder %s15, 1
    %p73 = por %p71, %p72
    %p75 = scmp.ne.s32.totalorder %s60, %s74
    %p76 = scmp.eq.s32.totalorder %s15, 0
    %p77 = por %p75, %p76
    %s79 = sadd.s32 %s78, 1
    %p82 = scmp.eq.s32.totalorder %s9, 1
    %p83 = scmp.ne.s32.totalorder %s78, %s80
    %p84 = scmp.eq.s32.totalorder %s9, 0
    %p85 = por %p83, %p84
    %p86 = scmp.ne.s32.totalorder %s78, %s80
    %p87 = scmp.eq.s32.totalorder %s14, 1
    %p88 = por %p86, %p87
    %p89 = scmp.ne.s32.totalorder %s80, %s81
    %p90 = scmp.eq.s32.totalorder %s14, 0
    %p91 = por %p89, %p90
    %p92 = scmp.ne.s32.totalorder %s80, %s81
    %p93 = scmp.eq.s32.totalorder %s15, 1
    %p94 = por %p92, %p93
    %p96 = scmp.ne.s32.totalorder %s81, %s95
    %p97 = scmp.eq.s32.totalorder %s15, 0
    %p98 = por %p96, %p97
    %s99 = ssub.s32 %s16, %s28
    %s100 = ssub.s32 %s17, %s24
    %s101 = sor.u32 %s99, %s100
    %p102 = scmp.eq.s32.totalorder %s101, 0
    %s104 = sadd.s32 %s103, 1
    %s105 = scalar_select %p102, %s103, %s104
    %p108 = pneg %p102
    %p109 = scmp.eq.s32.totalorder %s9, 1
    %p110 = por %p108, %p109
    %p111 = scmp.ne.s32.totalorder %s103, %s106
    %p112 = scmp.eq.s32.totalorder %s9, 0
    %p113 = por %p111, %p112
    %p114 = scmp.ne.s32.totalorder %s103, %s106
    %p115 = scmp.eq.s32.totalorder %s14, 1
    %p116 = por %p114, %p115
    %p117 = scmp.ne.s32.totalorder %s106, %s107
    %p118 = scmp.eq.s32.totalorder %s14, 0
    %p119 = por %p117, %p118
    %p120 = scmp.ne.s32.totalorder %s106, %s107
    %p121 = scmp.eq.s32.totalorder %s15, 1
    %p122 = por %p120, %p121
    %p124 = scmp.ne.s32.totalorder %s107, %s123
    %p125 = scmp.eq.s32.totalorder %s15, 0
    %p126 = por %p124, %p125
    %p127 = scmp.le.s32.totalorder 1, %s9
    %p128 = scmp.lt.s32.totalorder %s9, 3
    %p129 = pnand %p127, %p128
    %p130 = pneg %p129
    // Predicated region
    $region9: #{_lambda_.18} parent=5 // pred_check
      _
    $region10: #{_lambda_.18} parent=5 // pred_check_branch
      %132 = sbr.rel (%p129) target = $region12
    $region11: #{_lambda_.18} parent=5 // pred_region
      %s133 = ssub.s32 %s9, 1
      // Predicated region
      $region13: #{_lambda_.18} parent=11 // pred_check
        %p134 = pneg %p70
      $region14: #{_lambda_.18} parent=11 // pred_check_branch
        %136 = sbr.rel (%p134) target = $region16
      $region15: #{_lambda_.18} parent=11 // pred_region
        _
      $region16: #{_lambda_.18} parent=11 // pred_fallthru
        _
      // Predicated region
      $region17: #{_lambda_.18} parent=11 // pred_check
        %p137 = pneg %p91
      $region18: #{_lambda_.18} parent=11 // pred_check_branch
        %139 = sbr.rel (%p137) target = $region20
      $region19: #{_lambda_.18} parent=11 // pred_region
        _
      $region20: #{_lambda_.18} parent=11 // pred_fallthru
        _
    $region12: #{_lambda_.18} parent=5 // pred_fallthru
      _
    %p140 = scmp.lt.s32.totalorder %s9, 2
    // Predicated region
    $region21: #{_lambda_.18} parent=5 // pred_check
      %p141 = pneg %p140
    $region22: #{_lambda_.18} parent=5 // pred_check_branch
      %143 = sbr.rel (%p141) target = $region24
    $region23: #{_lambda_.18} parent=5 // pred_region
      // Predicated region
      $region25: #{_lambda_.18} parent=23 // pred_check
        %p144 = pneg %p43
      $region26: #{_lambda_.18} parent=23 // pred_check_branch
        %146 = sbr.rel (%p144) target = $region28
      $region27: #{_lambda_.18} parent=23 // pred_region
        %s147 = smul.u32 11, %s17
        %p148 = scmp.lt.s32.totalorder %s16, 1
        %s149 = scalar_select %p148, %s16, 1
        %p150 = scmp.lt.s32.totalorder %s147, 10
        %s151 = scalar_select %p150, %s147, 10
        %s152 = smul.addr %s151, 2
        %s153 = smul.addr %s149, 22
        %s154 = sadd.s32 %s152, %s153
        %s155 = smul.addr %s154, 4
        %s156 = scalar_lea.vmem %s0, %s155
        %s157 = smul.u32 11, %s17
      $region28: #{_lambda_.18} parent=23 // pred_fallthru
        _
    $region24: #{_lambda_.18} parent=5 // pred_fallthru
      _
    %p158 = scmp.le.s32.totalorder 1, %s9
    %p159 = scmp.lt.s32.totalorder %s9, 3
    %p160 = pnand %p158, %p159
    %p161 = pneg %p160
    // Predicated region
    $region29: #{_lambda_.18} parent=5 // pred_check
      _
    $region30: #{_lambda_.18} parent=5 // pred_check_branch
      %163 = sbr.rel (%p160) target = $region32
    $region31: #{_lambda_.18} parent=5 // pred_region
      %s164 = ssub.s32 %s9, 1
      %s165 = smul.u32 11, %s19
      %p166 = scmp.lt.s32.totalorder %s18, 1
      %s167 = scalar_select %p166, %s18, 1
      %p168 = scmp.lt.s32.totalorder %s165, 10
      %s169 = scalar_select %p168, %s165, 10
      %s170 = smul.addr %s169, 2
      %s171 = smul.addr %s167, 22
      %s172 = sadd.s32 %s170, %s171
      %s173 = smul.addr %s172, 4
      %s174 = scalar_lea.vmem %s0, %s173
      %p175 = pneg %p49
      %p176 = pneg %p46
      %p177 = pneg %p70
      %p178 = pneg %p67
      %p179 = pneg %p91
      %p180 = pneg %p88
      %p181 = pneg %p119
      %p182 = pneg %p116
      %s183 = smul.u32 11, %s19
      %p184 = scmp.lt.s32.totalorder %s18, 1
      %s185 = scalar_select %p184, %s18, 1
      %p186 = scmp.lt.s32.totalorder %s183, 10
      %s187 = scalar_select %p186, %s183, 10
      %s188 = smul.addr %s185, 11
      %s189 = sadd.s32 %s187, %s188
      %s190 = smul.addr %s189, 4
      %s191 = scalar_lea.vmem %s3, %s190
      %s192 = smul.u32 11, %s19
      %p193 = scmp.lt.s32.totalorder %s18, 1
      %s194 = scalar_select %p193, %s18, 1
      %p195 = scmp.lt.s32.totalorder %s192, 10
      %s196 = scalar_select %p195, %s192, 10
      %s197 = smul.addr %s196, 2
      %s198 = smul.addr %s194, 22
      %s199 = sadd.s32 %s197, %s198
      %s200 = smul.addr %s199, 4
      %s201 = scalar_lea.vmem %s0, %s200
      %s202 = smul.u32 11, %s19
      %s203 = smul.u32 11, %s19
      %p204 = scmp.lt.s32.totalorder %s18, 1
      %s205 = scalar_select %p204, %s18, 1
      %p206 = scmp.lt.s32.totalorder %s203, 10
      %s207 = scalar_select %p206, %s203, 10
      %s208 = smul.addr %s205, 11
      %s209 = sadd.s32 %s207, %s208
      %s210 = smul.addr %s209, 4
      %s211 = scalar_lea.vmem %s3, %s210
      %s212 = smul.u32 11, %s19
      %v214 = vld [vmem:[%s201] sm:$0xff]
      %v215 = vld [vmem:[%s201 + $0x8] sm:$0xff]
      %v216 = vld [vmem:[%s201 + $0x10] sm:$0xff]
      %v217 = vld [vmem:[%s201 + $0x18] sm:$0xff]
      %v218 = vld [vmem:[%s201 + $0x20] sm:$0xff]
      %v219 = vld [vmem:[%s201 + $0x28] sm:$0xff]
      %v220 = vld [vmem:[%s201 + $0x30] sm:$0xff]
      %v221 = vld [vmem:[%s201 + $0x38] sm:$0xff]
      %v222 = vld [vmem:[%s201 + $0x40] sm:$0xff]
      %v223 = vld [vmem:[%s201 + $0x48] sm:$0xff]
      %v224 = vld [vmem:[%s201 + $0x50] sm:$0xff]
      %v225 = vld [vmem:[%s1] sm:$0xf]
      %v226 = vld [vmem:[%s1 + $0x4] sm:$0xf]
      %v227 = vld [vmem:[%s1 + $0x8] sm:$0xf]
      %v228 = vld [vmem:[%s1 + $0xc] sm:$0xf]
      %v229 = vld [vmem:[%s1 + $0x10] sm:$0xf]
      %v230 = vld [vmem:[%s1 + $0x14] sm:$0xf]
      %v231 = vld [vmem:[%s1 + $0x18] sm:$0xf]
      %v232 = vld [vmem:[%s1 + $0x1c] sm:$0xf]
      %v233 = vld [vmem:[%s1 + $0x20] sm:$0xf]
      %v234 = vld [vmem:[%s1 + $0x24] sm:$0xf]
      %v235 = vld [vmem:[%s1 + $0x28] sm:$0xf]
      %v236 = vld [vmem:[%s1 + $0x2c] sm:$0xf]
      %v237 = vld [vmem:[%s1 + $0x30] sm:$0xf]
      %v238 = vld [vmem:[%s1 + $0x34] sm:$0xf]
      %v239 = vld [vmem:[%s1 + $0x38] sm:$0xf]
      %v240 = vld [vmem:[%s1 + $0x3c] sm:$0xf]
      %v241 = vld [vmem:[%s1 + $0x40] sm:$0xf]
      %v242 = vld [vmem:[%s1 + $0x44] sm:$0xf]
      %v243 = vld [vmem:[%s1 + $0x48] sm:$0xf]
      %v244 = vld [vmem:[%s1 + $0x4c] sm:$0xf]
      %v245 = vld [vmem:[%s1 + $0x50] sm:$0xf]
      %v246 = vld [vmem:[%s1 + $0x54] sm:$0xf]
      %v247 = vld [vmem:[%s1 + $0x58] sm:$0xf]
      %v248 = vld [vmem:[%s1 + $0x5c] sm:$0xf]
      %v249 = vld [vmem:[%s1 + $0x60] sm:$0xf]
      %v250 = vld [vmem:[%s1 + $0x64] sm:$0xf]
      %v251 = vld [vmem:[%s1 + $0x68] sm:$0xf]
      %v252 = vld [vmem:[%s1 + $0x6c] sm:$0xf]
      %v253 = vld [vmem:[%s1 + $0x70] sm:$0xf]
      %v254 = vld [vmem:[%s1 + $0x74] sm:$0xf]
      %v255 = vld [vmem:[%s1 + $0x78] sm:$0xf]
      %v256 = vld [vmem:[%s1 + $0x7c] sm:$0xf]
      %v257 = vld [vmem:[%s2] sm:$0x1]
      %v259 = vlaneseq
      %v260 = vshrl.u32 %v259, 7
      %v261 = vsub.s32 0, %v260
      %v262 = vrot.slane %v257, %v261
      %v275 = vunpack.c.l.b16 %v214
      %v276 = vunpack.c.h.b16 %v214
      %v277 = vunpack.c.l.b16 %v215
      %v278 = vunpack.c.h.b16 %v215
      %v279 = vunpack.c.l.b16 %v216
      %v280 = vunpack.c.h.b16 %v216
      %v281 = vunpack.c.l.b16 %v217
      %v282 = vunpack.c.h.b16 %v217
      %v283 = vunpack.c.l.b16 %v218
      %v284 = vunpack.c.h.b16 %v218
      %v285 = vunpack.c.l.b16 %v219
      %v286 = vunpack.c.h.b16 %v219
      %v287 = vunpack.c.l.b16 %v220
      %v288 = vunpack.c.h.b16 %v220
      %v289 = vunpack.c.l.b16 %v221
      %v290 = vunpack.c.h.b16 %v221
      %v291 = vunpack.c.l.b16 %v222
      %v292 = vunpack.c.h.b16 %v222
      %v293 = vunpack.c.l.b16 %v223
      %v294 = vunpack.c.h.b16 %v223
      %v295 = vunpack.c.l.b16 %v224
      %v296 = vunpack.c.h.b16 %v224
      %v297 = vpack.c.b16 %v277, %v275
      %v298 = vpack.c.b16 %v278, %v276
      %v299 = vpack.c.b16 %v281, %v279
      %v300 = vpack.c.b16 %v282, %v280
      %v301 = vpack.c.b16 %v285, %v283
      %v302 = vpack.c.b16 %v286, %v284
      %v303 = vpack.c.b16 %v289, %v287
      %v304 = vpack.c.b16 %v290, %v288
      %v305 = vpack.c.b16 %v293, %v291
      %v306 = vpack.c.b16 %v294, %v292
      %v307 = vpack.c.b16 %v295, %v295
      %v308 = vpack.c.b16 %v296, %v296
      %v353 = vunpack.c.l.b16 %v225
      %v354 = vunpack.c.l.b16 %v226
      %v355 = vunpack.c.l.b16 %v227
      %v356 = vunpack.c.l.b16 %v228
      %v357 = vunpack.c.l.b16 %v229
      %v358 = vunpack.c.l.b16 %v230
      %v359 = vunpack.c.l.b16 %v231
      %v360 = vunpack.c.l.b16 %v232
      %v361 = vunpack.c.l.b16 %v233
      %v362 = vunpack.c.l.b16 %v234
      %v363 = vunpack.c.l.b16 %v235
      %v364 = vunpack.c.l.b16 %v236
      %v365 = vunpack.c.l.b16 %v237
      %v366 = vunpack.c.l.b16 %v238
      %v367 = vunpack.c.l.b16 %v239
      %v368 = vunpack.c.l.b16 %v240
      %v369 = vunpack.c.l.b16 %v241
      %v370 = vunpack.c.l.b16 %v242
      %v371 = vunpack.c.l.b16 %v243
      %v372 = vunpack.c.l.b16 %v244
      %v373 = vunpack.c.l.b16 %v245
      %v374 = vunpack.c.l.b16 %v246
      %v375 = vunpack.c.l.b16 %v247
      %v376 = vunpack.c.l.b16 %v248
      %v377 = vunpack.c.l.b16 %v249
      %v378 = vunpack.c.l.b16 %v250
      %v379 = vunpack.c.l.b16 %v251
      %v380 = vunpack.c.l.b16 %v252
      %v381 = vunpack.c.l.b16 %v253
      %v382 = vunpack.c.l.b16 %v254
      %v383 = vunpack.c.l.b16 %v255
      %v384 = vunpack.c.l.b16 %v256
      %v385 = vpack.c.b16 %v354, %v353
      %v386 = vpack.c.b16 %v356, %v355
      %v387 = vpack.c.b16 %v358, %v357
      %v388 = vpack.c.b16 %v360, %v359
      %v389 = vpack.c.b16 %v362, %v361
      %v390 = vpack.c.b16 %v364, %v363
      %v391 = vpack.c.b16 %v366, %v365
      %v392 = vpack.c.b16 %v368, %v367
      %v393 = vpack.c.b16 %v370, %v369
      %v394 = vpack.c.b16 %v372, %v371
      %v395 = vpack.c.b16 %v374, %v373
      %v396 = vpack.c.b16 %v376, %v375
      %v397 = vpack.c.b16 %v378, %v377
      %v398 = vpack.c.b16 %v380, %v379
      %v399 = vpack.c.b16 %v382, %v381
      %v400 = vpack.c.b16 %v384, %v383
      %417 = vmatprep.subr.bf16.mxu0 0
      %418 = vmatpush1.bf16.msra.mxu0 %v385
      %419 = vmatprep.subr.bf16.mxu0 0
      %420 = vmatpush1.bf16.msra.mxu0 %v386
      %421 = vmatprep.subr.bf16.mxu0 0
      %422 = vmatpush1.bf16.msra.mxu0 %v387
      %423 = vmatprep.subr.bf16.mxu0 0
      %424 = vmatpush1.bf16.msra.mxu0 %v388
      %425 = vmatprep.subr.bf16.mxu0 0
      %426 = vmatpush1.bf16.msra.mxu0 %v389
      %427 = vmatprep.subr.bf16.mxu0 0
      %428 = vmatpush1.bf16.msra.mxu0 %v390
      %429 = vmatprep.subr.bf16.mxu0 0
      %430 = vmatpush1.bf16.msra.mxu0 %v391
      %431 = vmatprep.subr.bf16.mxu0 0
      %432 = vmatpush1.bf16.msra.mxu0 %v392
      %433 = vmatprep.subr.bf16.mxu0 0
      %434 = vmatpush1.bf16.msra.mxu0 %v393
      %435 = vmatprep.subr.bf16.mxu0 0
      %436 = vmatpush1.bf16.msra.mxu0 %v394
      %437 = vmatprep.subr.bf16.mxu0 0
      %438 = vmatpush1.bf16.msra.mxu0 %v395
      %439 = vmatprep.subr.bf16.mxu0 0
      %440 = vmatpush1.bf16.msra.mxu0 %v396
      %441 = vmatprep.subr.bf16.mxu0 0
      %442 = vmatpush1.bf16.msra.mxu0 %v397
      %443 = vmatprep.subr.bf16.mxu0 0
      %444 = vmatpush1.bf16.msra.mxu0 %v398
      %445 = vmatprep.subr.bf16.mxu0 0
      %446 = vmatpush1.bf16.msra.mxu0 %v399
      %447 = vmatprep.subr.bf16.mxu0 0
      %448 = vmatpush1.bf16.msra.mxu0 %v400
      %449 = vmatprep.mubr.bf16.mxu0 %v298
      %450 = vmatmul.mubr.bf16.gmra.mrb[0].mxu0 %v297
      %v451 = vpop.f32.mrb[0].mxu0
      %v452 = vadd.f32 %v262, %v451
      %v453 = vpop.f32.mrb[0].mxu0
      %v454 = vpop.f32.mrb[0].mxu0
      %v455 = vadd.f32 %v262, %v454
      %v456 = vpop.f32.mrb[0].mxu0
      %457 = vmatprep.mubr.bf16.mxu0 %v300
      %458 = vmatmul.mubr.bf16.gmra.mrb[0].mxu0 %v299
      %v459 = vpop.f32.mrb[0].mxu0
      %v460 = vadd.f32 %v262, %v459
      %v461 = vpop.f32.mrb[0].mxu0
      %v462 = vpop.f32.mrb[0].mxu0
      %v463 = vadd.f32 %v262, %v462
      %v464 = vpop.f32.mrb[0].mxu0
      %465 = vmatprep.mubr.bf16.mxu0 %v302
      %466 = vmatmul.mubr.bf16.gmra.mrb[0].mxu0 %v301
      %v467 = vpop.f32.mrb[0].mxu0
      %v468 = vadd.f32 %v262, %v467
      %v469 = vpop.f32.mrb[0].mxu0
      %v470 = vpop.f32.mrb[0].mxu0
      %v471 = vadd.f32 %v262, %v470
      %v472 = vpop.f32.mrb[0].mxu0
      %473 = vmatprep.mubr.bf16.mxu0 %v304
      %474 = vmatmul.mubr.bf16.gmra.mrb[0].mxu0 %v303
      %v475 = vpop.f32.mrb[0].mxu0
      %v476 = vadd.f32 %v262, %v475
      %v477 = vpop.f32.mrb[0].mxu0
      %v478 = vpop.f32.mrb[0].mxu0
      %v479 = vadd.f32 %v262, %v478
      %v480 = vpop.f32.mrb[0].mxu0
      %481 = vmatprep.mubr.bf16.mxu0 %v306
      %482 = vmatmul.mubr.bf16.gmra.mrb[0].mxu0 %v305
      %v483 = vpop.f32.mrb[0].mxu0
      %v484 = vadd.f32 %v262, %v483
      %v485 = vpop.f32.mrb[0].mxu0
      %v486 = vpop.f32.mrb[0].mxu0
      %v487 = vadd.f32 %v262, %v486
      %v488 = vpop.f32.mrb[0].mxu0
      %489 = vmatprep.mubr.bf16.mxu0 %v308
      %490 = vmatmul.mubr.bf16.gmra.mrb[0].mxu0 %v307
      %v491 = vpop.f32.mrb[0].mxu0
      %v492 = vadd.f32 %v262, %v491
      %v493 = vpop.f32.mrb[0].mxu0
      %v494 = vpop.f32.mrb[0].mxu0
      %v495 = vpop.f32.mrb[0].mxu0
      %496 = vdwg.mxu0
      %vm497 = vcmp.ge.f32.partialorder %v452, 0.0
      %vm498 = vcmp.ge.f32.partialorder %v455, 0.0
      %vm499 = vcmp.ge.f32.partialorder %v460, 0.0
      %vm500 = vcmp.ge.f32.partialorder %v463, 0.0
      %vm501 = vcmp.ge.f32.partialorder %v468, 0.0
      %vm502 = vcmp.ge.f32.partialorder %v471, 0.0
      %vm503 = vcmp.ge.f32.partialorder %v476, 0.0
      %vm504 = vcmp.ge.f32.partialorder %v479, 0.0
      %vm505 = vcmp.ge.f32.partialorder %v484, 0.0
      %vm506 = vcmp.ge.f32.partialorder %v487, 0.0
      %vm507 = vcmp.ge.f32.partialorder %v492, 0.0
      %v508 = vmul.f32 %v452, 0.01
      %v509 = vmul.f32 %v455, 0.01
      %v510 = vmul.f32 %v460, 0.01
      %v511 = vmul.f32 %v463, 0.01
      %v512 = vmul.f32 %v468, 0.01
      %v513 = vmul.f32 %v471, 0.01
      %v514 = vmul.f32 %v476, 0.01
      %v515 = vmul.f32 %v479, 0.01
      %v516 = vmul.f32 %v484, 0.01
      %v517 = vmul.f32 %v487, 0.01
      %v518 = vmul.f32 %v492, 0.01
      %v519 = vsel %vm497, %v452, %v508
      %v520 = vsel %vm498, %v455, %v509
      %v521 = vsel %vm499, %v460, %v510
      %v522 = vsel %vm500, %v463, %v511
      %v523 = vsel %vm501, %v468, %v512
      %v524 = vsel %vm502, %v471, %v513
      %v525 = vsel %vm503, %v476, %v514
      %v526 = vsel %vm504, %v479, %v515
      %v527 = vsel %vm505, %v484, %v516
      %v528 = vsel %vm506, %v487, %v517
      %v529 = vsel %vm507, %v492, %v518
      %v530 = vpack.c.bf16 %v520, %v519
      %v531 = vpack.c.bf16 %v522, %v521
      %v532 = vpack.c.bf16 %v524, %v523
      %v533 = vpack.c.bf16 %v526, %v525
      %v534 = vpack.c.bf16 %v528, %v527
      %v535 = vpack.c.bf16 %v529, %v529
      %v542 = vunpack.c.l.b16 %v530
      %v543 = vunpack.c.h.b16 %v530
      %v544 = vunpack.c.l.b16 %v531
      %v545 = vunpack.c.h.b16 %v531
      %v546 = vunpack.c.l.b16 %v532
      %v547 = vunpack.c.h.b16 %v532
      %v548 = vunpack.c.l.b16 %v533
      %v549 = vunpack.c.h.b16 %v533
      %v550 = vunpack.c.l.b16 %v534
      %v551 = vunpack.c.h.b16 %v534
      %v552 = vunpack.c.l.b16 %v535
      %v553 = vpack.c.b16 %v542, %v542
      %v554 = vpack.c.b16 %v543, %v543
      %v555 = vpack.c.b16 %v544, %v544
      %v556 = vpack.c.b16 %v545, %v545
      %v557 = vpack.c.b16 %v546, %v546
      %v558 = vpack.c.b16 %v547, %v547
      %v559 = vpack.c.b16 %v548, %v548
      %v560 = vpack.c.b16 %v549, %v549
      %v561 = vpack.c.b16 %v550, %v550
      %v562 = vpack.c.b16 %v551, %v551
      %v563 = vpack.c.b16 %v552, %v552
      %575 = vst [vmem:[%s211] sm:$0xf] %v553
      %576 = vst [vmem:[%s211 + $0x4] sm:$0xf] %v554
      %577 = vst [vmem:[%s211 + $0x8] sm:$0xf] %v555
      %578 = vst [vmem:[%s211 + $0xc] sm:$0xf] %v556
      %579 = vst [vmem:[%s211 + $0x10] sm:$0xf] %v557
      %580 = vst [vmem:[%s211 + $0x14] sm:$0xf] %v558
      %581 = vst [vmem:[%s211 + $0x18] sm:$0xf] %v559
      %582 = vst [vmem:[%s211 + $0x1c] sm:$0xf] %v560
      %583 = vst [vmem:[%s211 + $0x20] sm:$0xf] %v561
      %584 = vst [vmem:[%s211 + $0x24] sm:$0xf] %v562
      %585 = vst [vmem:[%s211 + $0x28] sm:$0xf] %v563
      %s586 = smul.u32 11, %s19
      %p587 = scmp.lt.s32.totalorder %s18, 1
      %s588 = scalar_select %p587, %s18, 1
      %p589 = scmp.lt.s32.totalorder %s586, 10
      %s590 = scalar_select %p589, %s586, 10
      %s591 = smul.addr %s588, 11
      %s592 = sadd.s32 %s590, %s591
      %s593 = smul.addr %s592, 4
      %s594 = scalar_lea.vmem %s3, %s593
      // Predicated region
      $region33: #{_lambda_.18} parent=31 // pred_check
        %p595 = pneg %p116
      $region34: #{_lambda_.18} parent=31 // pred_check_branch
        %597 = sbr.rel (%p595) target = $region36
      $region35: #{_lambda_.18} parent=31 // pred_region
        %s598 = smul.u32 11, %s19
      $region36: #{_lambda_.18} parent=31 // pred_fallthru
        _
    $region32: #{_lambda_.18} parent=5 // pred_fallthru
      _
    %p599 = scmp.le.s32.totalorder 2, %s9
    // Predicated region
    $region37: #{_lambda_.18} parent=5 // pred_check
      %p600 = pneg %p599
    $region38: #{_lambda_.18} parent=5 // pred_check_branch
      %602 = sbr.rel (%p600) target = $region40
    $region39: #{_lambda_.18} parent=5 // pred_region
      %s603 = ssub.s32 %s9, 2
      // Predicated region
      $region41: #{_lambda_.18} parent=39 // pred_check
        %p604 = pneg %p122
      $region42: #{_lambda_.18} parent=39 // pred_check_branch
        %606 = sbr.rel (%p604) target = $region44
      $region43: #{_lambda_.18} parent=39 // pred_region
        %s607 = smul.u32 11, %s21
        %p608 = scmp.lt.s32.totalorder %s20, 1
        %s609 = scalar_select %p608, %s20, 1
        %p610 = scmp.lt.s32.totalorder %s607, 10
        %s611 = scalar_select %p610, %s607, 10
        %s612 = smul.addr %s609, 11
        %s613 = sadd.s32 %s611, %s612
        %s614 = smul.addr %s613, 4
        %s615 = scalar_lea.vmem %s3, %s614
      $region44: #{_lambda_.18} parent=39 // pred_fallthru
        _
    $region40: #{_lambda_.18} parent=5 // pred_fallthru
      _
  $region6: #{_lambda_.18} parent=0 // loop_footer
    %s13 = sadd.s32 1, %s9
  $region7: #{_lambda_.18} parent=0 // loop_footer_branch
    %8 = sbr.rel target = $region3
  $region8: #{_lambda_.18} parent=0 // loop_exit
    _

// kernel: _lambda_.22
$region0: #{_lambda_.22}
  #allocation0 [shape = 'u32[]', space=smem, size = 0x4, offset = 0x4, fixed_abs, tag = 'smem constant byte address 0x4 - core index']
  #allocation1 [shape = 'u32[144,128]{1,0:T(1,128)}', space=vmem, size = 0x12000, scoped, tag = 'internal scratch']
  %s0 = inlined_call_operand.vmem [shape: bf16[2,384,128], index: 0, kind: input, shape index: {}]
  %s1 = inlined_call_operand.vmem [shape: bf16[128,128], index: 1, kind: input, shape index: {}]
  %s2 = inlined_call_operand.vmem [shape: f32[1,128], index: 2, kind: input, shape index: {}]
  %s3 = inlined_call_operand.vmem [shape: bf16[2,384,128], index: 3, kind: output, shape index: {0}]
  %s4 = inlined_call_operand.vmem [shape: f32[1,128], index: 4, kind: output, shape index: {1}]
  %s5 = inlined_call_operand.vmem [shape: f32[1,128], index: 5, kind: output, shape index: {2}]
  %6 = xla_tuple %s3, %s4, %s5
  %s7 = sld [smem:[#allocation0]]
  $region65: #{_lambda_.22} parent=0
    _
  %s9 = ssub.s32 1, %s7
  %s10 = scalar_select 0, %s9, %s7
  loop: start=0, step=1, limit=8
  $region2: #{_lambda_.22} parent=0 // loop_pre_header
    _
  $region3: #{_lambda_.22} parent=0 // loop_header
    %s12 = sphi 0, %s16
    %p13 = scmp.ge.s32.totalorder %s12, 8
    %s19 = sphi 0, %s31
    %s20 = sphi 0, %s27
    %s21 = sphi 0, %s19
    %s22 = sphi 0, %s20
    %s23 = sphi 0, %s21
    %s24 = sphi 0, %s22
    %s36 = sphi 0, %s38
    %s39 = sphi 0, %s36
    %s40 = sphi 0, %s39
    %s56 = sphi 0, %s40
    %s60 = sphi 0, %s60
    %s62 = sphi 0, %s60
    %s63 = sphi 0, %s62
    %s77 = sphi 0, %s63
    %s81 = sphi 0, %s81
    %s83 = sphi 0, %s81
    %s84 = sphi 0, %s83
    %s98 = sphi 0, %s84
    %s106 = sphi 0, %s108
    %s109 = sphi 0, %s106
    %s110 = sphi 0, %s109
    %s126 = sphi 0, %s110
    %s130 = sphi 0, %s130
    %s132 = sphi 0, %s130
    %s133 = sphi 0, %s132
    %s147 = sphi 0, %s133
    %s151 = sphi 0, %s151
    %s153 = sphi 0, %s151
    %s154 = sphi 0, %s153
    %s168 = sphi 0, %s154
  $region4: #{_lambda_.22} parent=0 // loop_header_branch
    %15 = sbr.rel (%p13) target = $region8
  $region5: #{_lambda_.22} parent=0 // loop_body
    %s17 = ssub.s32 %s12, 1
    %s18 = ssub.s32 %s12, 2
    %s25 = sadd.s32 1, %s20
    %p26 = scmp.ge.s32.totalorder %s25, 3
    %s27 = scalar_select %p26, 0, %s25
    %s28 = sadd.s32 1, %s19
    %s29 = scalar_select %p26, %s28, %s19
    %p30 = scmp.ge.s32.totalorder %s29, 2
    %s31 = scalar_select %p30, 0, %s29
    %s32 = ssub.s32 %s19, %s31
    %s33 = ssub.s32 %s20, %s27
    %s34 = sor.u32 %s32, %s33
    %p35 = scmp.eq.s32.totalorder %s34, 0
    %s37 = sadd.s32 %s36, 1
    %s38 = scalar_select %p35, %s36, %s37
    %p41 = pneg %p35
    %p42 = scmp.eq.s32.totalorder %s12, 5
    %p43 = por %p41, %p42
    %p44 = scmp.ne.s32.totalorder %s36, %s39
    %p45 = scmp.eq.s32.totalorder %s12, 0
    %p46 = por %p44, %p45
    %p47 = scmp.ne.s32.totalorder %s36, %s39
    %p48 = scmp.eq.s32.totalorder %s17, 5
    %p49 = por %p47, %p48
    %p50 = scmp.ne.s32.totalorder %s39, %s40
    %p51 = scmp.eq.s32.totalorder %s17, 0
    %p52 = por %p50, %p51
    %p53 = scmp.ne.s32.totalorder %s39, %s40
    %p54 = scmp.eq.s32.totalorder %s18, 5
    %p55 = por %p53, %p54
    %p57 = scmp.ne.s32.totalorder %s40, %s56
    %p58 = scmp.eq.s32.totalorder %s18, 0
    %p59 = por %p57, %p58
    %s61 = sadd.s32 %s60, 1
    %p64 = scmp.eq.s32.totalorder %s12, 5
    %p65 = scmp.ne.s32.totalorder %s60, %s62
    %p66 = scmp.eq.s32.totalorder %s12, 0
    %p67 = por %p65, %p66
    %p68 = scmp.ne.s32.totalorder %s60, %s62
    %p69 = scmp.eq.s32.totalorder %s17, 5
    %p70 = por %p68, %p69
    %p71 = scmp.ne.s32.totalorder %s62, %s63
    %p72 = scmp.eq.s32.totalorder %s17, 0
    %p73 = por %p71, %p72
    %p74 = scmp.ne.s32.totalorder %s62, %s63
    %p75 = scmp.eq.s32.totalorder %s18, 5
    %p76 = por %p74, %p75
    %p78 = scmp.ne.s32.totalorder %s63, %s77
    %p79 = scmp.eq.s32.totalorder %s18, 0
    %p80 = por %p78, %p79
    %s82 = sadd.s32 %s81, 1
    %p85 = scmp.eq.s32.totalorder %s12, 5
    %p86 = scmp.ne.s32.totalorder %s81, %s83
    %p87 = scmp.eq.s32.totalorder %s12, 0
    %p88 = por %p86, %p87
    %p89 = scmp.ne.s32.totalorder %s81, %s83
    %p90 = scmp.eq.s32.totalorder %s17, 5
    %p91 = por %p89, %p90
    %p92 = scmp.ne.s32.totalorder %s83, %s84
    %p93 = scmp.eq.s32.totalorder %s17, 0
    %p94 = por %p92, %p93
    %p95 = scmp.ne.s32.totalorder %s83, %s84
    %p96 = scmp.eq.s32.totalorder %s18, 5
    %p97 = por %p95, %p96
    %p99 = scmp.ne.s32.totalorder %s84, %s98
    %p100 = scmp.eq.s32.totalorder %s18, 0
    %p101 = por %p99, %p100
    %s102 = ssub.s32 %s19, %s31
    %s103 = ssub.s32 %s20, %s27
    %s104 = sor.u32 %s102, %s103
    %p105 = scmp.eq.s32.totalorder %s104, 0
    %s107 = sadd.s32 %s106, 1
    %s108 = scalar_select %p105, %s106, %s107
    %p111 = pneg %p105
    %p112 = scmp.eq.s32.totalorder %s12, 5
    %p113 = por %p111, %p112
    %p114 = scmp.ne.s32.totalorder %s106, %s109
    %p115 = scmp.eq.s32.totalorder %s12, 0
    %p116 = por %p114, %p115
    %p117 = scmp.ne.s32.totalorder %s106, %s109
    %p118 = scmp.eq.s32.totalorder %s17, 5
    %p119 = por %p117, %p118
    %p120 = scmp.ne.s32.totalorder %s109, %s110
    %p121 = scmp.eq.s32.totalorder %s17, 0
    %p122 = por %p120, %p121
    %p123 = scmp.ne.s32.totalorder %s109, %s110
    %p124 = scmp.eq.s32.totalorder %s18, 5
    %p125 = por %p123, %p124
    %p127 = scmp.ne.s32.totalorder %s110, %s126
    %p128 = scmp.eq.s32.totalorder %s18, 0
    %p129 = por %p127, %p128
    %s131 = sadd.s32 %s130, 1
    %p134 = scmp.eq.s32.totalorder %s12, 5
    %p135 = scmp.ne.s32.totalorder %s130, %s132
    %p136 = scmp.eq.s32.totalorder %s12, 0
    %p137 = por %p135, %p136
    %p138 = scmp.ne.s32.totalorder %s130, %s132
    %p139 = scmp.eq.s32.totalorder %s17, 5
    %p140 = por %p138, %p139
    %p141 = scmp.ne.s32.totalorder %s132, %s133
    %p142 = scmp.eq.s32.totalorder %s17, 0
    %p143 = por %p141, %p142
    %p144 = scmp.ne.s32.totalorder %s132, %s133
    %p145 = scmp.eq.s32.totalorder %s18, 5
    %p146 = por %p144, %p145
    %p148 = scmp.ne.s32.totalorder %s133, %s147
    %p149 = scmp.eq.s32.totalorder %s18, 0
    %p150 = por %p148, %p149
    %s152 = sadd.s32 %s151, 1
    %p155 = scmp.eq.s32.totalorder %s12, 5
    %p156 = scmp.ne.s32.totalorder %s151, %s153
    %p157 = scmp.eq.s32.totalorder %s12, 0
    %p158 = por %p156, %p157
    %p159 = scmp.ne.s32.totalorder %s151, %s153
    %p160 = scmp.eq.s32.totalorder %s17, 5
    %p161 = por %p159, %p160
    %p162 = scmp.ne.s32.totalorder %s153, %s154
    %p163 = scmp.eq.s32.totalorder %s17, 0
    %p164 = por %p162, %p163
    %p165 = scmp.ne.s32.totalorder %s153, %s154
    %p166 = scmp.eq.s32.totalorder %s18, 5
    %p167 = por %p165, %p166
    %p169 = scmp.ne.s32.totalorder %s154, %s168
    %p170 = scmp.eq.s32.totalorder %s18, 0
    %p171 = por %p169, %p170
    %p172 = scmp.le.s32.totalorder 1, %s12
    %p173 = scmp.lt.s32.totalorder %s12, 7
    %p174 = pnand %p172, %p173
    %p175 = pneg %p174
    // Predicated region
    $region9: #{_lambda_.22} parent=5 // pred_check
      _
    $region10: #{_lambda_.22} parent=5 // pred_check_branch
      %177 = sbr.rel (%p174) target = $region12
    $region11: #{_lambda_.22} parent=5 // pred_region
      %s178 = ssub.s32 %s12, 1
      // Predicated region
      $region13: #{_lambda_.22} parent=11 // pred_check
        %p179 = pneg %p73
      $region14: #{_lambda_.22} parent=11 // pred_check_branch
        %181 = sbr.rel (%p179) target = $region16
      $region15: #{_lambda_.22} parent=11 // pred_region
        _
      $region16: #{_lambda_.22} parent=11 // pred_fallthru
        _
      // Predicated region
      $region17: #{_lambda_.22} parent=11 // pred_check
        %p182 = pneg %p94
      $region18: #{_lambda_.22} parent=11 // pred_check_branch
        %184 = sbr.rel (%p182) target = $region20
      $region19: #{_lambda_.22} parent=11 // pred_region
        _
      $region20: #{_lambda_.22} parent=11 // pred_fallthru
        _
    $region12: #{_lambda_.22} parent=5 // pred_fallthru
      _
    %p185 = scmp.lt.s32.totalorder %s12, 6
    // Predicated region
    $region21: #{_lambda_.22} parent=5 // pred_check
      %p186 = pneg %p185
    $region22: #{_lambda_.22} parent=5 // pred_check_branch
      %188 = sbr.rel (%p186) target = $region24
    $region23: #{_lambda_.22} parent=5 // pred_region
      // Predicated region
      $region25: #{_lambda_.22} parent=23 // pred_check
        %p189 = pneg %p46
      $region26: #{_lambda_.22} parent=23 // pred_check_branch
        %191 = sbr.rel (%p189) target = $region28
      $region27: #{_lambda_.22} parent=23 // pred_region
        %s192 = smul.u32 16, %s20
        %p193 = scmp.lt.s32.totalorder %s19, 1
        %s194 = scalar_select %p193, %s19, 1
        %p195 = scmp.lt.s32.totalorder %s192, 47
        %s196 = scalar_select %p195, %s192, 47
        %s197 = smul.addr %s194, 48
        %s198 = sadd.s32 %s196, %s197
        %s199 = smul.addr %s198, 4
        %s200 = scalar_lea.vmem %s0, %s199
        %s201 = smul.u32 16, %s20
      $region28: #{_lambda_.22} parent=23 // pred_fallthru
        _
    $region24: #{_lambda_.22} parent=5 // pred_fallthru
      _
    %p202 = scmp.le.s32.totalorder 1, %s12
    %p203 = scmp.lt.s32.totalorder %s12, 7
    %p204 = pnand %p202, %p203
    %p205 = pneg %p204
    // Predicated region
    $region29: #{_lambda_.22} parent=5 // pred_check
      _
    $region30: #{_lambda_.22} parent=5 // pred_check_branch
      %207 = sbr.rel (%p204) target = $region32
    $region31: #{_lambda_.22} parent=5 // pred_region
      %s208 = ssub.s32 %s12, 1
      %s209 = smul.u32 16, %s22
      %p210 = scmp.lt.s32.totalorder %s21, 1
      %s211 = scalar_select %p210, %s21, 1
      %p212 = scmp.lt.s32.totalorder %s209, 47
      %s213 = scalar_select %p212, %s209, 47
      %s214 = smul.addr %s211, 48
      %s215 = sadd.s32 %s213, %s214
      %s216 = smul.addr %s215, 4
      %s217 = scalar_lea.vmem %s0, %s216
      %p218 = pneg %p52
      %p219 = pneg %p49
      %p220 = pneg %p73
      %p221 = pneg %p70
      %p222 = pneg %p94
      %p223 = pneg %p91
      %p224 = pneg %p122
      %p225 = pneg %p119
      %s226 = smul.u32 16, %s22
      %p227 = scmp.lt.s32.totalorder %s21, 1
      %s228 = scalar_select %p227, %s21, 1
      %p229 = scmp.lt.s32.totalorder %s226, 47
      %s230 = scalar_select %p229, %s226, 47
      %s231 = smul.addr %s228, 48
      %s232 = sadd.s32 %s230, %s231
      %s233 = smul.addr %s232, 4
      %s234 = scalar_lea.vmem %s3, %s233
      %p235 = pneg %p143
      %p236 = pneg %p140
      %p237 = pneg %p164
      %p238 = pneg %p161
      %s239 = smul.u32 16, %s22
      %p240 = scmp.lt.s32.totalorder %s21, 1
      %s241 = scalar_select %p240, %s21, 1
      %p242 = scmp.lt.s32.totalorder %s239, 47
      %s243 = scalar_select %p242, %s239, 47
      %s244 = smul.addr %s241, 48
      %s245 = sadd.s32 %s243, %s244
      %s246 = smul.addr %s245, 4
      %s247 = scalar_lea.vmem %s0, %s246
      %s248 = smul.u32 16, %s22
      %s249 = smul.u32 16, %s22
      %p250 = scmp.lt.s32.totalorder %s21, 1
      %s251 = scalar_select %p250, %s21, 1
      %p252 = scmp.lt.s32.totalorder %s249, 47
      %s253 = scalar_select %p252, %s249, 47
      %s254 = smul.addr %s251, 48
      %s255 = sadd.s32 %s253, %s254
      %s256 = smul.addr %s255, 4
      %s257 = scalar_lea.vmem %s3, %s256
      %s258 = smul.u32 16, %s22
      %p260 = scmp.eq.s32.totalorder %s21, 0
      %p261 = scmp.eq.s32.totalorder %s22, 0
      %p262 = pnand %p260, %p261
      %p263 = pneg %p262
      // Predicated region
      $region33: #{_lambda_.22} parent=31 // pred_check
        _
      $region34: #{_lambda_.22} parent=31 // pred_check_branch
        %265 = sbr.rel (%p262) target = $region36
      $region35: #{_lambda_.22} parent=31 // pred_region
        %266 = vst [vmem:[%s4] sm:$0x1] 0.0
        %267 = vst [vmem:[%s5] sm:$0x1] 0.0
      $region36: #{_lambda_.22} parent=31 // pred_fallthru
        _
      %v268 = vld [vmem:[%s247] sm:$0xf]
      %v269 = vld [vmem:[%s247 + $0x4] sm:$0xf]
      %v270 = vld [vmem:[%s247 + $0x8] sm:$0xf]
      %v271 = vld [vmem:[%s247 + $0xc] sm:$0xf]
      %v272 = vld [vmem:[%s247 + $0x10] sm:$0xf]
      %v273 = vld [vmem:[%s247 + $0x14] sm:$0xf]
      %v274 = vld [vmem:[%s247 + $0x18] sm:$0xf]
      %v275 = vld [vmem:[%s247 + $0x1c] sm:$0xf]
      %v276 = vld [vmem:[%s247 + $0x20] sm:$0xf]
      %v277 = vld [vmem:[%s247 + $0x24] sm:$0xf]
      %v278 = vld [vmem:[%s247 + $0x28] sm:$0xf]
      %v279 = vld [vmem:[%s247 + $0x2c] sm:$0xf]
      %v280 = vld [vmem:[%s247 + $0x30] sm:$0xf]
      %v281 = vld [vmem:[%s247 + $0x34] sm:$0xf]
      %v282 = vld [vmem:[%s247 + $0x38] sm:$0xf]
      %v283 = vld [vmem:[%s247 + $0x3c] sm:$0xf]
      %v284 = vld [vmem:[%s1] sm:$0xf]
      %v285 = vld [vmem:[%s1 + $0x4] sm:$0xf]
      %v286 = vld [vmem:[%s1 + $0x8] sm:$0xf]
      %v287 = vld [vmem:[%s1 + $0xc] sm:$0xf]
      %v288 = vld [vmem:[%s1 + $0x10] sm:$0xf]
      %v289 = vld [vmem:[%s1 + $0x14] sm:$0xf]
      %v290 = vld [vmem:[%s1 + $0x18] sm:$0xf]
      %v291 = vld [vmem:[%s1 + $0x1c] sm:$0xf]
      %v292 = vld [vmem:[%s1 + $0x20] sm:$0xf]
      %v293 = vld [vmem:[%s1 + $0x24] sm:$0xf]
      %v294 = vld [vmem:[%s1 + $0x28] sm:$0xf]
      %v295 = vld [vmem:[%s1 + $0x2c] sm:$0xf]
      %v296 = vld [vmem:[%s1 + $0x30] sm:$0xf]
      %v297 = vld [vmem:[%s1 + $0x34] sm:$0xf]
      %v298 = vld [vmem:[%s1 + $0x38] sm:$0xf]
      %v299 = vld [vmem:[%s1 + $0x3c] sm:$0xf]
      %v300 = vld [vmem:[%s2] sm:$0x1]
      %v302 = vlaneseq
      %v303 = vshrl.u32 %v302, 7
      %v304 = vsub.s32 0, %v303
      %v305 = vrot.slane %v300, %v304
      %v323 = vunpack.c.l.b16 %v268
      %v324 = vunpack.c.l.b16 %v269
      %v325 = vunpack.c.l.b16 %v270
      %v326 = vunpack.c.l.b16 %v271
      %v327 = vunpack.c.l.b16 %v272
      %v328 = vunpack.c.l.b16 %v273
      %v329 = vunpack.c.l.b16 %v274
      %v330 = vunpack.c.l.b16 %v275
      %v331 = vunpack.c.l.b16 %v276
      %v332 = vunpack.c.l.b16 %v277
      %v333 = vunpack.c.l.b16 %v278
      %v334 = vunpack.c.l.b16 %v279
      %v335 = vunpack.c.l.b16 %v280
      %v336 = vunpack.c.l.b16 %v281
      %v337 = vunpack.c.l.b16 %v282
      %v338 = vunpack.c.l.b16 %v283
      %v339 = vpack.c.b16 %v324, %v323
      %v340 = vpack.c.b16 %v326, %v325
      %v341 = vpack.c.b16 %v328, %v327
      %v342 = vpack.c.b16 %v330, %v329
      %v343 = vpack.c.b16 %v332, %v331
      %v344 = vpack.c.b16 %v334, %v333
      %v345 = vpack.c.b16 %v336, %v335
      %v346 = vpack.c.b16 %v338, %v337
      %v371 = vunpack.c.l.b16 %v284
      %v372 = vunpack.c.l.b16 %v285
      %v373 = vunpack.c.l.b16 %v286
      %v374 = vunpack.c.l.b16 %v287
      %v375 = vunpack.c.l.b16 %v288
      %v376 = vunpack.c.l.b16 %v289
      %v377 = vunpack.c.l.b16 %v290
      %v378 = vunpack.c.l.b16 %v291
      %v379 = vunpack.c.l.b16 %v292
      %v380 = vunpack.c.l.b16 %v293
      %v381 = vunpack.c.l.b16 %v294
      %v382 = vunpack.c.l.b16 %v295
      %v383 = vunpack.c.l.b16 %v296
      %v384 = vunpack.c.l.b16 %v297
      %v385 = vunpack.c.l.b16 %v298
      %v386 = vunpack.c.l.b16 %v299
      %v387 = vpack.c.b16 %v372, %v371
      %v388 = vpack.c.b16 %v374, %v373
      %v389 = vpack.c.b16 %v376, %v375
      %v390 = vpack.c.b16 %v378, %v377
      %v391 = vpack.c.b16 %v380, %v379
      %v392 = vpack.c.b16 %v382, %v381
      %v393 = vpack.c.b16 %v384, %v383
      %v394 = vpack.c.b16 %v386, %v385
      %403 = vmatprep.subr.bf16.mxu0 0
      %404 = vmatpush1.bf16.msra.mxu0 %v387
      %405 = vmatprep.subr.bf16.mxu0 0
      %406 = vmatpush1.bf16.msra.mxu0 %v388
      %407 = vmatprep.subr.bf16.mxu0 0
      %408 = vmatpush1.bf16.msra.mxu0 %v389
      %409 = vmatprep.subr.bf16.mxu0 0
      %410 = vmatpush1.bf16.msra.mxu0 %v390
      %411 = vmatprep.subr.bf16.mxu0 0
      %412 = vmatpush1.bf16.msra.mxu0 %v391
      %413 = vmatprep.subr.bf16.mxu0 0
      %414 = vmatpush1.bf16.msra.mxu0 %v392
      %415 = vmatprep.subr.bf16.mxu0 0
      %416 = vmatpush1.bf16.msra.mxu0 %v393
      %417 = vmatprep.subr.bf16.mxu0 0
      %418 = vmatpush1.bf16.msra.mxu0 %v394
      %419 = vmatprep.subr.bf16.mxu0 0
      %420 = vmatpush1.bf16.msra.mxu0 0
      %421 = vmatprep.subr.bf16.mxu0 0
      %422 = vmatpush1.bf16.msra.mxu0 0
      %423 = vmatprep.subr.bf16.mxu0 0
      %424 = vmatpush1.bf16.msra.mxu0 0
      %425 = vmatprep.subr.bf16.mxu0 0
      %426 = vmatpush1.bf16.msra.mxu0 0
      %427 = vmatprep.subr.bf16.mxu0 0
      %428 = vmatpush1.bf16.msra.mxu0 0
      %429 = vmatprep.subr.bf16.mxu0 0
      %430 = vmatpush1.bf16.msra.mxu0 0
      %431 = vmatprep.subr.bf16.mxu0 0
      %432 = vmatpush1.bf16.msra.mxu0 0
      %433 = vmatprep.subr.bf16.mxu0 0
      %434 = vmatpush1.bf16.msra.mxu0 0
      %435 = vmatprep.mubr.bf16.mxu0 0
      %436 = vmatmul.mubr.bf16.gmra.mrb[0].mxu0 %v339
      %v437 = vpop.f32.mrb[0].mxu0
      %v438 = vadd.f32 %v305, %v437
      %v439 = vpop.f32.mrb[0].mxu0
      %v440 = vpop.f32.mrb[0].mxu0
      %v441 = vadd.f32 %v305, %v440
      %v442 = vpop.f32.mrb[0].mxu0
      %443 = vmatprep.mubr.bf16.mxu0 0
      %444 = vmatmul.mubr.bf16.gmra.mrb[0].mxu0 %v340
      %v445 = vpop.f32.mrb[0].mxu0
      %v446 = vadd.f32 %v305, %v445
      %v447 = vpop.f32.mrb[0].mxu0
      %v448 = vpop.f32.mrb[0].mxu0
      %v449 = vadd.f32 %v305, %v448
      %v450 = vpop.f32.mrb[0].mxu0
      %451 = vmatprep.mubr.bf16.mxu0 0
      %452 = vmatmul.mubr.bf16.gmra.mrb[0].mxu0 %v341
      %v453 = vpop.f32.mrb[0].mxu0
      %v454 = vadd.f32 %v305, %v453
      %v455 = vpop.f32.mrb[0].mxu0
      %v456 = vpop.f32.mrb[0].mxu0
      %v457 = vadd.f32 %v305, %v456
      %v458 = vpop.f32.mrb[0].mxu0
      %459 = vmatprep.mubr.bf16.mxu0 0
      %460 = vmatmul.mubr.bf16.gmra.mrb[0].mxu0 %v342
      %v461 = vpop.f32.mrb[0].mxu0
      %v462 = vadd.f32 %v305, %v461
      %v463 = vpop.f32.mrb[0].mxu0
      %v464 = vpop.f32.mrb[0].mxu0
      %v465 = vadd.f32 %v305, %v464
      %v466 = vpop.f32.mrb[0].mxu0
      %467 = vmatprep.mubr.bf16.mxu0 0
      %468 = vmatmul.mubr.bf16.gmra.mrb[0].mxu0 %v343
      %v469 = vpop.f32.mrb[0].mxu0
      %v470 = vadd.f32 %v305, %v469
      %v471 = vpop.f32.mrb[0].mxu0
      %v472 = vpop.f32.mrb[0].mxu0
      %v473 = vadd.f32 %v305, %v472
      %v474 = vpop.f32.mrb[0].mxu0
      %475 = vmatprep.mubr.bf16.mxu0 0
      %476 = vmatmul.mubr.bf16.gmra.mrb[0].mxu0 %v344
      %v477 = vpop.f32.mrb[0].mxu0
      %v478 = vadd.f32 %v305, %v477
      %v479 = vpop.f32.mrb[0].mxu0
      %v480 = vpop.f32.mrb[0].mxu0
      %v481 = vadd.f32 %v305, %v480
      %v482 = vpop.f32.mrb[0].mxu0
      %483 = vmatprep.mubr.bf16.mxu0 0
      %484 = vmatmul.mubr.bf16.gmra.mrb[0].mxu0 %v345
      %v485 = vpop.f32.mrb[0].mxu0
      %v486 = vadd.f32 %v305, %v485
      %v487 = vpop.f32.mrb[0].mxu0
      %v488 = vpop.f32.mrb[0].mxu0
      %v489 = vadd.f32 %v305, %v488
      %v490 = vpop.f32.mrb[0].mxu0
      %491 = vmatprep.mubr.bf16.mxu0 0
      %492 = vmatmul.mubr.bf16.gmra.mrb[0].mxu0 %v346
      %v493 = vpop.f32.mrb[0].mxu0
      %v494 = vadd.f32 %v305, %v493
      %v495 = vpop.f32.mrb[0].mxu0
      %v496 = vpop.f32.mrb[0].mxu0
      %v497 = vadd.f32 %v305, %v496
      %v498 = vpop.f32.mrb[0].mxu0
      %499 = vdwg.mxu0
      %vm500 = vcmp.ge.f32.partialorder %v438, 0.0
      %vm501 = vcmp.ge.f32.partialorder %v441, 0.0
      %vm502 = vcmp.ge.f32.partialorder %v446, 0.0
      %vm503 = vcmp.ge.f32.partialorder %v449, 0.0
      %vm504 = vcmp.ge.f32.partialorder %v454, 0.0
      %vm505 = vcmp.ge.f32.partialorder %v457, 0.0
      %vm506 = vcmp.ge.f32.partialorder %v462, 0.0
      %vm507 = vcmp.ge.f32.partialorder %v465, 0.0
      %vm508 = vcmp.ge.f32.partialorder %v470, 0.0
      %vm509 = vcmp.ge.f32.partialorder %v473, 0.0
      %vm510 = vcmp.ge.f32.partialorder %v478, 0.0
      %vm511 = vcmp.ge.f32.partialorder %v481, 0.0
      %vm512 = vcmp.ge.f32.partialorder %v486, 0.0
      %vm513 = vcmp.ge.f32.partialorder %v489, 0.0
      %vm514 = vcmp.ge.f32.partialorder %v494, 0.0
      %vm515 = vcmp.ge.f32.partialorder %v497, 0.0
      %v516 = vmul.f32 %v438, 0.01
      %v517 = vmul.f32 %v441, 0.01
      %v518 = vmul.f32 %v446, 0.01
      %v519 = vmul.f32 %v449, 0.01
      %v520 = vmul.f32 %v454, 0.01
      %v521 = vmul.f32 %v457, 0.01
      %v522 = vmul.f32 %v462, 0.01
      %v523 = vmul.f32 %v465, 0.01
      %v524 = vmul.f32 %v470, 0.01
      %v525 = vmul.f32 %v473, 0.01
      %v526 = vmul.f32 %v478, 0.01
      %v527 = vmul.f32 %v481, 0.01
      %v528 = vmul.f32 %v486, 0.01
      %v529 = vmul.f32 %v489, 0.01
      %v530 = vmul.f32 %v494, 0.01
      %v531 = vmul.f32 %v497, 0.01
      %v532 = vsel %vm500, %v438, %v516
      %v533 = vsel %vm501, %v441, %v517
      %v534 = vsel %vm502, %v446, %v518
      %v535 = vsel %vm503, %v449, %v519
      %v536 = vsel %vm504, %v454, %v520
      %v537 = vsel %vm505, %v457, %v521
      %v538 = vsel %vm506, %v462, %v522
      %v539 = vsel %vm507, %v465, %v523
      %v540 = vsel %vm508, %v470, %v524
      %v541 = vsel %vm509, %v473, %v525
      %v542 = vsel %vm510, %v478, %v526
      %v543 = vsel %vm511, %v481, %v527
      %v544 = vsel %vm512, %v486, %v528
      %v545 = vsel %vm513, %v489, %v529
      %v546 = vsel %vm514, %v494, %v530
      %v547 = vsel %vm515, %v497, %v531
      %v548 = vlaneseq
      %v549 = vshrl.u32 %v548, 7
      %v550 = vadd.s32 %v549, 8
      %v551 = vadd.s32 %v549, 16
      %v552 = vadd.s32 %v549, 24
      %v553 = vadd.s32 %v549, 32
      %v554 = vadd.s32 %v549, 40
      %v555 = vadd.s32 %v549, 48
      %v556 = vadd.s32 %v549, 56
      %v557 = vadd.s32 %v549, 64
      %v558 = vadd.s32 %v549, 72
      %v559 = vadd.s32 %v549, 80
      %v560 = vadd.s32 %v549, 88
      %v561 = vadd.s32 %v549, 96
      %v562 = vadd.s32 %v549, 104
      %v563 = vadd.s32 %v549, 112
      %v564 = vadd.s32 %v549, 120
      %s565 = smul.u32 %s22, 128
      %v566 = vstv %s565
      %v567 = vadd.s32 %v549, %v566
      %v568 = vadd.s32 %v550, %v566
      %v569 = vadd.s32 %v551, %v566
      %v570 = vadd.s32 %v552, %v566
      %v571 = vadd.s32 %v553, %v566
      %v572 = vadd.s32 %v554, %v566
      %v573 = vadd.s32 %v555, %v566
      %v574 = vadd.s32 %v556, %v566
      %v575 = vadd.s32 %v557, %v566
      %v576 = vadd.s32 %v558, %v566
      %v577 = vadd.s32 %v559, %v566
      %v578 = vadd.s32 %v560, %v566
      %v579 = vadd.s32 %v561, %v566
      %v580 = vadd.s32 %v562, %v566
      %v581 = vadd.s32 %v563, %v566
      %v582 = vadd.s32 %v564, %v566
      %vm583 = vcmp.lt.s32.totalorder %v567, 324
      %vm584 = vcmp.lt.s32.totalorder %v568, 324
      %vm585 = vcmp.lt.s32.totalorder %v569, 324
      %vm586 = vcmp.lt.s32.totalorder %v570, 324
      %vm587 = vcmp.lt.s32.totalorder %v571, 324
      %vm588 = vcmp.lt.s32.totalorder %v572, 324
      %vm589 = vcmp.lt.s32.totalorder %v573, 324
      %vm590 = vcmp.lt.s32.totalorder %v574, 324
      %vm591 = vcmp.lt.s32.totalorder %v575, 324
      %vm592 = vcmp.lt.s32.totalorder %v576, 324
      %vm593 = vcmp.lt.s32.totalorder %v577, 324
      %vm594 = vcmp.lt.s32.totalorder %v578, 324
      %vm595 = vcmp.lt.s32.totalorder %v579, 324
      %vm596 = vcmp.lt.s32.totalorder %v580, 324
      %vm597 = vcmp.lt.s32.totalorder %v581, 324
      %vm598 = vcmp.lt.s32.totalorder %v582, 324
      %v599 = vsel %vm583, %v532, 0.0
      %v600 = vsel %vm584, %v533, 0.0
      %v601 = vsel %vm585, %v534, 0.0
      %v602 = vsel %vm586, %v535, 0.0
      %v603 = vsel %vm587, %v536, 0.0
      %v604 = vsel %vm588, %v537, 0.0
      %v605 = vsel %vm589, %v538, 0.0
      %v606 = vsel %vm590, %v539, 0.0
      %v607 = vsel %vm591, %v540, 0.0
      %v608 = vsel %vm592, %v541, 0.0
      %v609 = vsel %vm593, %v542, 0.0
      %v610 = vsel %vm594, %v543, 0.0
      %v611 = vsel %vm595, %v544, 0.0
      %v612 = vsel %vm596, %v545, 0.0
      %v613 = vsel %vm597, %v546, 0.0
      %v614 = vsel %vm598, %v547, 0.0
      %v615 = vld [vmem:[%s4] sm:$0x1]
      %v616 = vadd.f32 %v599, %v600
      %v617 = vadd.f32 %v616, %v601
      %v618 = vadd.f32 %v617, %v602
      %v619 = vadd.f32 %v618, %v603
      %v620 = vadd.f32 %v619, %v604
      %v621 = vadd.f32 %v620, %v605
      %v622 = vadd.f32 %v621, %v606
      %v623 = vadd.f32 %v622, %v607
      %v624 = vadd.f32 %v623, %v608
      %v625 = vadd.f32 %v624, %v609
      %v626 = vadd.f32 %v625, %v610
      %v627 = vadd.f32 %v626, %v611
      %v628 = vadd.f32 %v627, %v612
      %v629 = vadd.f32 %v628, %v613
      %v630 = vadd.f32 %v629, %v614
      %v631 = vrot.slane %v630, 4
      %v632 = vadd.f32 %v630, %v631
      %v633 = vrot.slane %v632, 2
      %v634 = vadd.f32 %v632, %v633
      %v635 = vrot.slane %v634, 1
      %v636 = vadd.f32 %v634, %v635
      %v637 = vadd.f32 %v615, %v636
      %638 = vst [vmem:[%s4] sm:$0x1] %v637
      %v639 = vld [vmem:[%s5] sm:$0x1]
      %v640 = vmul.f32 %v599, %v599
      %v641 = vmul.f32 %v600, %v600
      %v642 = vmul.f32 %v601, %v601
      %v643 = vmul.f32 %v602, %v602
      %v644 = vmul.f32 %v603, %v603
      %v645 = vmul.f32 %v604, %v604
      %v646 = vmul.f32 %v605, %v605
      %v647 = vmul.f32 %v606, %v606
      %v648 = vmul.f32 %v607, %v607
      %v649 = vmul.f32 %v608, %v608
      %v650 = vmul.f32 %v609, %v609
      %v651 = vmul.f32 %v610, %v610
      %v652 = vmul.f32 %v611, %v611
      %v653 = vmul.f32 %v612, %v612
      %v654 = vmul.f32 %v613, %v613
      %v655 = vmul.f32 %v614, %v614
      %v656 = vadd.f32 %v640, %v641
      %v657 = vadd.f32 %v656, %v642
      %v658 = vadd.f32 %v657, %v643
      %v659 = vadd.f32 %v658, %v644
      %v660 = vadd.f32 %v659, %v645
      %v661 = vadd.f32 %v660, %v646
      %v662 = vadd.f32 %v661, %v647
      %v663 = vadd.f32 %v662, %v648
      %v664 = vadd.f32 %v663, %v649
      %v665 = vadd.f32 %v664, %v650
      %v666 = vadd.f32 %v665, %v651
      %v667 = vadd.f32 %v666, %v652
      %v668 = vadd.f32 %v667, %v653
      %v669 = vadd.f32 %v668, %v654
      %v670 = vadd.f32 %v669, %v655
      %v671 = vrot.slane %v670, 4
      %v672 = vadd.f32 %v670, %v671
      %v673 = vrot.slane %v672, 2
      %v674 = vadd.f32 %v672, %v673
      %v675 = vrot.slane %v674, 1
      %v676 = vadd.f32 %v674, %v675
      %v677 = vadd.f32 %v639, %v676
      %678 = vst [vmem:[%s5] sm:$0x1] %v677
      %v679 = vpack.c.bf16 %v533, %v532
      %v680 = vpack.c.bf16 %v535, %v534
      %v681 = vpack.c.bf16 %v537, %v536
      %v682 = vpack.c.bf16 %v539, %v538
      %v683 = vpack.c.bf16 %v541, %v540
      %v684 = vpack.c.bf16 %v543, %v542
      %v685 = vpack.c.bf16 %v545, %v544
      %v686 = vpack.c.bf16 %v547, %v546
      %v695 = vunpack.c.l.b16 %v679
      %v696 = vunpack.c.h.b16 %v679
      %v697 = vunpack.c.l.b16 %v680
      %v698 = vunpack.c.h.b16 %v680
      %v699 = vunpack.c.l.b16 %v681
      %v700 = vunpack.c.h.b16 %v681
      %v701 = vunpack.c.l.b16 %v682
      %v702 = vunpack.c.h.b16 %v682
      %v703 = vunpack.c.l.b16 %v683
      %v704 = vunpack.c.h.b16 %v683
      %v705 = vunpack.c.l.b16 %v684
      %v706 = vunpack.c.h.b16 %v684
      %v707 = vunpack.c.l.b16 %v685
      %v708 = vunpack.c.h.b16 %v685
      %v709 = vunpack.c.l.b16 %v686
      %v710 = vunpack.c.h.b16 %v686
      %v711 = vpack.c.b16 %v695, %v695
      %v712 = vpack.c.b16 %v696, %v696
      %v713 = vpack.c.b16 %v697, %v697
      %v714 = vpack.c.b16 %v698, %v698
      %v715 = vpack.c.b16 %v699, %v699
      %v716 = vpack.c.b16 %v700, %v700
      %v717 = vpack.c.b16 %v701, %v701
      %v718 = vpack.c.b16 %v702, %v702
      %v719 = vpack.c.b16 %v703, %v703
      %v720 = vpack.c.b16 %v704, %v704
      %v721 = vpack.c.b16 %v705, %v705
      %v722 = vpack.c.b16 %v706, %v706
      %v723 = vpack.c.b16 %v707, %v707
      %v724 = vpack.c.b16 %v708, %v708
      %v725 = vpack.c.b16 %v709, %v709
      %v726 = vpack.c.b16 %v710, %v710
      %743 = vst [vmem:[%s257] sm:$0xf] %v711
      %744 = vst [vmem:[%s257 + $0x4] sm:$0xf] %v712
      %745 = vst [vmem:[%s257 + $0x8] sm:$0xf] %v713
      %746 = vst [vmem:[%s257 + $0xc] sm:$0xf] %v714
      %747 = vst [vmem:[%s257 + $0x10] sm:$0xf] %v715
      %748 = vst [vmem:[%s257 + $0x14] sm:$0xf] %v716
      %749 = vst [vmem:[%s257 + $0x18] sm:$0xf] %v717
      %750 = vst [vmem:[%s257 + $0x1c] sm:$0xf] %v718
      %751 = vst [vmem:[%s257 + $0x20] sm:$0xf] %v719
      %752 = vst [vmem:[%s257 + $0x24] sm:$0xf] %v720
      %753 = vst [vmem:[%s257 + $0x28] sm:$0xf] %v721
      %754 = vst [vmem:[%s257 + $0x2c] sm:$0xf] %v722
      %755 = vst [vmem:[%s257 + $0x30] sm:$0xf] %v723
      %756 = vst [vmem:[%s257 + $0x34] sm:$0xf] %v724
      %757 = vst [vmem:[%s257 + $0x38] sm:$0xf] %v725
      %758 = vst [vmem:[%s257 + $0x3c] sm:$0xf] %v726
      %s759 = smul.u32 16, %s22
      %p760 = scmp.lt.s32.totalorder %s21, 1
      %s761 = scalar_select %p760, %s21, 1
      %p762 = scmp.lt.s32.totalorder %s759, 47
      %s763 = scalar_select %p762, %s759, 47
      %s764 = smul.addr %s761, 48
      %s765 = sadd.s32 %s763, %s764
      %s766 = smul.addr %s765, 4
      %s767 = scalar_lea.vmem %s3, %s766
      // Predicated region
      $region37: #{_lambda_.22} parent=31 // pred_check
        %p768 = pneg %p119
      $region38: #{_lambda_.22} parent=31 // pred_check_branch
        %770 = sbr.rel (%p768) target = $region40
      $region39: #{_lambda_.22} parent=31 // pred_region
        %s771 = smul.u32 16, %s22
      $region40: #{_lambda_.22} parent=31 // pred_fallthru
        _
      // Predicated region
      $region41: #{_lambda_.22} parent=31 // pred_check
        %p772 = pneg %p140
      $region42: #{_lambda_.22} parent=31 // pred_check_branch
        %774 = sbr.rel (%p772) target = $region44
      $region43: #{_lambda_.22} parent=31 // pred_region
        _
      $region44: #{_lambda_.22} parent=31 // pred_fallthru
        _
      // Predicated region
      $region45: #{_lambda_.22} parent=31 // pred_check
        %p775 = pneg %p161
      $region46: #{_lambda_.22} parent=31 // pred_check_branch
        %777 = sbr.rel (%p775) target = $region48
      $region47: #{_lambda_.22} parent=31 // pred_region
        _
      $region48: #{_lambda_.22} parent=31 // pred_fallthru
        _
      // Predicated region
      $region49: #{_lambda_.22} parent=31 // pred_check
        %p778 = pneg %p140
      $region50: #{_lambda_.22} parent=31 // pred_check_branch
        %780 = sbr.rel (%p778) target = $region52
      $region51: #{_lambda_.22} parent=31 // pred_region
        _
      $region52: #{_lambda_.22} parent=31 // pred_fallthru
        _
      // Predicated region
      $region53: #{_lambda_.22} parent=31 // pred_check
        %p781 = pneg %p161
      $region54: #{_lambda_.22} parent=31 // pred_check_branch
        %783 = sbr.rel (%p781) target = $region56
      $region55: #{_lambda_.22} parent=31 // pred_region
        _
      $region56: #{_lambda_.22} parent=31 // pred_fallthru
        _
    $region32: #{_lambda_.22} parent=5 // pred_fallthru
      _
    %p784 = scmp.le.s32.totalorder 2, %s12
    // Predicated region
    $region57: #{_lambda_.22} parent=5 // pred_check
      %p785 = pneg %p784
    $region58: #{_lambda_.22} parent=5 // pred_check_branch
      %787 = sbr.rel (%p785) target = $region60
    $region59: #{_lambda_.22} parent=5 // pred_region
      %s788 = ssub.s32 %s12, 2
      // Predicated region
      $region61: #{_lambda_.22} parent=59 // pred_check
        %p789 = pneg %p125
      $region62: #{_lambda_.22} parent=59 // pred_check_branch
        %791 = sbr.rel (%p789) target = $region64
      $region63: #{_lambda_.22} parent=59 // pred_region
        %s792 = smul.u32 16, %s24
        %p793 = scmp.lt.s32.totalorder %s23, 1
        %s794 = scalar_select %p793, %s23, 1
        %p795 = scmp.lt.s32.totalorder %s792, 47
        %s796 = scalar_select %p795, %s792, 47
        %s797 = smul.addr %s794, 48
        %s798 = sadd.s32 %s796, %s797
        %s799 = smul.addr %s798, 4
        %s800 = scalar_lea.vmem %s3, %s799
      $region64: #{_lambda_.22} parent=59 // pred_fallthru
        _
    $region60: #{_lambda_.22} parent=5 // pred_fallthru
      _
  $region6: #{_lambda_.22} parent=0 // loop_footer
    %s16 = sadd.s32 1, %s12
  $region7: #{_lambda_.22} parent=0 // loop_footer_branch
    %11 = sbr.rel target = $region3
  $region8: #{_lambda_.22} parent=0 // loop_exit
    _

// kernel: _lambda_.23
$region0: #{_lambda_.23}
  #allocation0 [shape = 'u32[]', space=smem, size = 0x4, offset = 0x4, fixed_abs, tag = 'smem constant byte address 0x4 - core index']
  #allocation1 [shape = 'u32[144,128]{1,0:T(1,128)}', space=vmem, size = 0x12000, scoped, tag = 'internal scratch']
  %s0 = inlined_call_operand.vmem [shape: bf16[2,384,128], index: 0, kind: input, shape index: {}]
  %s1 = inlined_call_operand.vmem [shape: bf16[128,128], index: 1, kind: input, shape index: {}]
  %s2 = inlined_call_operand.vmem [shape: f32[1,128], index: 2, kind: input, shape index: {}]
  %s3 = inlined_call_operand.vmem [shape: f32[2,384,128], index: 3, kind: output, shape index: {}]
  %s4 = sld [smem:[#allocation0]]
  $region45: #{_lambda_.23} parent=0
    _
  %s6 = ssub.s32 1, %s4
  %s7 = scalar_select 0, %s6, %s4
  loop: start=0, step=1, limit=8
  $region2: #{_lambda_.23} parent=0 // loop_pre_header
    _
  $region3: #{_lambda_.23} parent=0 // loop_header
    %s9 = sphi 0, %s13
    %p10 = scmp.ge.s32.totalorder %s9, 8
    %s16 = sphi 0, %s28
    %s17 = sphi 0, %s24
    %s18 = sphi 0, %s16
    %s19 = sphi 0, %s17
    %s20 = sphi 0, %s18
    %s21 = sphi 0, %s19
    %s33 = sphi 0, %s35
    %s36 = sphi 0, %s33
    %s37 = sphi 0, %s36
    %s53 = sphi 0, %s37
    %s57 = sphi 0, %s57
    %s59 = sphi 0, %s57
    %s60 = sphi 0, %s59
    %s74 = sphi 0, %s60
    %s78 = sphi 0, %s78
    %s80 = sphi 0, %s78
    %s81 = sphi 0, %s80
    %s95 = sphi 0, %s81
    %s103 = sphi 0, %s105
    %s106 = sphi 0, %s103
    %s107 = sphi 0, %s106
    %s123 = sphi 0, %s107
  $region4: #{_lambda_.23} parent=0 // loop_header_branch
    %12 = sbr.rel (%p10) target = $region8
  $region5: #{_lambda_.23} parent=0 // loop_body
    %s14 = ssub.s32 %s9, 1
    %s15 = ssub.s32 %s9, 2
    %s22 = sadd.s32 1, %s17
    %p23 = scmp.ge.s32.totalorder %s22, 3
    %s24 = scalar_select %p23, 0, %s22
    %s25 = sadd.s32 1, %s16
    %s26 = scalar_select %p23, %s25, %s16
    %p27 = scmp.ge.s32.totalorder %s26, 2
    %s28 = scalar_select %p27, 0, %s26
    %s29 = ssub.s32 %s16, %s28
    %s30 = ssub.s32 %s17, %s24
    %s31 = sor.u32 %s29, %s30
    %p32 = scmp.eq.s32.totalorder %s31, 0
    %s34 = sadd.s32 %s33, 1
    %s35 = scalar_select %p32, %s33, %s34
    %p38 = pneg %p32
    %p39 = scmp.eq.s32.totalorder %s9, 5
    %p40 = por %p38, %p39
    %p41 = scmp.ne.s32.totalorder %s33, %s36
    %p42 = scmp.eq.s32.totalorder %s9, 0
    %p43 = por %p41, %p42
    %p44 = scmp.ne.s32.totalorder %s33, %s36
    %p45 = scmp.eq.s32.totalorder %s14, 5
    %p46 = por %p44, %p45
    %p47 = scmp.ne.s32.totalorder %s36, %s37
    %p48 = scmp.eq.s32.totalorder %s14, 0
    %p49 = por %p47, %p48
    %p50 = scmp.ne.s32.totalorder %s36, %s37
    %p51 = scmp.eq.s32.totalorder %s15, 5
    %p52 = por %p50, %p51
    %p54 = scmp.ne.s32.totalorder %s37, %s53
    %p55 = scmp.eq.s32.totalorder %s15, 0
    %p56 = por %p54, %p55
    %s58 = sadd.s32 %s57, 1
    %p61 = scmp.eq.s32.totalorder %s9, 5
    %p62 = scmp.ne.s32.totalorder %s57, %s59
    %p63 = scmp.eq.s32.totalorder %s9, 0
    %p64 = por %p62, %p63
    %p65 = scmp.ne.s32.totalorder %s57, %s59
    %p66 = scmp.eq.s32.totalorder %s14, 5
    %p67 = por %p65, %p66
    %p68 = scmp.ne.s32.totalorder %s59, %s60
    %p69 = scmp.eq.s32.totalorder %s14, 0
    %p70 = por %p68, %p69
    %p71 = scmp.ne.s32.totalorder %s59, %s60
    %p72 = scmp.eq.s32.totalorder %s15, 5
    %p73 = por %p71, %p72
    %p75 = scmp.ne.s32.totalorder %s60, %s74
    %p76 = scmp.eq.s32.totalorder %s15, 0
    %p77 = por %p75, %p76
    %s79 = sadd.s32 %s78, 1
    %p82 = scmp.eq.s32.totalorder %s9, 5
    %p83 = scmp.ne.s32.totalorder %s78, %s80
    %p84 = scmp.eq.s32.totalorder %s9, 0
    %p85 = por %p83, %p84
    %p86 = scmp.ne.s32.totalorder %s78, %s80
    %p87 = scmp.eq.s32.totalorder %s14, 5
    %p88 = por %p86, %p87
    %p89 = scmp.ne.s32.totalorder %s80, %s81
    %p90 = scmp.eq.s32.totalorder %s14, 0
    %p91 = por %p89, %p90
    %p92 = scmp.ne.s32.totalorder %s80, %s81
    %p93 = scmp.eq.s32.totalorder %s15, 5
    %p94 = por %p92, %p93
    %p96 = scmp.ne.s32.totalorder %s81, %s95
    %p97 = scmp.eq.s32.totalorder %s15, 0
    %p98 = por %p96, %p97
    %s99 = ssub.s32 %s16, %s28
    %s100 = ssub.s32 %s17, %s24
    %s101 = sor.u32 %s99, %s100
    %p102 = scmp.eq.s32.totalorder %s101, 0
    %s104 = sadd.s32 %s103, 1
    %s105 = scalar_select %p102, %s103, %s104
    %p108 = pneg %p102
    %p109 = scmp.eq.s32.totalorder %s9, 5
    %p110 = por %p108, %p109
    %p111 = scmp.ne.s32.totalorder %s103, %s106
    %p112 = scmp.eq.s32.totalorder %s9, 0
    %p113 = por %p111, %p112
    %p114 = scmp.ne.s32.totalorder %s103, %s106
    %p115 = scmp.eq.s32.totalorder %s14, 5
    %p116 = por %p114, %p115
    %p117 = scmp.ne.s32.totalorder %s106, %s107
    %p118 = scmp.eq.s32.totalorder %s14, 0
    %p119 = por %p117, %p118
    %p120 = scmp.ne.s32.totalorder %s106, %s107
    %p121 = scmp.eq.s32.totalorder %s15, 5
    %p122 = por %p120, %p121
    %p124 = scmp.ne.s32.totalorder %s107, %s123
    %p125 = scmp.eq.s32.totalorder %s15, 0
    %p126 = por %p124, %p125
    %p127 = scmp.le.s32.totalorder 1, %s9
    %p128 = scmp.lt.s32.totalorder %s9, 7
    %p129 = pnand %p127, %p128
    %p130 = pneg %p129
    // Predicated region
    $region9: #{_lambda_.23} parent=5 // pred_check
      _
    $region10: #{_lambda_.23} parent=5 // pred_check_branch
      %132 = sbr.rel (%p129) target = $region12
    $region11: #{_lambda_.23} parent=5 // pred_region
      %s133 = ssub.s32 %s9, 1
      // Predicated region
      $region13: #{_lambda_.23} parent=11 // pred_check
        %p134 = pneg %p70
      $region14: #{_lambda_.23} parent=11 // pred_check_branch
        %136 = sbr.rel (%p134) target = $region16
      $region15: #{_lambda_.23} parent=11 // pred_region
        _
      $region16: #{_lambda_.23} parent=11 // pred_fallthru
        _
      // Predicated region
      $region17: #{_lambda_.23} parent=11 // pred_check
        %p137 = pneg %p91
      $region18: #{_lambda_.23} parent=11 // pred_check_branch
        %139 = sbr.rel (%p137) target = $region20
      $region19: #{_lambda_.23} parent=11 // pred_region
        _
      $region20: #{_lambda_.23} parent=11 // pred_fallthru
        _
    $region12: #{_lambda_.23} parent=5 // pred_fallthru
      _
    %p140 = scmp.lt.s32.totalorder %s9, 6
    // Predicated region
    $region21: #{_lambda_.23} parent=5 // pred_check
      %p141 = pneg %p140
    $region22: #{_lambda_.23} parent=5 // pred_check_branch
      %143 = sbr.rel (%p141) target = $region24
    $region23: #{_lambda_.23} parent=5 // pred_region
      // Predicated region
      $region25: #{_lambda_.23} parent=23 // pred_check
        %p144 = pneg %p43
      $region26: #{_lambda_.23} parent=23 // pred_check_branch
        %146 = sbr.rel (%p144) target = $region28
      $region27: #{_lambda_.23} parent=23 // pred_region
        %s147 = smul.u32 16, %s17
        %p148 = scmp.lt.s32.totalorder %s16, 1
        %s149 = scalar_select %p148, %s16, 1
        %p150 = scmp.lt.s32.totalorder %s147, 47
        %s151 = scalar_select %p150, %s147, 47
        %s152 = smul.addr %s149, 48
        %s153 = sadd.s32 %s151, %s152
        %s154 = smul.addr %s153, 4
        %s155 = scalar_lea.vmem %s0, %s154
        %s156 = smul.u32 16, %s17
      $region28: #{_lambda_.23} parent=23 // pred_fallthru
        _
    $region24: #{_lambda_.23} parent=5 // pred_fallthru
      _
    %p157 = scmp.le.s32.totalorder 1, %s9
    %p158 = scmp.lt.s32.totalorder %s9, 7
    %p159 = pnand %p157, %p158
    %p160 = pneg %p159
    // Predicated region
    $region29: #{_lambda_.23} parent=5 // pred_check
      _
    $region30: #{_lambda_.23} parent=5 // pred_check_branch
      %162 = sbr.rel (%p159) target = $region32
    $region31: #{_lambda_.23} parent=5 // pred_region
      %s163 = ssub.s32 %s9, 1
      %s164 = smul.u32 16, %s19
      %p165 = scmp.lt.s32.totalorder %s18, 1
      %s166 = scalar_select %p165, %s18, 1
      %p167 = scmp.lt.s32.totalorder %s164, 47
      %s168 = scalar_select %p167, %s164, 47
      %s169 = smul.addr %s166, 48
      %s170 = sadd.s32 %s168, %s169
      %s171 = smul.addr %s170, 4
      %s172 = scalar_lea.vmem %s0, %s171
      %p173 = pneg %p49
      %p174 = pneg %p46
      %p175 = pneg %p70
      %p176 = pneg %p67
      %p177 = pneg %p91
      %p178 = pneg %p88
      %p179 = pneg %p119
      %p180 = pneg %p116
      %s181 = smul.u32 16, %s19
      %p182 = scmp.lt.s32.totalorder %s18, 1
      %s183 = scalar_select %p182, %s18, 1
      %p184 = scmp.lt.s32.totalorder %s181, 47
      %s185 = scalar_select %p184, %s181, 47
      %s186 = smul.addr %s183, 48
      %s187 = sadd.s32 %s185, %s186
      %s188 = smul.addr %s187, 8
      %s189 = scalar_lea.vmem %s3, %s188
      %s190 = smul.u32 16, %s19
      %p191 = scmp.lt.s32.totalorder %s18, 1
      %s192 = scalar_select %p191, %s18, 1
      %p193 = scmp.lt.s32.totalorder %s190, 47
      %s194 = scalar_select %p193, %s190, 47
      %s195 = smul.addr %s192, 48
      %s196 = sadd.s32 %s194, %s195
      %s197 = smul.addr %s196, 4
      %s198 = scalar_lea.vmem %s0, %s197
      %s199 = smul.u32 16, %s19
      %s200 = smul.u32 16, %s19
      %p201 = scmp.lt.s32.totalorder %s18, 1
      %s202 = scalar_select %p201, %s18, 1
      %p203 = scmp.lt.s32.totalorder %s200, 47
      %s204 = scalar_select %p203, %s200, 47
      %s205 = smul.addr %s202, 48
      %s206 = sadd.s32 %s204, %s205
      %s207 = smul.addr %s206, 8
      %s208 = scalar_lea.vmem %s3, %s207
      %s209 = smul.u32 16, %s19
      %v211 = vld [vmem:[%s198] sm:$0xf]
      %v212 = vld [vmem:[%s198 + $0x4] sm:$0xf]
      %v213 = vld [vmem:[%s198 + $0x8] sm:$0xf]
      %v214 = vld [vmem:[%s198 + $0xc] sm:$0xf]
      %v215 = vld [vmem:[%s198 + $0x10] sm:$0xf]
      %v216 = vld [vmem:[%s198 + $0x14] sm:$0xf]
      %v217 = vld [vmem:[%s198 + $0x18] sm:$0xf]
      %v218 = vld [vmem:[%s198 + $0x1c] sm:$0xf]
      %v219 = vld [vmem:[%s198 + $0x20] sm:$0xf]
      %v220 = vld [vmem:[%s198 + $0x24] sm:$0xf]
      %v221 = vld [vmem:[%s198 + $0x28] sm:$0xf]
      %v222 = vld [vmem:[%s198 + $0x2c] sm:$0xf]
      %v223 = vld [vmem:[%s198 + $0x30] sm:$0xf]
      %v224 = vld [vmem:[%s198 + $0x34] sm:$0xf]
      %v225 = vld [vmem:[%s198 + $0x38] sm:$0xf]
      %v226 = vld [vmem:[%s198 + $0x3c] sm:$0xf]
      %v227 = vld [vmem:[%s1] sm:$0xf]
      %v228 = vld [vmem:[%s1 + $0x4] sm:$0xf]
      %v229 = vld [vmem:[%s1 + $0x8] sm:$0xf]
      %v230 = vld [vmem:[%s1 + $0xc] sm:$0xf]
      %v231 = vld [vmem:[%s1 + $0x10] sm:$0xf]
      %v232 = vld [vmem:[%s1 + $0x14] sm:$0xf]
      %v233 = vld [vmem:[%s1 + $0x18] sm:$0xf]
      %v234 = vld [vmem:[%s1 + $0x1c] sm:$0xf]
      %v235 = vld [vmem:[%s1 + $0x20] sm:$0xf]
      %v236 = vld [vmem:[%s1 + $0x24] sm:$0xf]
      %v237 = vld [vmem:[%s1 + $0x28] sm:$0xf]
      %v238 = vld [vmem:[%s1 + $0x2c] sm:$0xf]
      %v239 = vld [vmem:[%s1 + $0x30] sm:$0xf]
      %v240 = vld [vmem:[%s1 + $0x34] sm:$0xf]
      %v241 = vld [vmem:[%s1 + $0x38] sm:$0xf]
      %v242 = vld [vmem:[%s1 + $0x3c] sm:$0xf]
      %v243 = vld [vmem:[%s2] sm:$0x1]
      %v245 = vlaneseq
      %v246 = vshrl.u32 %v245, 7
      %v247 = vsub.s32 0, %v246
      %v248 = vrot.slane %v243, %v247
      %v266 = vunpack.c.l.b16 %v211
      %v267 = vunpack.c.l.b16 %v212
      %v268 = vunpack.c.l.b16 %v213
      %v269 = vunpack.c.l.b16 %v214
      %v270 = vunpack.c.l.b16 %v215
      %v271 = vunpack.c.l.b16 %v216
      %v272 = vunpack.c.l.b16 %v217
      %v273 = vunpack.c.l.b16 %v218
      %v274 = vunpack.c.l.b16 %v219
      %v275 = vunpack.c.l.b16 %v220
      %v276 = vunpack.c.l.b16 %v221
      %v277 = vunpack.c.l.b16 %v222
      %v278 = vunpack.c.l.b16 %v223
      %v279 = vunpack.c.l.b16 %v224
      %v280 = vunpack.c.l.b16 %v225
      %v281 = vunpack.c.l.b16 %v226
      %v282 = vpack.c.b16 %v267, %v266
      %v283 = vpack.c.b16 %v269, %v268
      %v284 = vpack.c.b16 %v271, %v270
      %v285 = vpack.c.b16 %v273, %v272
      %v286 = vpack.c.b16 %v275, %v274
      %v287 = vpack.c.b16 %v277, %v276
      %v288 = vpack.c.b16 %v279, %v278
      %v289 = vpack.c.b16 %v281, %v280
      %v314 = vunpack.c.l.b16 %v227
      %v315 = vunpack.c.l.b16 %v228
      %v316 = vunpack.c.l.b16 %v229
      %v317 = vunpack.c.l.b16 %v230
      %v318 = vunpack.c.l.b16 %v231
      %v319 = vunpack.c.l.b16 %v232
      %v320 = vunpack.c.l.b16 %v233
      %v321 = vunpack.c.l.b16 %v234
      %v322 = vunpack.c.l.b16 %v235
      %v323 = vunpack.c.l.b16 %v236
      %v324 = vunpack.c.l.b16 %v237
      %v325 = vunpack.c.l.b16 %v238
      %v326 = vunpack.c.l.b16 %v239
      %v327 = vunpack.c.l.b16 %v240
      %v328 = vunpack.c.l.b16 %v241
      %v329 = vunpack.c.l.b16 %v242
      %v330 = vpack.c.b16 %v315, %v314
      %v331 = vpack.c.b16 %v317, %v316
      %v332 = vpack.c.b16 %v319, %v318
      %v333 = vpack.c.b16 %v321, %v320
      %v334 = vpack.c.b16 %v323, %v322
      %v335 = vpack.c.b16 %v325, %v324
      %v336 = vpack.c.b16 %v327, %v326
      %v337 = vpack.c.b16 %v329, %v328
      %346 = vmatprep.subr.bf16.mxu0 0
      %347 = vmatpush1.bf16.msra.mxu0 %v330
      %348 = vmatprep.subr.bf16.mxu0 0
      %349 = vmatpush1.bf16.msra.mxu0 %v331
      %350 = vmatprep.subr.bf16.mxu0 0
      %351 = vmatpush1.bf16.msra.mxu0 %v332
      %352 = vmatprep.subr.bf16.mxu0 0
      %353 = vmatpush1.bf16.msra.mxu0 %v333
      %354 = vmatprep.subr.bf16.mxu0 0
      %355 = vmatpush1.bf16.msra.mxu0 %v334
      %356 = vmatprep.subr.bf16.mxu0 0
      %357 = vmatpush1.bf16.msra.mxu0 %v335
      %358 = vmatprep.subr.bf16.mxu0 0
      %359 = vmatpush1.bf16.msra.mxu0 %v336
      %360 = vmatprep.subr.bf16.mxu0 0
      %361 = vmatpush1.bf16.msra.mxu0 %v337
      %362 = vmatprep.subr.bf16.mxu0 0
      %363 = vmatpush1.bf16.msra.mxu0 0
      %364 = vmatprep.subr.bf16.mxu0 0
      %365 = vmatpush1.bf16.msra.mxu0 0
      %366 = vmatprep.subr.bf16.mxu0 0
      %367 = vmatpush1.bf16.msra.mxu0 0
      %368 = vmatprep.subr.bf16.mxu0 0
      %369 = vmatpush1.bf16.msra.mxu0 0
      %370 = vmatprep.subr.bf16.mxu0 0
      %371 = vmatpush1.bf16.msra.mxu0 0
      %372 = vmatprep.subr.bf16.mxu0 0
      %373 = vmatpush1.bf16.msra.mxu0 0
      %374 = vmatprep.subr.bf16.mxu0 0
      %375 = vmatpush1.bf16.msra.mxu0 0
      %376 = vmatprep.subr.bf16.mxu0 0
      %377 = vmatpush1.bf16.msra.mxu0 0
      %378 = vmatprep.mubr.bf16.mxu0 0
      %379 = vmatmul.mubr.bf16.gmra.mrb[0].mxu0 %v282
      %v380 = vpop.f32.mrb[0].mxu0
      %v381 = vadd.f32 %v248, %v380
      %v382 = vpop.f32.mrb[0].mxu0
      %v383 = vpop.f32.mrb[0].mxu0
      %v384 = vadd.f32 %v248, %v383
      %v385 = vpop.f32.mrb[0].mxu0
      %386 = vmatprep.mubr.bf16.mxu0 0
      %387 = vmatmul.mubr.bf16.gmra.mrb[0].mxu0 %v283
      %v388 = vpop.f32.mrb[0].mxu0
      %v389 = vadd.f32 %v248, %v388
      %v390 = vpop.f32.mrb[0].mxu0
      %v391 = vpop.f32.mrb[0].mxu0
      %v392 = vadd.f32 %v248, %v391
      %v393 = vpop.f32.mrb[0].mxu0
      %394 = vmatprep.mubr.bf16.mxu0 0
      %395 = vmatmul.mubr.bf16.gmra.mrb[0].mxu0 %v284
      %v396 = vpop.f32.mrb[0].mxu0
      %v397 = vadd.f32 %v248, %v396
      %v398 = vpop.f32.mrb[0].mxu0
      %v399 = vpop.f32.mrb[0].mxu0
      %v400 = vadd.f32 %v248, %v399
      %v401 = vpop.f32.mrb[0].mxu0
      %402 = vmatprep.mubr.bf16.mxu0 0
      %403 = vmatmul.mubr.bf16.gmra.mrb[0].mxu0 %v285
      %v404 = vpop.f32.mrb[0].mxu0
      %v405 = vadd.f32 %v248, %v404
      %v406 = vpop.f32.mrb[0].mxu0
      %v407 = vpop.f32.mrb[0].mxu0
      %v408 = vadd.f32 %v248, %v407
      %v409 = vpop.f32.mrb[0].mxu0
      %410 = vmatprep.mubr.bf16.mxu0 0
      %411 = vmatmul.mubr.bf16.gmra.mrb[0].mxu0 %v286
      %v412 = vpop.f32.mrb[0].mxu0
      %v413 = vadd.f32 %v248, %v412
      %v414 = vpop.f32.mrb[0].mxu0
      %v415 = vpop.f32.mrb[0].mxu0
      %v416 = vadd.f32 %v248, %v415
      %v417 = vpop.f32.mrb[0].mxu0
      %418 = vmatprep.mubr.bf16.mxu0 0
      %419 = vmatmul.mubr.bf16.gmra.mrb[0].mxu0 %v287
      %v420 = vpop.f32.mrb[0].mxu0
      %v421 = vadd.f32 %v248, %v420
      %v422 = vpop.f32.mrb[0].mxu0
      %v423 = vpop.f32.mrb[0].mxu0
      %v424 = vadd.f32 %v248, %v423
      %v425 = vpop.f32.mrb[0].mxu0
      %426 = vmatprep.mubr.bf16.mxu0 0
      %427 = vmatmul.mubr.bf16.gmra.mrb[0].mxu0 %v288
      %v428 = vpop.f32.mrb[0].mxu0
      %v429 = vadd.f32 %v248, %v428
      %v430 = vpop.f32.mrb[0].mxu0
      %v431 = vpop.f32.mrb[0].mxu0
      %v432 = vadd.f32 %v248, %v431
      %v433 = vpop.f32.mrb[0].mxu0
      %434 = vmatprep.mubr.bf16.mxu0 0
      %435 = vmatmul.mubr.bf16.gmra.mrb[0].mxu0 %v289
      %v436 = vpop.f32.mrb[0].mxu0
      %v437 = vadd.f32 %v248, %v436
      %v438 = vpop.f32.mrb[0].mxu0
      %v439 = vpop.f32.mrb[0].mxu0
      %v440 = vadd.f32 %v248, %v439
      %v441 = vpop.f32.mrb[0].mxu0
      %442 = vdwg.mxu0
      %v443 = vlaneseq
      %v444 = vand.u32 %v443, 127
      %vm445 = vcmp.lt.s32.totalorder %v444, 4
      %v446 = vsel %vm445, %v381, -1e+30
      %v447 = vsel %vm445, %v384, -1e+30
      %v448 = vsel %vm445, %v389, -1e+30
      %v449 = vsel %vm445, %v392, -1e+30
      %v450 = vsel %vm445, %v397, -1e+30
      %v451 = vsel %vm445, %v400, -1e+30
      %v452 = vsel %vm445, %v405, -1e+30
      %v453 = vsel %vm445, %v408, -1e+30
      %v454 = vsel %vm445, %v413, -1e+30
      %v455 = vsel %vm445, %v416, -1e+30
      %v456 = vsel %vm445, %v421, -1e+30
      %v457 = vsel %vm445, %v424, -1e+30
      %v458 = vsel %vm445, %v429, -1e+30
      %v459 = vsel %vm445, %v432, -1e+30
      %v460 = vsel %vm445, %v437, -1e+30
      %v461 = vsel %vm445, %v440, -1e+30
      %462 = vmax.xlane.f32.xlu0 %v446
      %v463 = vpop.xlane.xlu0 %462
      %464 = vmax.xlane.f32.xlu0 %v447
      %v465 = vpop.xlane.xlu0 %464
      %466 = vmax.xlane.f32.xlu0 %v448
      %v467 = vpop.xlane.xlu0 %466
      %468 = vmax.xlane.f32.xlu0 %v449
      %v469 = vpop.xlane.xlu0 %468
      %470 = vmax.xlane.f32.xlu0 %v450
      %v471 = vpop.xlane.xlu0 %470
      %472 = vmax.xlane.f32.xlu0 %v451
      %v473 = vpop.xlane.xlu0 %472
      %474 = vmax.xlane.f32.xlu0 %v452
      %v475 = vpop.xlane.xlu0 %474
      %476 = vmax.xlane.f32.xlu0 %v453
      %v477 = vpop.xlane.xlu0 %476
      %478 = vmax.xlane.f32.xlu0 %v454
      %v479 = vpop.xlane.xlu0 %478
      %480 = vmax.xlane.f32.xlu0 %v455
      %v481 = vpop.xlane.xlu0 %480
      %482 = vmax.xlane.f32.xlu0 %v456
      %v483 = vpop.xlane.xlu0 %482
      %484 = vmax.xlane.f32.xlu0 %v457
      %v485 = vpop.xlane.xlu0 %484
      %486 = vmax.xlane.f32.xlu0 %v458
      %v487 = vpop.xlane.xlu0 %486
      %488 = vmax.xlane.f32.xlu0 %v459
      %v489 = vpop.xlane.xlu0 %488
      %490 = vmax.xlane.f32.xlu0 %v460
      %v491 = vpop.xlane.xlu0 %490
      %492 = vmax.xlane.f32.xlu0 %v461
      %v493 = vpop.xlane.xlu0 %492
      %v494 = vsub.f32 %v446, %v463
      %v495 = vsub.f32 %v447, %v465
      %v496 = vsub.f32 %v448, %v467
      %v497 = vsub.f32 %v449, %v469
      %v498 = vsub.f32 %v450, %v471
      %v499 = vsub.f32 %v451, %v473
      %v500 = vsub.f32 %v452, %v475
      %v501 = vsub.f32 %v453, %v477
      %v502 = vsub.f32 %v454, %v479
      %v503 = vsub.f32 %v455, %v481
      %v504 = vsub.f32 %v456, %v483
      %v505 = vsub.f32 %v457, %v485
      %v506 = vsub.f32 %v458, %v487
      %v507 = vsub.f32 %v459, %v489
      %v508 = vsub.f32 %v460, %v491
      %v509 = vsub.f32 %v461, %v493
      %v510 = vmul.f32 %v494, 1.442695
      %v511 = vpow.pop %v510
      %v512 = vmul.f32 %v495, 1.442695
      %v513 = vpow.pop %v512
      %v514 = vmul.f32 %v496, 1.442695
      %v515 = vpow.pop %v514
      %v516 = vmul.f32 %v497, 1.442695
      %v517 = vpow.pop %v516
      %v518 = vmul.f32 %v498, 1.442695
      %v519 = vpow.pop %v518
      %v520 = vmul.f32 %v499, 1.442695
      %v521 = vpow.pop %v520
      %v522 = vmul.f32 %v500, 1.442695
      %v523 = vpow.pop %v522
      %v524 = vmul.f32 %v501, 1.442695
      %v525 = vpow.pop %v524
      %v526 = vmul.f32 %v502, 1.442695
      %v527 = vpow.pop %v526
      %v528 = vmul.f32 %v503, 1.442695
      %v529 = vpow.pop %v528
      %v530 = vmul.f32 %v504, 1.442695
      %v531 = vpow.pop %v530
      %v532 = vmul.f32 %v505, 1.442695
      %v533 = vpow.pop %v532
      %v534 = vmul.f32 %v506, 1.442695
      %v535 = vpow.pop %v534
      %v536 = vmul.f32 %v507, 1.442695
      %v537 = vpow.pop %v536
      %v538 = vmul.f32 %v508, 1.442695
      %v539 = vpow.pop %v538
      %v540 = vmul.f32 %v509, 1.442695
      %v541 = vpow.pop %v540
      %v542 = vsel %vm445, %v511, 0.0
      %v543 = vsel %vm445, %v513, 0.0
      %v544 = vsel %vm445, %v515, 0.0
      %v545 = vsel %vm445, %v517, 0.0
      %v546 = vsel %vm445, %v519, 0.0
      %v547 = vsel %vm445, %v521, 0.0
      %v548 = vsel %vm445, %v523, 0.0
      %v549 = vsel %vm445, %v525, 0.0
      %v550 = vsel %vm445, %v527, 0.0
      %v551 = vsel %vm445, %v529, 0.0
      %v552 = vsel %vm445, %v531, 0.0
      %v553 = vsel %vm445, %v533, 0.0
      %v554 = vsel %vm445, %v535, 0.0
      %v555 = vsel %vm445, %v537, 0.0
      %v556 = vsel %vm445, %v539, 0.0
      %v557 = vsel %vm445, %v541, 0.0
      %558 = vadd.xlane.f32.xlu0 %v542
      %v559 = vpop.xlane.xlu0 %558
      %560 = vadd.xlane.f32.xlu0 %v543
      %v561 = vpop.xlane.xlu0 %560
      %562 = vadd.xlane.f32.xlu0 %v544
      %v563 = vpop.xlane.xlu0 %562
      %564 = vadd.xlane.f32.xlu0 %v545
      %v565 = vpop.xlane.xlu0 %564
      %566 = vadd.xlane.f32.xlu0 %v546
      %v567 = vpop.xlane.xlu0 %566
      %568 = vadd.xlane.f32.xlu0 %v547
      %v569 = vpop.xlane.xlu0 %568
      %570 = vadd.xlane.f32.xlu0 %v548
      %v571 = vpop.xlane.xlu0 %570
      %572 = vadd.xlane.f32.xlu0 %v549
      %v573 = vpop.xlane.xlu0 %572
      %574 = vadd.xlane.f32.xlu0 %v550
      %v575 = vpop.xlane.xlu0 %574
      %576 = vadd.xlane.f32.xlu0 %v551
      %v577 = vpop.xlane.xlu0 %576
      %578 = vadd.xlane.f32.xlu0 %v552
      %v579 = vpop.xlane.xlu0 %578
      %580 = vadd.xlane.f32.xlu0 %v553
      %v581 = vpop.xlane.xlu0 %580
      %582 = vadd.xlane.f32.xlu0 %v554
      %v583 = vpop.xlane.xlu0 %582
      %584 = vadd.xlane.f32.xlu0 %v555
      %v585 = vpop.xlane.xlu0 %584
      %586 = vadd.xlane.f32.xlu0 %v556
      %v587 = vpop.xlane.xlu0 %586
      %588 = vadd.xlane.f32.xlu0 %v557
      %v589 = vpop.xlane.xlu0 %588
      %v590 = vrcp.pop %v559
      %v591 = vmul.f32 %v542, %v590
      %v592 = vrcp.pop %v561
      %v593 = vmul.f32 %v543, %v592
      %v594 = vrcp.pop %v563
      %v595 = vmul.f32 %v544, %v594
      %v596 = vrcp.pop %v565
      %v597 = vmul.f32 %v545, %v596
      %v598 = vrcp.pop %v567
      %v599 = vmul.f32 %v546, %v598
      %v600 = vrcp.pop %v569
      %v601 = vmul.f32 %v547, %v600
      %v602 = vrcp.pop %v571
      %v603 = vmul.f32 %v548, %v602
      %v604 = vrcp.pop %v573
      %v605 = vmul.f32 %v549, %v604
      %v606 = vrcp.pop %v575
      %v607 = vmul.f32 %v550, %v606
      %v608 = vrcp.pop %v577
      %v609 = vmul.f32 %v551, %v608
      %v610 = vrcp.pop %v579
      %v611 = vmul.f32 %v552, %v610
      %v612 = vrcp.pop %v581
      %v613 = vmul.f32 %v553, %v612
      %v614 = vrcp.pop %v583
      %v615 = vmul.f32 %v554, %v614
      %v616 = vrcp.pop %v585
      %v617 = vmul.f32 %v555, %v616
      %v618 = vrcp.pop %v587
      %v619 = vmul.f32 %v556, %v618
      %v620 = vrcp.pop %v589
      %v621 = vmul.f32 %v557, %v620
      %622 = vst [vmem:[%s208] sm:$0xff] %v591
      %623 = vst [vmem:[%s208 + $0x8] sm:$0xff] %v593
      %624 = vst [vmem:[%s208 + $0x10] sm:$0xff] %v595
      %625 = vst [vmem:[%s208 + $0x18] sm:$0xff] %v597
      %626 = vst [vmem:[%s208 + $0x20] sm:$0xff] %v599
      %627 = vst [vmem:[%s208 + $0x28] sm:$0xff] %v601
      %628 = vst [vmem:[%s208 + $0x30] sm:$0xff] %v603
      %629 = vst [vmem:[%s208 + $0x38] sm:$0xff] %v605
      %630 = vst [vmem:[%s208 + $0x40] sm:$0xff] %v607
      %631 = vst [vmem:[%s208 + $0x48] sm:$0xff] %v609
      %632 = vst [vmem:[%s208 + $0x50] sm:$0xff] %v611
      %633 = vst [vmem:[%s208 + $0x58] sm:$0xff] %v613
      %634 = vst [vmem:[%s208 + $0x60] sm:$0xff] %v615
      %635 = vst [vmem:[%s208 + $0x68] sm:$0xff] %v617
      %636 = vst [vmem:[%s208 + $0x70] sm:$0xff] %v619
      %637 = vst [vmem:[%s208 + $0x78] sm:$0xff] %v621
      %s638 = smul.u32 16, %s19
      %p639 = scmp.lt.s32.totalorder %s18, 1
      %s640 = scalar_select %p639, %s18, 1
      %p641 = scmp.lt.s32.totalorder %s638, 47
      %s642 = scalar_select %p641, %s638, 47
      %s643 = smul.addr %s640, 48
      %s644 = sadd.s32 %s642, %s643
      %s645 = smul.addr %s644, 8
      %s646 = scalar_lea.vmem %s3, %s645
      // Predicated region
      $region33: #{_lambda_.23} parent=31 // pred_check
        %p647 = pneg %p116
      $region34: #{_lambda_.23} parent=31 // pred_check_branch
        %649 = sbr.rel (%p647) target = $region36
      $region35: #{_lambda_.23} parent=31 // pred_region
        %s650 = smul.u32 16, %s19
      $region36: #{_lambda_.23} parent=31 // pred_fallthru
        _
    $region32: #{_lambda_.23} parent=5 // pred_fallthru
      _
    %p651 = scmp.le.s32.totalorder 2, %s9
    // Predicated region
    $region37: #{_lambda_.23} parent=5 // pred_check
      %p652 = pneg %p651
    $region38: #{_lambda_.23} parent=5 // pred_check_branch
      %654 = sbr.rel (%p652) target = $region40
    $region39: #{_lambda_.23} parent=5 // pred_region
      %s655 = ssub.s32 %s9, 2
      // Predicated region
      $region41: #{_lambda_.23} parent=39 // pred_check
        %p656 = pneg %p122
      $region42: #{_lambda_.23} parent=39 // pred_check_branch
        %658 = sbr.rel (%p656) target = $region44
      $region43: #{_lambda_.23} parent=39 // pred_region
        %s659 = smul.u32 16, %s21
        %p660 = scmp.lt.s32.totalorder %s20, 1
        %s661 = scalar_select %p660, %s20, 1
        %p662 = scmp.lt.s32.totalorder %s659, 47
        %s663 = scalar_select %p662, %s659, 47
        %s664 = smul.addr %s661, 48
        %s665 = sadd.s32 %s663, %s664
        %s666 = smul.addr %s665, 8
        %s667 = scalar_lea.vmem %s3, %s666
      $region44: #{_lambda_.23} parent=39 // pred_fallthru
        _
    $region40: #{_lambda_.23} parent=5 // pred_fallthru
      _
  $region6: #{_lambda_.23} parent=0 // loop_footer
    %s13 = sadd.s32 1, %s9
  $region7: #{_lambda_.23} parent=0 // loop_footer_branch
    %8 = sbr.rel target = $region3
  $region8: #{_lambda_.23} parent=0 // loop_exit
    _

// kernel: _lambda_.21
$region0: #{_lambda_.21}
  #allocation0 [shape = 'u32[]', space=smem, size = 0x4, offset = 0x4, fixed_abs, tag = 'smem constant byte address 0x4 - core index']
  #allocation1 [shape = 'u32[144,128]{1,0:T(1,128)}', space=vmem, size = 0x12000, scoped, tag = 'internal scratch']
  %s0 = inlined_call_operand.vmem [shape: bf16[2,384,128], index: 0, kind: input, shape index: {}]
  %s1 = inlined_call_operand.vmem [shape: bf16[128,128], index: 1, kind: input, shape index: {}]
  %s2 = inlined_call_operand.vmem [shape: f32[1,128], index: 2, kind: input, shape index: {}]
  %s3 = inlined_call_operand.vmem [shape: f32[2,384,128], index: 3, kind: output, shape index: {}]
  %s4 = sld [smem:[#allocation0]]
  $region45: #{_lambda_.21} parent=0
    _
  %s6 = ssub.s32 1, %s4
  %s7 = scalar_select 0, %s6, %s4
  loop: start=0, step=1, limit=8
  $region2: #{_lambda_.21} parent=0 // loop_pre_header
    _
  $region3: #{_lambda_.21} parent=0 // loop_header
    %s9 = sphi 0, %s13
    %p10 = scmp.ge.s32.totalorder %s9, 8
    %s16 = sphi 0, %s28
    %s17 = sphi 0, %s24
    %s18 = sphi 0, %s16
    %s19 = sphi 0, %s17
    %s20 = sphi 0, %s18
    %s21 = sphi 0, %s19
    %s33 = sphi 0, %s35
    %s36 = sphi 0, %s33
    %s37 = sphi 0, %s36
    %s53 = sphi 0, %s37
    %s57 = sphi 0, %s57
    %s59 = sphi 0, %s57
    %s60 = sphi 0, %s59
    %s74 = sphi 0, %s60
    %s78 = sphi 0, %s78
    %s80 = sphi 0, %s78
    %s81 = sphi 0, %s80
    %s95 = sphi 0, %s81
    %s103 = sphi 0, %s105
    %s106 = sphi 0, %s103
    %s107 = sphi 0, %s106
    %s123 = sphi 0, %s107
  $region4: #{_lambda_.21} parent=0 // loop_header_branch
    %12 = sbr.rel (%p10) target = $region8
  $region5: #{_lambda_.21} parent=0 // loop_body
    %s14 = ssub.s32 %s9, 1
    %s15 = ssub.s32 %s9, 2
    %s22 = sadd.s32 1, %s17
    %p23 = scmp.ge.s32.totalorder %s22, 3
    %s24 = scalar_select %p23, 0, %s22
    %s25 = sadd.s32 1, %s16
    %s26 = scalar_select %p23, %s25, %s16
    %p27 = scmp.ge.s32.totalorder %s26, 2
    %s28 = scalar_select %p27, 0, %s26
    %s29 = ssub.s32 %s16, %s28
    %s30 = ssub.s32 %s17, %s24
    %s31 = sor.u32 %s29, %s30
    %p32 = scmp.eq.s32.totalorder %s31, 0
    %s34 = sadd.s32 %s33, 1
    %s35 = scalar_select %p32, %s33, %s34
    %p38 = pneg %p32
    %p39 = scmp.eq.s32.totalorder %s9, 5
    %p40 = por %p38, %p39
    %p41 = scmp.ne.s32.totalorder %s33, %s36
    %p42 = scmp.eq.s32.totalorder %s9, 0
    %p43 = por %p41, %p42
    %p44 = scmp.ne.s32.totalorder %s33, %s36
    %p45 = scmp.eq.s32.totalorder %s14, 5
    %p46 = por %p44, %p45
    %p47 = scmp.ne.s32.totalorder %s36, %s37
    %p48 = scmp.eq.s32.totalorder %s14, 0
    %p49 = por %p47, %p48
    %p50 = scmp.ne.s32.totalorder %s36, %s37
    %p51 = scmp.eq.s32.totalorder %s15, 5
    %p52 = por %p50, %p51
    %p54 = scmp.ne.s32.totalorder %s37, %s53
    %p55 = scmp.eq.s32.totalorder %s15, 0
    %p56 = por %p54, %p55
    %s58 = sadd.s32 %s57, 1
    %p61 = scmp.eq.s32.totalorder %s9, 5
    %p62 = scmp.ne.s32.totalorder %s57, %s59
    %p63 = scmp.eq.s32.totalorder %s9, 0
    %p64 = por %p62, %p63
    %p65 = scmp.ne.s32.totalorder %s57, %s59
    %p66 = scmp.eq.s32.totalorder %s14, 5
    %p67 = por %p65, %p66
    %p68 = scmp.ne.s32.totalorder %s59, %s60
    %p69 = scmp.eq.s32.totalorder %s14, 0
    %p70 = por %p68, %p69
    %p71 = scmp.ne.s32.totalorder %s59, %s60
    %p72 = scmp.eq.s32.totalorder %s15, 5
    %p73 = por %p71, %p72
    %p75 = scmp.ne.s32.totalorder %s60, %s74
    %p76 = scmp.eq.s32.totalorder %s15, 0
    %p77 = por %p75, %p76
    %s79 = sadd.s32 %s78, 1
    %p82 = scmp.eq.s32.totalorder %s9, 5
    %p83 = scmp.ne.s32.totalorder %s78, %s80
    %p84 = scmp.eq.s32.totalorder %s9, 0
    %p85 = por %p83, %p84
    %p86 = scmp.ne.s32.totalorder %s78, %s80
    %p87 = scmp.eq.s32.totalorder %s14, 5
    %p88 = por %p86, %p87
    %p89 = scmp.ne.s32.totalorder %s80, %s81
    %p90 = scmp.eq.s32.totalorder %s14, 0
    %p91 = por %p89, %p90
    %p92 = scmp.ne.s32.totalorder %s80, %s81
    %p93 = scmp.eq.s32.totalorder %s15, 5
    %p94 = por %p92, %p93
    %p96 = scmp.ne.s32.totalorder %s81, %s95
    %p97 = scmp.eq.s32.totalorder %s15, 0
    %p98 = por %p96, %p97
    %s99 = ssub.s32 %s16, %s28
    %s100 = ssub.s32 %s17, %s24
    %s101 = sor.u32 %s99, %s100
    %p102 = scmp.eq.s32.totalorder %s101, 0
    %s104 = sadd.s32 %s103, 1
    %s105 = scalar_select %p102, %s103, %s104
    %p108 = pneg %p102
    %p109 = scmp.eq.s32.totalorder %s9, 5
    %p110 = por %p108, %p109
    %p111 = scmp.ne.s32.totalorder %s103, %s106
    %p112 = scmp.eq.s32.totalorder %s9, 0
    %p113 = por %p111, %p112
    %p114 = scmp.ne.s32.totalorder %s103, %s106
    %p115 = scmp.eq.s32.totalorder %s14, 5
    %p116 = por %p114, %p115
    %p117 = scmp.ne.s32.totalorder %s106, %s107
    %p118 = scmp.eq.s32.totalorder %s14, 0
    %p119 = por %p117, %p118
    %p120 = scmp.ne.s32.totalorder %s106, %s107
    %p121 = scmp.eq.s32.totalorder %s15, 5
    %p122 = por %p120, %p121
    %p124 = scmp.ne.s32.totalorder %s107, %s123
    %p125 = scmp.eq.s32.totalorder %s15, 0
    %p126 = por %p124, %p125
    %p127 = scmp.le.s32.totalorder 1, %s9
    %p128 = scmp.lt.s32.totalorder %s9, 7
    %p129 = pnand %p127, %p128
    %p130 = pneg %p129
    // Predicated region
    $region9: #{_lambda_.21} parent=5 // pred_check
      _
    $region10: #{_lambda_.21} parent=5 // pred_check_branch
      %132 = sbr.rel (%p129) target = $region12
    $region11: #{_lambda_.21} parent=5 // pred_region
      %s133 = ssub.s32 %s9, 1
      // Predicated region
      $region13: #{_lambda_.21} parent=11 // pred_check
        %p134 = pneg %p70
      $region14: #{_lambda_.21} parent=11 // pred_check_branch
        %136 = sbr.rel (%p134) target = $region16
      $region15: #{_lambda_.21} parent=11 // pred_region
        _
      $region16: #{_lambda_.21} parent=11 // pred_fallthru
        _
      // Predicated region
      $region17: #{_lambda_.21} parent=11 // pred_check
        %p137 = pneg %p91
      $region18: #{_lambda_.21} parent=11 // pred_check_branch
        %139 = sbr.rel (%p137) target = $region20
      $region19: #{_lambda_.21} parent=11 // pred_region
        _
      $region20: #{_lambda_.21} parent=11 // pred_fallthru
        _
    $region12: #{_lambda_.21} parent=5 // pred_fallthru
      _
    %p140 = scmp.lt.s32.totalorder %s9, 6
    // Predicated region
    $region21: #{_lambda_.21} parent=5 // pred_check
      %p141 = pneg %p140
    $region22: #{_lambda_.21} parent=5 // pred_check_branch
      %143 = sbr.rel (%p141) target = $region24
    $region23: #{_lambda_.21} parent=5 // pred_region
      // Predicated region
      $region25: #{_lambda_.21} parent=23 // pred_check
        %p144 = pneg %p43
      $region26: #{_lambda_.21} parent=23 // pred_check_branch
        %146 = sbr.rel (%p144) target = $region28
      $region27: #{_lambda_.21} parent=23 // pred_region
        %s147 = smul.u32 16, %s17
        %p148 = scmp.lt.s32.totalorder %s16, 1
        %s149 = scalar_select %p148, %s16, 1
        %p150 = scmp.lt.s32.totalorder %s147, 47
        %s151 = scalar_select %p150, %s147, 47
        %s152 = smul.addr %s149, 48
        %s153 = sadd.s32 %s151, %s152
        %s154 = smul.addr %s153, 4
        %s155 = scalar_lea.vmem %s0, %s154
        %s156 = smul.u32 16, %s17
      $region28: #{_lambda_.21} parent=23 // pred_fallthru
        _
    $region24: #{_lambda_.21} parent=5 // pred_fallthru
      _
    %p157 = scmp.le.s32.totalorder 1, %s9
    %p158 = scmp.lt.s32.totalorder %s9, 7
    %p159 = pnand %p157, %p158
    %p160 = pneg %p159
    // Predicated region
    $region29: #{_lambda_.21} parent=5 // pred_check
      _
    $region30: #{_lambda_.21} parent=5 // pred_check_branch
      %162 = sbr.rel (%p159) target = $region32
    $region31: #{_lambda_.21} parent=5 // pred_region
      %s163 = ssub.s32 %s9, 1
      %s164 = smul.u32 16, %s19
      %p165 = scmp.lt.s32.totalorder %s18, 1
      %s166 = scalar_select %p165, %s18, 1
      %p167 = scmp.lt.s32.totalorder %s164, 47
      %s168 = scalar_select %p167, %s164, 47
      %s169 = smul.addr %s166, 48
      %s170 = sadd.s32 %s168, %s169
      %s171 = smul.addr %s170, 4
      %s172 = scalar_lea.vmem %s0, %s171
      %p173 = pneg %p49
      %p174 = pneg %p46
      %p175 = pneg %p70
      %p176 = pneg %p67
      %p177 = pneg %p91
      %p178 = pneg %p88
      %p179 = pneg %p119
      %p180 = pneg %p116
      %s181 = smul.u32 16, %s19
      %p182 = scmp.lt.s32.totalorder %s18, 1
      %s183 = scalar_select %p182, %s18, 1
      %p184 = scmp.lt.s32.totalorder %s181, 47
      %s185 = scalar_select %p184, %s181, 47
      %s186 = smul.addr %s183, 48
      %s187 = sadd.s32 %s185, %s186
      %s188 = smul.addr %s187, 8
      %s189 = scalar_lea.vmem %s3, %s188
      %s190 = smul.u32 16, %s19
      %p191 = scmp.lt.s32.totalorder %s18, 1
      %s192 = scalar_select %p191, %s18, 1
      %p193 = scmp.lt.s32.totalorder %s190, 47
      %s194 = scalar_select %p193, %s190, 47
      %s195 = smul.addr %s192, 48
      %s196 = sadd.s32 %s194, %s195
      %s197 = smul.addr %s196, 4
      %s198 = scalar_lea.vmem %s0, %s197
      %s199 = smul.u32 16, %s19
      %s200 = smul.u32 16, %s19
      %p201 = scmp.lt.s32.totalorder %s18, 1
      %s202 = scalar_select %p201, %s18, 1
      %p203 = scmp.lt.s32.totalorder %s200, 47
      %s204 = scalar_select %p203, %s200, 47
      %s205 = smul.addr %s202, 48
      %s206 = sadd.s32 %s204, %s205
      %s207 = smul.addr %s206, 8
      %s208 = scalar_lea.vmem %s3, %s207
      %s209 = smul.u32 16, %s19
      %v211 = vld [vmem:[%s198] sm:$0xf]
      %v212 = vld [vmem:[%s198 + $0x4] sm:$0xf]
      %v213 = vld [vmem:[%s198 + $0x8] sm:$0xf]
      %v214 = vld [vmem:[%s198 + $0xc] sm:$0xf]
      %v215 = vld [vmem:[%s198 + $0x10] sm:$0xf]
      %v216 = vld [vmem:[%s198 + $0x14] sm:$0xf]
      %v217 = vld [vmem:[%s198 + $0x18] sm:$0xf]
      %v218 = vld [vmem:[%s198 + $0x1c] sm:$0xf]
      %v219 = vld [vmem:[%s198 + $0x20] sm:$0xf]
      %v220 = vld [vmem:[%s198 + $0x24] sm:$0xf]
      %v221 = vld [vmem:[%s198 + $0x28] sm:$0xf]
      %v222 = vld [vmem:[%s198 + $0x2c] sm:$0xf]
      %v223 = vld [vmem:[%s198 + $0x30] sm:$0xf]
      %v224 = vld [vmem:[%s198 + $0x34] sm:$0xf]
      %v225 = vld [vmem:[%s198 + $0x38] sm:$0xf]
      %v226 = vld [vmem:[%s198 + $0x3c] sm:$0xf]
      %v227 = vld [vmem:[%s1] sm:$0xf]
      %v228 = vld [vmem:[%s1 + $0x4] sm:$0xf]
      %v229 = vld [vmem:[%s1 + $0x8] sm:$0xf]
      %v230 = vld [vmem:[%s1 + $0xc] sm:$0xf]
      %v231 = vld [vmem:[%s1 + $0x10] sm:$0xf]
      %v232 = vld [vmem:[%s1 + $0x14] sm:$0xf]
      %v233 = vld [vmem:[%s1 + $0x18] sm:$0xf]
      %v234 = vld [vmem:[%s1 + $0x1c] sm:$0xf]
      %v235 = vld [vmem:[%s1 + $0x20] sm:$0xf]
      %v236 = vld [vmem:[%s1 + $0x24] sm:$0xf]
      %v237 = vld [vmem:[%s1 + $0x28] sm:$0xf]
      %v238 = vld [vmem:[%s1 + $0x2c] sm:$0xf]
      %v239 = vld [vmem:[%s1 + $0x30] sm:$0xf]
      %v240 = vld [vmem:[%s1 + $0x34] sm:$0xf]
      %v241 = vld [vmem:[%s1 + $0x38] sm:$0xf]
      %v242 = vld [vmem:[%s1 + $0x3c] sm:$0xf]
      %v243 = vld [vmem:[%s2] sm:$0x1]
      %v245 = vlaneseq
      %v246 = vshrl.u32 %v245, 7
      %v247 = vsub.s32 0, %v246
      %v248 = vrot.slane %v243, %v247
      %v266 = vunpack.c.l.b16 %v211
      %v267 = vunpack.c.l.b16 %v212
      %v268 = vunpack.c.l.b16 %v213
      %v269 = vunpack.c.l.b16 %v214
      %v270 = vunpack.c.l.b16 %v215
      %v271 = vunpack.c.l.b16 %v216
      %v272 = vunpack.c.l.b16 %v217
      %v273 = vunpack.c.l.b16 %v218
      %v274 = vunpack.c.l.b16 %v219
      %v275 = vunpack.c.l.b16 %v220
      %v276 = vunpack.c.l.b16 %v221
      %v277 = vunpack.c.l.b16 %v222
      %v278 = vunpack.c.l.b16 %v223
      %v279 = vunpack.c.l.b16 %v224
      %v280 = vunpack.c.l.b16 %v225
      %v281 = vunpack.c.l.b16 %v226
      %v282 = vpack.c.b16 %v267, %v266
      %v283 = vpack.c.b16 %v269, %v268
      %v284 = vpack.c.b16 %v271, %v270
      %v285 = vpack.c.b16 %v273, %v272
      %v286 = vpack.c.b16 %v275, %v274
      %v287 = vpack.c.b16 %v277, %v276
      %v288 = vpack.c.b16 %v279, %v278
      %v289 = vpack.c.b16 %v281, %v280
      %v314 = vunpack.c.l.b16 %v227
      %v315 = vunpack.c.l.b16 %v228
      %v316 = vunpack.c.l.b16 %v229
      %v317 = vunpack.c.l.b16 %v230
      %v318 = vunpack.c.l.b16 %v231
      %v319 = vunpack.c.l.b16 %v232
      %v320 = vunpack.c.l.b16 %v233
      %v321 = vunpack.c.l.b16 %v234
      %v322 = vunpack.c.l.b16 %v235
      %v323 = vunpack.c.l.b16 %v236
      %v324 = vunpack.c.l.b16 %v237
      %v325 = vunpack.c.l.b16 %v238
      %v326 = vunpack.c.l.b16 %v239
      %v327 = vunpack.c.l.b16 %v240
      %v328 = vunpack.c.l.b16 %v241
      %v329 = vunpack.c.l.b16 %v242
      %v330 = vpack.c.b16 %v315, %v314
      %v331 = vpack.c.b16 %v317, %v316
      %v332 = vpack.c.b16 %v319, %v318
      %v333 = vpack.c.b16 %v321, %v320
      %v334 = vpack.c.b16 %v323, %v322
      %v335 = vpack.c.b16 %v325, %v324
      %v336 = vpack.c.b16 %v327, %v326
      %v337 = vpack.c.b16 %v329, %v328
      %346 = vmatprep.subr.bf16.mxu0 0
      %347 = vmatpush1.bf16.msra.mxu0 %v330
      %348 = vmatprep.subr.bf16.mxu0 0
      %349 = vmatpush1.bf16.msra.mxu0 %v331
      %350 = vmatprep.subr.bf16.mxu0 0
      %351 = vmatpush1.bf16.msra.mxu0 %v332
      %352 = vmatprep.subr.bf16.mxu0 0
      %353 = vmatpush1.bf16.msra.mxu0 %v333
      %354 = vmatprep.subr.bf16.mxu0 0
      %355 = vmatpush1.bf16.msra.mxu0 %v334
      %356 = vmatprep.subr.bf16.mxu0 0
      %357 = vmatpush1.bf16.msra.mxu0 %v335
      %358 = vmatprep.subr.bf16.mxu0 0
      %359 = vmatpush1.bf16.msra.mxu0 %v336
      %360 = vmatprep.subr.bf16.mxu0 0
      %361 = vmatpush1.bf16.msra.mxu0 %v337
      %362 = vmatprep.subr.bf16.mxu0 0
      %363 = vmatpush1.bf16.msra.mxu0 0
      %364 = vmatprep.subr.bf16.mxu0 0
      %365 = vmatpush1.bf16.msra.mxu0 0
      %366 = vmatprep.subr.bf16.mxu0 0
      %367 = vmatpush1.bf16.msra.mxu0 0
      %368 = vmatprep.subr.bf16.mxu0 0
      %369 = vmatpush1.bf16.msra.mxu0 0
      %370 = vmatprep.subr.bf16.mxu0 0
      %371 = vmatpush1.bf16.msra.mxu0 0
      %372 = vmatprep.subr.bf16.mxu0 0
      %373 = vmatpush1.bf16.msra.mxu0 0
      %374 = vmatprep.subr.bf16.mxu0 0
      %375 = vmatpush1.bf16.msra.mxu0 0
      %376 = vmatprep.subr.bf16.mxu0 0
      %377 = vmatpush1.bf16.msra.mxu0 0
      %378 = vmatprep.mubr.bf16.mxu0 0
      %379 = vmatmul.mubr.bf16.gmra.mrb[0].mxu0 %v282
      %v380 = vpop.f32.mrb[0].mxu0
      %v381 = vadd.f32 %v248, %v380
      %v382 = vpop.f32.mrb[0].mxu0
      %v383 = vpop.f32.mrb[0].mxu0
      %v384 = vadd.f32 %v248, %v383
      %v385 = vpop.f32.mrb[0].mxu0
      %386 = vmatprep.mubr.bf16.mxu0 0
      %387 = vmatmul.mubr.bf16.gmra.mrb[0].mxu0 %v283
      %v388 = vpop.f32.mrb[0].mxu0
      %v389 = vadd.f32 %v248, %v388
      %v390 = vpop.f32.mrb[0].mxu0
      %v391 = vpop.f32.mrb[0].mxu0
      %v392 = vadd.f32 %v248, %v391
      %v393 = vpop.f32.mrb[0].mxu0
      %394 = vmatprep.mubr.bf16.mxu0 0
      %395 = vmatmul.mubr.bf16.gmra.mrb[0].mxu0 %v284
      %v396 = vpop.f32.mrb[0].mxu0
      %v397 = vadd.f32 %v248, %v396
      %v398 = vpop.f32.mrb[0].mxu0
      %v399 = vpop.f32.mrb[0].mxu0
      %v400 = vadd.f32 %v248, %v399
      %v401 = vpop.f32.mrb[0].mxu0
      %402 = vmatprep.mubr.bf16.mxu0 0
      %403 = vmatmul.mubr.bf16.gmra.mrb[0].mxu0 %v285
      %v404 = vpop.f32.mrb[0].mxu0
      %v405 = vadd.f32 %v248, %v404
      %v406 = vpop.f32.mrb[0].mxu0
      %v407 = vpop.f32.mrb[0].mxu0
      %v408 = vadd.f32 %v248, %v407
      %v409 = vpop.f32.mrb[0].mxu0
      %410 = vmatprep.mubr.bf16.mxu0 0
      %411 = vmatmul.mubr.bf16.gmra.mrb[0].mxu0 %v286
      %v412 = vpop.f32.mrb[0].mxu0
      %v413 = vadd.f32 %v248, %v412
      %v414 = vpop.f32.mrb[0].mxu0
      %v415 = vpop.f32.mrb[0].mxu0
      %v416 = vadd.f32 %v248, %v415
      %v417 = vpop.f32.mrb[0].mxu0
      %418 = vmatprep.mubr.bf16.mxu0 0
      %419 = vmatmul.mubr.bf16.gmra.mrb[0].mxu0 %v287
      %v420 = vpop.f32.mrb[0].mxu0
      %v421 = vadd.f32 %v248, %v420
      %v422 = vpop.f32.mrb[0].mxu0
      %v423 = vpop.f32.mrb[0].mxu0
      %v424 = vadd.f32 %v248, %v423
      %v425 = vpop.f32.mrb[0].mxu0
      %426 = vmatprep.mubr.bf16.mxu0 0
      %427 = vmatmul.mubr.bf16.gmra.mrb[0].mxu0 %v288
      %v428 = vpop.f32.mrb[0].mxu0
      %v429 = vadd.f32 %v248, %v428
      %v430 = vpop.f32.mrb[0].mxu0
      %v431 = vpop.f32.mrb[0].mxu0
      %v432 = vadd.f32 %v248, %v431
      %v433 = vpop.f32.mrb[0].mxu0
      %434 = vmatprep.mubr.bf16.mxu0 0
      %435 = vmatmul.mubr.bf16.gmra.mrb[0].mxu0 %v289
      %v436 = vpop.f32.mrb[0].mxu0
      %v437 = vadd.f32 %v248, %v436
      %v438 = vpop.f32.mrb[0].mxu0
      %v439 = vpop.f32.mrb[0].mxu0
      %v440 = vadd.f32 %v248, %v439
      %v441 = vpop.f32.mrb[0].mxu0
      %442 = vdwg.mxu0
      %v443 = vand.u32 2147483647, %v381
      %v444 = vand.u32 2147483647, %v384
      %v445 = vand.u32 2147483647, %v389
      %v446 = vand.u32 2147483647, %v392
      %v447 = vand.u32 2147483647, %v397
      %v448 = vand.u32 2147483647, %v400
      %v449 = vand.u32 2147483647, %v405
      %v450 = vand.u32 2147483647, %v408
      %v451 = vand.u32 2147483647, %v413
      %v452 = vand.u32 2147483647, %v416
      %v453 = vand.u32 2147483647, %v421
      %v454 = vand.u32 2147483647, %v424
      %v455 = vand.u32 2147483647, %v429
      %v456 = vand.u32 2147483647, %v432
      %v457 = vand.u32 2147483647, %v437
      %v458 = vand.u32 2147483647, %v440
      %v459 = vsub.f32 0.0, %v443
      %v460 = vsub.f32 0.0, %v444
      %v461 = vsub.f32 0.0, %v445
      %v462 = vsub.f32 0.0, %v446
      %v463 = vsub.f32 0.0, %v447
      %v464 = vsub.f32 0.0, %v448
      %v465 = vsub.f32 0.0, %v449
      %v466 = vsub.f32 0.0, %v450
      %v467 = vsub.f32 0.0, %v451
      %v468 = vsub.f32 0.0, %v452
      %v469 = vsub.f32 0.0, %v453
      %v470 = vsub.f32 0.0, %v454
      %v471 = vsub.f32 0.0, %v455
      %v472 = vsub.f32 0.0, %v456
      %v473 = vsub.f32 0.0, %v457
      %v474 = vsub.f32 0.0, %v458
      %v475 = vmul.f32 %v459, 1.442695
      %v476 = vpow.pop %v475
      %v477 = vmul.f32 %v460, 1.442695
      %v478 = vpow.pop %v477
      %v479 = vmul.f32 %v461, 1.442695
      %v480 = vpow.pop %v479
      %v481 = vmul.f32 %v462, 1.442695
      %v482 = vpow.pop %v481
      %v483 = vmul.f32 %v463, 1.442695
      %v484 = vpow.pop %v483
      %v485 = vmul.f32 %v464, 1.442695
      %v486 = vpow.pop %v485
      %v487 = vmul.f32 %v465, 1.442695
      %v488 = vpow.pop %v487
      %v489 = vmul.f32 %v466, 1.442695
      %v490 = vpow.pop %v489
      %v491 = vmul.f32 %v467, 1.442695
      %v492 = vpow.pop %v491
      %v493 = vmul.f32 %v468, 1.442695
      %v494 = vpow.pop %v493
      %v495 = vmul.f32 %v469, 1.442695
      %v496 = vpow.pop %v495
      %v497 = vmul.f32 %v470, 1.442695
      %v498 = vpow.pop %v497
      %v499 = vmul.f32 %v471, 1.442695
      %v500 = vpow.pop %v499
      %v501 = vmul.f32 %v472, 1.442695
      %v502 = vpow.pop %v501
      %v503 = vmul.f32 %v473, 1.442695
      %v504 = vpow.pop %v503
      %v505 = vmul.f32 %v474, 1.442695
      %v506 = vpow.pop %v505
      %vm507 = vcmp.ge.f32.partialorder %v381, 0.0
      %vm508 = vcmp.ge.f32.partialorder %v384, 0.0
      %vm509 = vcmp.ge.f32.partialorder %v389, 0.0
      %vm510 = vcmp.ge.f32.partialorder %v392, 0.0
      %vm511 = vcmp.ge.f32.partialorder %v397, 0.0
      %vm512 = vcmp.ge.f32.partialorder %v400, 0.0
      %vm513 = vcmp.ge.f32.partialorder %v405, 0.0
      %vm514 = vcmp.ge.f32.partialorder %v408, 0.0
      %vm515 = vcmp.ge.f32.partialorder %v413, 0.0
      %vm516 = vcmp.ge.f32.partialorder %v416, 0.0
      %vm517 = vcmp.ge.f32.partialorder %v421, 0.0
      %vm518 = vcmp.ge.f32.partialorder %v424, 0.0
      %vm519 = vcmp.ge.f32.partialorder %v429, 0.0
      %vm520 = vcmp.ge.f32.partialorder %v432, 0.0
      %vm521 = vcmp.ge.f32.partialorder %v437, 0.0
      %vm522 = vcmp.ge.f32.partialorder %v440, 0.0
      %v523 = vsel %vm507, 1.0, %v476
      %v524 = vsel %vm508, 1.0, %v478
      %v525 = vsel %vm509, 1.0, %v480
      %v526 = vsel %vm510, 1.0, %v482
      %v527 = vsel %vm511, 1.0, %v484
      %v528 = vsel %vm512, 1.0, %v486
      %v529 = vsel %vm513, 1.0, %v488
      %v530 = vsel %vm514, 1.0, %v490
      %v531 = vsel %vm515, 1.0, %v492
      %v532 = vsel %vm516, 1.0, %v494
      %v533 = vsel %vm517, 1.0, %v496
      %v534 = vsel %vm518, 1.0, %v498
      %v535 = vsel %vm519, 1.0, %v500
      %v536 = vsel %vm520, 1.0, %v502
      %v537 = vsel %vm521, 1.0, %v504
      %v538 = vsel %vm522, 1.0, %v506
      %v539 = vadd.f32 %v476, 1.0
      %v540 = vadd.f32 %v478, 1.0
      %v541 = vadd.f32 %v480, 1.0
      %v542 = vadd.f32 %v482, 1.0
      %v543 = vadd.f32 %v484, 1.0
      %v544 = vadd.f32 %v486, 1.0
      %v545 = vadd.f32 %v488, 1.0
      %v546 = vadd.f32 %v490, 1.0
      %v547 = vadd.f32 %v492, 1.0
      %v548 = vadd.f32 %v494, 1.0
      %v549 = vadd.f32 %v496, 1.0
      %v550 = vadd.f32 %v498, 1.0
      %v551 = vadd.f32 %v500, 1.0
      %v552 = vadd.f32 %v502, 1.0
      %v553 = vadd.f32 %v504, 1.0
      %v554 = vadd.f32 %v506, 1.0
      %v555 = vrcp.pop %v539
      %v556 = vrcp.pop %v540
      %v557 = vrcp.pop %v541
      %v558 = vrcp.pop %v542
      %v559 = vrcp.pop %v543
      %v560 = vrcp.pop %v544
      %v561 = vrcp.pop %v545
      %v562 = vrcp.pop %v546
      %v563 = vrcp.pop %v547
      %v564 = vrcp.pop %v548
      %v565 = vrcp.pop %v549
      %v566 = vrcp.pop %v550
      %v567 = vrcp.pop %v551
      %v568 = vrcp.pop %v552
      %v569 = vrcp.pop %v553
      %v570 = vrcp.pop %v554
      %v571 = vmul.f32 %v523, %v555
      %v572 = vmul.f32 %v524, %v556
      %v573 = vmul.f32 %v525, %v557
      %v574 = vmul.f32 %v526, %v558
      %v575 = vmul.f32 %v527, %v559
      %v576 = vmul.f32 %v528, %v560
      %v577 = vmul.f32 %v529, %v561
      %v578 = vmul.f32 %v530, %v562
      %v579 = vmul.f32 %v531, %v563
      %v580 = vmul.f32 %v532, %v564
      %v581 = vmul.f32 %v533, %v565
      %v582 = vmul.f32 %v534, %v566
      %v583 = vmul.f32 %v535, %v567
      %v584 = vmul.f32 %v536, %v568
      %v585 = vmul.f32 %v537, %v569
      %v586 = vmul.f32 %v538, %v570
      %v587 = vmax.f32 %v571, 0.0
      %v588 = vmax.f32 %v572, 0.0
      %v589 = vmax.f32 %v573, 0.0
      %v590 = vmax.f32 %v574, 0.0
      %v591 = vmax.f32 %v575, 0.0
      %v592 = vmax.f32 %v576, 0.0
      %v593 = vmax.f32 %v577, 0.0
      %v594 = vmax.f32 %v578, 0.0
      %v595 = vmax.f32 %v579, 0.0
      %v596 = vmax.f32 %v580, 0.0
      %v597 = vmax.f32 %v581, 0.0
      %v598 = vmax.f32 %v582, 0.0
      %v599 = vmax.f32 %v583, 0.0
      %v600 = vmax.f32 %v584, 0.0
      %v601 = vmax.f32 %v585, 0.0
      %v602 = vmax.f32 %v586, 0.0
      %v603 = vmin.f32 %v587, 1.0
      %v604 = vmin.f32 %v588, 1.0
      %v605 = vmin.f32 %v589, 1.0
      %v606 = vmin.f32 %v590, 1.0
      %v607 = vmin.f32 %v591, 1.0
      %v608 = vmin.f32 %v592, 1.0
      %v609 = vmin.f32 %v593, 1.0
      %v610 = vmin.f32 %v594, 1.0
      %v611 = vmin.f32 %v595, 1.0
      %v612 = vmin.f32 %v596, 1.0
      %v613 = vmin.f32 %v597, 1.0
      %v614 = vmin.f32 %v598, 1.0
      %v615 = vmin.f32 %v599, 1.0
      %v616 = vmin.f32 %v600, 1.0
      %v617 = vmin.f32 %v601, 1.0
      %v618 = vmin.f32 %v602, 1.0
      %619 = vst [vmem:[%s208] sm:$0xff] %v603
      %620 = vst [vmem:[%s208 + $0x8] sm:$0xff] %v604
      %621 = vst [vmem:[%s208 + $0x10] sm:$0xff] %v605
      %622 = vst [vmem:[%s208 + $0x18] sm:$0xff] %v606
      %623 = vst [vmem:[%s208 + $0x20] sm:$0xff] %v607
      %624 = vst [vmem:[%s208 + $0x28] sm:$0xff] %v608
      %625 = vst [vmem:[%s208 + $0x30] sm:$0xff] %v609
      %626 = vst [vmem:[%s208 + $0x38] sm:$0xff] %v610
      %627 = vst [vmem:[%s208 + $0x40] sm:$0xff] %v611
      %628 = vst [vmem:[%s208 + $0x48] sm:$0xff] %v612
      %629 = vst [vmem:[%s208 + $0x50] sm:$0xff] %v613
      %630 = vst [vmem:[%s208 + $0x58] sm:$0xff] %v614
      %631 = vst [vmem:[%s208 + $0x60] sm:$0xff] %v615
      %632 = vst [vmem:[%s208 + $0x68] sm:$0xff] %v616
      %633 = vst [vmem:[%s208 + $0x70] sm:$0xff] %v617
      %634 = vst [vmem:[%s208 + $0x78] sm:$0xff] %v618
      %s635 = smul.u32 16, %s19
      %p636 = scmp.lt.s32.totalorder %s18, 1
      %s637 = scalar_select %p636, %s18, 1
      %p638 = scmp.lt.s32.totalorder %s635, 47
      %s639 = scalar_select %p638, %s635, 47
      %s640 = smul.addr %s637, 48
      %s641 = sadd.s32 %s639, %s640
      %s642 = smul.addr %s641, 8
      %s643 = scalar_lea.vmem %s3, %s642
      // Predicated region
      $region33: #{_lambda_.21} parent=31 // pred_check
        %p644 = pneg %p116
      $region34: #{_lambda_.21} parent=31 // pred_check_branch
        %646 = sbr.rel (%p644) target = $region36
      $region35: #{_lambda_.21} parent=31 // pred_region
        %s647 = smul.u32 16, %s19
      $region36: #{_lambda_.21} parent=31 // pred_fallthru
        _
    $region32: #{_lambda_.21} parent=5 // pred_fallthru
      _
    %p648 = scmp.le.s32.totalorder 2, %s9
    // Predicated region
    $region37: #{_lambda_.21} parent=5 // pred_check
      %p649 = pneg %p648
    $region38: #{_lambda_.21} parent=5 // pred_check_branch
      %651 = sbr.rel (%p649) target = $region40
    $region39: #{_lambda_.21} parent=5 // pred_region
      %s652 = ssub.s32 %s9, 2
      // Predicated region
      $region41: #{_lambda_.21} parent=39 // pred_check
        %p653 = pneg %p122
      $region42: #{_lambda_.21} parent=39 // pred_check_branch
        %655 = sbr.rel (%p653) target = $region44
      $region43: #{_lambda_.21} parent=39 // pred_region
        %s656 = smul.u32 16, %s21
        %p657 = scmp.lt.s32.totalorder %s20, 1
        %s658 = scalar_select %p657, %s20, 1
        %p659 = scmp.lt.s32.totalorder %s656, 47
        %s660 = scalar_select %p659, %s656, 47
        %s661 = smul.addr %s658, 48
        %s662 = sadd.s32 %s660, %s661
        %s663 = smul.addr %s662, 8
        %s664 = scalar_lea.vmem %s3, %s663
      $region44: #{_lambda_.21} parent=39 // pred_fallthru
        _
    $region40: #{_lambda_.21} parent=5 // pred_fallthru
      _
  $region6: #{_lambda_.21} parent=0 // loop_footer
    %s13 = sadd.s32 1, %s9
  $region7: #{_lambda_.21} parent=0 // loop_footer_branch
    %8 = sbr.rel target = $region3
  $region8: #{_lambda_.21} parent=0 // loop_exit
    _

</llo_original>
